<compile_context>
chip_gen: v7x
topology: tpu7x:2x2x1
jax: 0.10.0
libtpu: 0.0.40
codegen_flags: <defaults>
</compile_context>

<pallas_src>
import math

import jax
import jax.numpy as jnp
from jax.experimental import pallas as pl
from jax.experimental.pallas import tpu as pltpu


def _double_attention_kernel(sdT_ref, dec_term_ref, bias_ref, E_ref, ET_ref,
                             v_ref, W_sdT_ref, v2_ref, W2s_ref, W2c_ref,
                             out_ref):
    f32 = jnp.float32
    H = W_sdT_ref.shape[0]

    sdT = sdT_ref[...]           # (2H, L)  [static ; dynamic^T], MXU dtype
    dec_term = dec_term_ref[0]   # (H, Bt)  precomputed W[:, 2H:] @ decoder_out
    bias = bias_ref[0]           # (1, L)   f32 additive mask bias (-1e30 on forbidden)
    E = E_ref[...]               # (Bt, L)  per-batch broadcast matrix (0/1)
    ET = ET_ref[...]             # (L, Bt)  per-batch segment-sum matrix (0/1)
    md = E.dtype                 # MXU operand dtype (bf16 by default, f32 optional)

    # ---------- first attention: softmax_b( v @ tanh(W @ [s ; d^T ; bcast(dec)]) ) ----------
    pre1 = (jnp.dot(W_sdT_ref[...], sdT, preferred_element_type=f32)
            + jnp.dot(dec_term, E, preferred_element_type=f32))              # (H, L)
    u1 = jnp.tanh(pre1)
    logits1 = jnp.dot(v_ref[...], u1, preferred_element_type=f32)            # (1, L)
    # tanh-bounded logits -> tile-global max is a cheap, valid stabilizer
    m1 = jnp.max(logits1, axis=-1, keepdims=True)
    e1 = jnp.exp(logits1 - m1)
    denom1 = jnp.dot(e1.astype(md), ET, preferred_element_type=f32)          # (1, Bt)
    inv1 = pl.reciprocal(jnp.maximum(denom1, 1e-30), approx=True)
    a = e1 * jnp.dot(inv1.astype(md), E, preferred_element_type=f32)         # (1, L) per-batch softmax

    # ---------- context + second attention ----------
    s = sdT[:H]                                                              # (H, L) sublane-aligned slice
    context = jnp.dot(s * a.astype(md), ET, preferred_element_type=f32)      # (H, Bt)
    ctx_term = jnp.dot(W2c_ref[...], context.astype(md),
                       preferred_element_type=f32)                           # (H, Bt)
    pre2 = (jnp.dot(W2s_ref[...], s, preferred_element_type=f32)
            + jnp.dot(ctx_term.astype(md), E, preferred_element_type=f32))   # (H, L)
    u2 = jnp.tanh(pre2)
    logits2 = jnp.dot(v2_ref[...], u2, preferred_element_type=f32) + bias    # (1, L)
    m2 = jnp.max(logits2, axis=-1, keepdims=True)
    e2 = jnp.exp(logits2 - m2)
    denom2 = jnp.dot(e2.astype(md), ET, preferred_element_type=f32)          # (1, Bt)
    inv2 = pl.reciprocal(jnp.maximum(denom2, 1e-30), approx=True)
    probs = e2 * jnp.dot(inv2.astype(md), E, preferred_element_type=f32)     # (1, L)

    out_ref[0] = probs.astype(out_ref.dtype)                                 # unmasked lane-dense store


def double_attention(static_emb, dyn_emb, decoder_out, mask, params,
                     *, lane_target=2048, fold_lanes=4096,
                     mxu_dtype=jnp.bfloat16):
    """params = (v (1,H), W (H,3H), v2 (1,H), W2 (H,2H)).

    mxu_dtype controls the dtype of the MXU matmul operands (bf16 default on all
    generations); tanh / exp / softmax normalization math stays f32.
    """
    v, W, v2, W2 = params
    B, H, S = static_emb.shape
    assert S == H, "DoubleAttention (as written in PyTorch) requires seq_len == hidden_size"

    f32 = jnp.float32
    md = mxu_dtype

    # --- batch tile: fold btile batches into the lane axis (btile*S % 128 == 0) ---
    base = 128 // math.gcd(S, 128)          # min batches/tile for a 128-multiple lane count
    nb = -(-B // base)                      # base-blocks covering the real batch
    if nb * base * S <= max(fold_lanes, lane_target):
        btile = nb * base                   # single grid step: whole (padded) batch
    else:
        k = max(1, (lane_target // S) // base)
        n_tiles = -(-nb // k)
        if n_tiles > 1 and n_tiles % 2 == 1:   # v7x: 2 TCs share the parallel grid axis
            k = -(-nb // (n_tiles + 1))
        btile = k * base
    n_tiles = -(-B // btile)
    Bp = n_tiles * btile
    L = btile * S
    pad = Bp - B

    static_p = jnp.pad(static_emb.astype(f32), ((0, pad), (0, 0), (0, 0)))
    dyn_p = jnp.pad(dyn_emb.astype(f32), ((0, pad), (0, 0), (0, 0)))
    dec_p = jnp.pad(decoder_out.astype(f32), ((0, pad), (0, 0)))
    mask_p = jnp.pad(mask.astype(f32), ((0, pad), (0, 0)))

    # Layout plumbing (once, in XLA, not per kernel step):
    #   sdT[h,     b*S + j] = static[b, h, j]
    #   sdT[H + i, b*S + j] = dynamic[b, j, i]     (the module's dyn.transpose(2,1))
    s_packed = jnp.transpose(static_p, (1, 0, 2)).reshape(H, Bp * S)
    dT_packed = jnp.transpose(dyn_p, (2, 0, 1)).reshape(S, Bp * S)
    sdT_packed = jnp.concatenate([s_packed, dT_packed], axis=0).astype(md)   # (2H, Bp*S)

    # Precomputed decoder term of the first contraction: W[:, 2H:] @ dec -> (n_tiles, H, btile)
    dec_term = dec_p @ W[:, 2 * H:].T                                        # (Bp, H)
    dec_term = jnp.transpose(dec_term.reshape(n_tiles, btile, H), (0, 2, 1)).astype(md)

    # Mask as an additive f32 bias.
    bias_packed = (mask_p * jnp.float32(-1e30)).reshape(n_tiles, 1, L)

    # Segment matrices, hoisted out of the kernel (0/1 -> exact in any dtype).
    lane_b = (jnp.arange(L, dtype=jnp.int32) // S)[None, :]
    E = (lane_b == jnp.arange(btile, dtype=jnp.int32)[:, None]).astype(md)   # (btile, L)
    ET = E.T                                                                 # (L, btile)

    W_sdT = W[:, :2 * H].astype(md)      # merged [W_s | W_dT]
    W2s = W2[:, :H].astype(md)
    W2c = W2[:, H:].astype(md)
    v_row = v.reshape(1, H).astype(f32)
    v2_row = v2.reshape(1, H).astype(f32)

    const = lambda t: (0, 0)             # fetched once, revisited on later grid steps
    out = pl.pallas_call(
        _double_attention_kernel,
        out_shape=jax.ShapeDtypeStruct((n_tiles, 1, L), f32),
        grid=(n_tiles,),
        in_specs=[
            pl.BlockSpec((2 * H, L), lambda t: (0, t)),          # [s; dT] slab (streamed)
            pl.BlockSpec((1, H, btile), lambda t: (t, 0, 0)),    # precomputed decoder term
            pl.BlockSpec((1, 1, L), lambda t: (t, 0, 0)),        # additive mask bias
            pl.BlockSpec((btile, L), const),                     # E
            pl.BlockSpec((L, btile), const),                     # ET
            pl.BlockSpec((1, H), const),                         # v
            pl.BlockSpec((H, 2 * H), const),                     # W[:, :2H]
            pl.BlockSpec((1, H), const),                         # v2
            pl.BlockSpec((H, H), const),                         # W2[:, :H]
            pl.BlockSpec((H, H), const),                         # W2[:, H:]
        ],
        out_specs=pl.BlockSpec((1, 1, L), lambda t: (t, 0, 0)),
        compiler_params=pltpu.CompilerParams(
            dimension_semantics=("parallel",)),
    )(sdT_packed, dec_term, bias_packed, E, ET,
      v_row, W_sdT, v2_row, W2s, W2c)

    return out.reshape(Bp, S)[:B]


def reference(static_emb, dyn_emb, decoder_out, mask, params):
    """Pure-JAX mirror of the PyTorch forward, for verification."""
    v, W, v2, W2 = params
    B, H, S = static_emb.shape
    hidden = jnp.concatenate(
        [static_emb,
         jnp.transpose(dyn_emb, (0, 2, 1)),
         jnp.broadcast_to(decoder_out[:, :, None], (B, H, S))], axis=1)
    u1 = jnp.tanh(jnp.einsum('hk,bks->bhs', W, hidden))
    attns = jnp.einsum('oh,bhs->bs', v, u1)
    a = jax.nn.softmax(attns, axis=1)
    context = jnp.einsum('bs,bhs->bh', a, static_emb)
    energy = jnp.concatenate(
        [static_emb, jnp.broadcast_to(context[:, :, None], (B, H, S))], axis=1)
    u2 = jnp.tanh(jnp.einsum('hk,bks->bhs', W2, energy))
    logits = jnp.einsum('oh,bhs->bs', v2, u2)
    logits = jnp.where(mask, -jnp.inf, logits)
    return jax.nn.softmax(logits, axis=1)


if __name__ == "__main__":
    key = jax.random.PRNGKey(0)
    B, H = 18, 32
    S = H  # module requires seq_len == hidden_size
    ks = jax.random.split(key, 8)

    static_emb = jax.random.normal(ks[0], (B, H, S), jnp.float32)
    dyn_emb = jax.random.normal(ks[1], (B, H, S), jnp.float32)
    decoder_out = jax.random.normal(ks[2], (B, H), jnp.float32)
    mask = jax.random.uniform(ks[3], (B, S)) < 0.25
    mask = mask.at[:, 0].set(False)  # keep at least one feasible node per row

    def xavier(k, shape, fan_in, fan_out):
        bound = (6.0 / (fan_in + fan_out)) ** 0.5
        return jax.random.uniform(k, shape, jnp.float32, -bound, bound)

    v = xavier(ks[4], (1, H), H, H)                    # torch shape (1, 1, H)
    W = xavier(ks[5], (H, 3 * H), H * 3 * H, 3 * H)    # torch shape (1, H, 3H)
    v2 = xavier(ks[6], (1, H), H, H)                   # torch shape (1, 1, H)
    W2 = xavier(ks[7], (H, 2 * H), H * 2 * H, 2 * H)   # torch shape (1, H, 2H)
    params = (v, W, v2, W2)

    ref = reference(static_emb, dyn_emb, decoder_out, mask, params)

    # f32 MXU operands (tight check)
    out_f32 = double_attention(static_emb, dyn_emb, decoder_out, mask, params,
                               mxu_dtype=jnp.float32)
    out_f32 = jax.block_until_ready(out_f32)
    assert out_f32.shape == (B, S)
    assert jnp.allclose(out_f32, ref, atol=2e-3, rtol=2e-3), \
        float(jnp.max(jnp.abs(out_f32 - ref)))

    # default bf16 MXU operands (recommended on all generations), looser tolerance
    out_bf16 = double_attention(static_emb, dyn_emb, decoder_out, mask, params)
    out_bf16 = jax.block_until_ready(out_bf16)
    assert out_bf16.shape == (B, S)
    assert jnp.allclose(out_bf16, ref, atol=3e-2, rtol=3e-2), \
        float(jnp.max(jnp.abs(out_bf16 - ref)))

    print("KERNEL_OK")
</pallas_src>

<mosaic_0001>
module attributes {stable_mosaic.version = 11 : i64} {
  func.func @_double_attention_kernel(%arg0: i32, %arg1: memref<64x640xf32, #tpu.memory_space<vmem>>, %arg2: memref<1x32x20xf32, #tpu.memory_space<vmem>>, %arg3: memref<1x1x640xf32, #tpu.memory_space<vmem>>, %arg4: memref<20x640xf32, #tpu.memory_space<vmem>>, %arg5: memref<640x20xf32, #tpu.memory_space<vmem>>, %arg6: memref<1x32xf32, #tpu.memory_space<vmem>>, %arg7: memref<32x64xf32, #tpu.memory_space<vmem>>, %arg8: memref<1x32xf32, #tpu.memory_space<vmem>>, %arg9: memref<32x32xf32, #tpu.memory_space<vmem>>, %arg10: memref<32x32xf32, #tpu.memory_space<vmem>>, %arg11: memref<1x1x640xf32, #tpu.memory_space<vmem>>) attributes {dimension_semantics = [#tpu.dimension_semantics<parallel>], iteration_bounds = array<i64: 1>, scalar_prefetch = 0 : i64, scratch_operands = 0 : i64, tpu.core_type = #tpu.core_type<tc>, window_params = [{transform_indices = @transform_0, window_bounds = array<i64: 64, 640>}, {transform_indices = @transform_1, window_bounds = array<i64: 1, 32, 20>}, {transform_indices = @transform_2, window_bounds = array<i64: 1, 1, 640>}, {pipeline_mode = #tpu.pipeline_mode<synchronous>, transform_indices = @transform_3, window_bounds = array<i64: 20, 640>}, {pipeline_mode = #tpu.pipeline_mode<synchronous>, transform_indices = @transform_4, window_bounds = array<i64: 640, 20>}, {pipeline_mode = #tpu.pipeline_mode<synchronous>, transform_indices = @transform_5, window_bounds = array<i64: 1, 32>}, {pipeline_mode = #tpu.pipeline_mode<synchronous>, transform_indices = @transform_6, window_bounds = array<i64: 32, 64>}, {pipeline_mode = #tpu.pipeline_mode<synchronous>, transform_indices = @transform_7, window_bounds = array<i64: 1, 32>}, {pipeline_mode = #tpu.pipeline_mode<synchronous>, transform_indices = @transform_8, window_bounds = array<i64: 32, 32>}, {pipeline_mode = #tpu.pipeline_mode<synchronous>, transform_indices = @transform_9, window_bounds = array<i64: 32, 32>}, {transform_indices = @transform_10, window_bounds = array<i64: 1, 1, 640>}]} {
    %c0 = arith.constant 0 : index
    %c0_0 = arith.constant 0 : index
    %0 = vector.load %arg1[%c0, %c0_0] : memref<64x640xf32, #tpu.memory_space<vmem>>, vector<64x640xf32>
    %c0_1 = arith.constant 0 : index
    %c0_2 = arith.constant 0 : index
    %c0_3 = arith.constant 0 : index
    %1 = vector.load %arg2[%c0_1, %c0_2, %c0_3] : memref<1x32x20xf32, #tpu.memory_space<vmem>>, vector<1x32x20xf32>
    %2 = vector.shape_cast %1 : vector<1x32x20xf32> to vector<32x20xf32>
    %c0_4 = arith.constant 0 : index
    %c0_5 = arith.constant 0 : index
    %c0_6 = arith.constant 0 : index
    %3 = vector.load %arg3[%c0_4, %c0_5, %c0_6] : memref<1x1x640xf32, #tpu.memory_space<vmem>>, vector<1x1x640xf32>
    %4 = vector.shape_cast %3 : vector<1x1x640xf32> to vector<1x640xf32>
    %c0_7 = arith.constant 0 : index
    %c0_8 = arith.constant 0 : index
    %5 = vector.load %arg4[%c0_7, %c0_8] : memref<20x640xf32, #tpu.memory_space<vmem>>, vector<20x640xf32>
    %c0_9 = arith.constant 0 : index
    %c0_10 = arith.constant 0 : index
    %6 = vector.load %arg5[%c0_9, %c0_10] : memref<640x20xf32, #tpu.memory_space<vmem>>, vector<640x20xf32>
    %c0_11 = arith.constant 0 : index
    %c0_12 = arith.constant 0 : index
    %7 = vector.load %arg7[%c0_11, %c0_12] : memref<32x64xf32, #tpu.memory_space<vmem>>, vector<32x64xf32>
    %cst = arith.constant dense<0.000000e+00> : vector<32x640xf32>
    %8 = tpu.matmul %7, %0, %cst {dimension_numbers = #tpu.dot_dimension_numbers<[1], [0], [0], [1], [0, 0, 1, 1], [], []>} : vector<32x64xf32>, vector<64x640xf32>, vector<32x640xf32> -> vector<32x640xf32>
    %cst_13 = arith.constant dense<0.000000e+00> : vector<32x640xf32>
    %9 = tpu.matmul %2, %5, %cst_13 {dimension_numbers = #tpu.dot_dimension_numbers<[1], [0], [0], [1], [0, 0, 1, 1], [], []>} : vector<32x20xf32>, vector<20x640xf32>, vector<32x640xf32> -> vector<32x640xf32>
    %10 = arith.addf %8, %9 : vector<32x640xf32>
    %11 = math.tanh %10 : vector<32x640xf32>
    %c0_14 = arith.constant 0 : index
    %c0_15 = arith.constant 0 : index
    %12 = vector.load %arg6[%c0_14, %c0_15] : memref<1x32xf32, #tpu.memory_space<vmem>>, vector<1x32xf32>
    %cst_16 = arith.constant dense<0.000000e+00> : vector<1x640xf32>
    %13 = tpu.matmul %12, %11, %cst_16 {dimension_numbers = #tpu.dot_dimension_numbers<[1], [0], [0], [1], [0, 0, 1, 1], [], []>} : vector<1x32xf32>, vector<32x640xf32>, vector<1x640xf32> -> vector<1x640xf32>
    %cst_17 = arith.constant dense<0xFF800000> : vector<1xf32>
    %14 = vector.multi_reduction <maximumf>, %13, %cst_17 [1] : vector<1x640xf32> to vector<1xf32>
    %15 = vector.shape_cast %14 : vector<1xf32> to vector<1x1xf32>
    %16 = vector.broadcast %15 : vector<1x1xf32> to vector<1x640xf32>
    %17 = arith.subf %13, %16 : vector<1x640xf32>
    %18 = math.exp %17 : vector<1x640xf32>
    %cst_18 = arith.constant dense<0.000000e+00> : vector<1x20xf32>
    %19 = tpu.matmul %18, %6, %cst_18 {dimension_numbers = #tpu.dot_dimension_numbers<[1], [0], [0], [1], [0, 0, 1, 1], [], []>} : vector<1x640xf32>, vector<640x20xf32>, vector<1x20xf32> -> vector<1x20xf32>
    %cst_19 = arith.constant 1.000000e-30 : f32
    %20 = vector.broadcast %cst_19 : f32 to vector<1x20xf32>
    %21 = arith.maximumf %19, %20 : vector<1x20xf32>
    %22 = tpu.reciprocal %21 {approx = true} : vector<1x20xf32> -> vector<1x20xf32>
    %cst_20 = arith.constant dense<0.000000e+00> : vector<1x640xf32>
    %23 = tpu.matmul %22, %5, %cst_20 {dimension_numbers = #tpu.dot_dimension_numbers<[1], [0], [0], [1], [0, 0, 1, 1], [], []>} : vector<1x20xf32>, vector<20x640xf32>, vector<1x640xf32> -> vector<1x640xf32>
    %24 = arith.mulf %18, %23 : vector<1x640xf32>
    %25 = vector.extract_strided_slice %0 {offsets = [0, 0], sizes = [32, 640], strides = [1, 1]} : vector<64x640xf32> to vector<32x640xf32>
    %26 = vector.broadcast %24 : vector<1x640xf32> to vector<32x640xf32>
    %27 = arith.mulf %25, %26 : vector<32x640xf32>
    %cst_21 = arith.constant dense<0.000000e+00> : vector<32x20xf32>
    %28 = tpu.matmul %27, %6, %cst_21 {dimension_numbers = #tpu.dot_dimension_numbers<[1], [0], [0], [1], [0, 0, 1, 1], [], []>} : vector<32x640xf32>, vector<640x20xf32>, vector<32x20xf32> -> vector<32x20xf32>
    %c0_22 = arith.constant 0 : index
    %c0_23 = arith.constant 0 : index
    %29 = vector.load %arg10[%c0_22, %c0_23] : memref<32x32xf32, #tpu.memory_space<vmem>>, vector<32x32xf32>
    %cst_24 = arith.constant dense<0.000000e+00> : vector<32x20xf32>
    %30 = tpu.matmul %29, %28, %cst_24 {dimension_numbers = #tpu.dot_dimension_numbers<[1], [0], [0], [1], [0, 0, 1, 1], [], []>} : vector<32x32xf32>, vector<32x20xf32>, vector<32x20xf32> -> vector<32x20xf32>
    %c0_25 = arith.constant 0 : index
    %c0_26 = arith.constant 0 : index
    %31 = vector.load %arg9[%c0_25, %c0_26] : memref<32x32xf32, #tpu.memory_space<vmem>>, vector<32x32xf32>
    %cst_27 = arith.constant dense<0.000000e+00> : vector<32x640xf32>
    %32 = tpu.matmul %31, %25, %cst_27 {dimension_numbers = #tpu.dot_dimension_numbers<[1], [0], [0], [1], [0, 0, 1, 1], [], []>} : vector<32x32xf32>, vector<32x640xf32>, vector<32x640xf32> -> vector<32x640xf32>
    %cst_28 = arith.constant dense<0.000000e+00> : vector<32x640xf32>
    %33 = tpu.matmul %30, %5, %cst_28 {dimension_numbers = #tpu.dot_dimension_numbers<[1], [0], [0], [1], [0, 0, 1, 1], [], []>} : vector<32x20xf32>, vector<20x640xf32>, vector<32x640xf32> -> vector<32x640xf32>
    %34 = arith.addf %32, %33 : vector<32x640xf32>
    %35 = math.tanh %34 : vector<32x640xf32>
    %c0_29 = arith.constant 0 : index
    %c0_30 = arith.constant 0 : index
    %36 = vector.load %arg8[%c0_29, %c0_30] : memref<1x32xf32, #tpu.memory_space<vmem>>, vector<1x32xf32>
    %cst_31 = arith.constant dense<0.000000e+00> : vector<1x640xf32>
    %37 = tpu.matmul %36, %35, %cst_31 {dimension_numbers = #tpu.dot_dimension_numbers<[1], [0], [0], [1], [0, 0, 1, 1], [], []>} : vector<1x32xf32>, vector<32x640xf32>, vector<1x640xf32> -> vector<1x640xf32>
    %38 = arith.addf %37, %4 : vector<1x640xf32>
    %cst_32 = arith.constant dense<0xFF800000> : vector<1xf32>
    %39 = vector.multi_reduction <maximumf>, %38, %cst_32 [1] : vector<1x640xf32> to vector<1xf32>
    %40 = vector.shape_cast %39 : vector<1xf32> to vector<1x1xf32>
    %41 = vector.broadcast %40 : vector<1x1xf32> to vector<1x640xf32>
    %42 = arith.subf %38, %41 : vector<1x640xf32>
    %43 = math.exp %42 : vector<1x640xf32>
    %cst_33 = arith.constant dense<0.000000e+00> : vector<1x20xf32>
    %44 = tpu.matmul %43, %6, %cst_33 {dimension_numbers = #tpu.dot_dimension_numbers<[1], [0], [0], [1], [0, 0, 1, 1], [], []>} : vector<1x640xf32>, vector<640x20xf32>, vector<1x20xf32> -> vector<1x20xf32>
    %cst_34 = arith.constant 1.000000e-30 : f32
    %45 = vector.broadcast %cst_34 : f32 to vector<1x20xf32>
    %46 = arith.maximumf %44, %45 : vector<1x20xf32>
    %47 = tpu.reciprocal %46 {approx = true} : vector<1x20xf32> -> vector<1x20xf32>
    %cst_35 = arith.constant dense<0.000000e+00> : vector<1x640xf32>
    %48 = tpu.matmul %47, %5, %cst_35 {dimension_numbers = #tpu.dot_dimension_numbers<[1], [0], [0], [1], [0, 0, 1, 1], [], []>} : vector<1x20xf32>, vector<20x640xf32>, vector<1x640xf32> -> vector<1x640xf32>
    %49 = arith.mulf %43, %48 : vector<1x640xf32>
    %c0_36 = arith.constant 0 : index
    %c0_37 = arith.constant 0 : index
    %c0_38 = arith.constant 0 : index
    %50 = vector.load %arg11[%c0_36, %c0_37, %c0_38] : memref<1x1x640xf32, #tpu.memory_space<vmem>>, vector<1x1x640xf32>
    %51 = vector.shape_cast %50 : vector<1x1x640xf32> to vector<1x640xf32>
    %52 = vector.shape_cast %49 : vector<1x640xf32> to vector<1x1x640xf32>
    tpu.vector_store %arg11[%c0_36, %c0_37, %c0_38], %52 {strides = array<i32>} : memref<1x1x640xf32, #tpu.memory_space<vmem>>, vector<1x1x640xf32>,
    return
  }
  func.func @transform_0(%arg0: i32) -> (i32, i32) {
    %c0_i32 = arith.constant 0 : i32
    %c0_i32_0 = arith.constant 0 : i32
    return %c0_i32, %arg0 : i32, i32
  }
  func.func @transform_1(%arg0: i32) -> (i32, i32, i32) {
    %c0_i32 = arith.constant 0 : i32
    %c0_i32_0 = arith.constant 0 : i32
    %c0_i32_1 = arith.constant 0 : i32
    return %arg0, %c0_i32, %c0_i32_0 : i32, i32, i32
  }
  func.func @transform_2(%arg0: i32) -> (i32, i32, i32) {
    %c0_i32 = arith.constant 0 : i32
    %c0_i32_0 = arith.constant 0 : i32
    %c0_i32_1 = arith.constant 0 : i32
    return %arg0, %c0_i32, %c0_i32_0 : i32, i32, i32
  }
  func.func @transform_3(%arg0: i32) -> (i32, i32) {
    %c0_i32 = arith.constant 0 : i32
    %c0_i32_0 = arith.constant 0 : i32
    %c0_i32_1 = arith.constant 0 : i32
    return %c0_i32, %c0_i32_0 : i32, i32
  }
  func.func @transform_4(%arg0: i32) -> (i32, i32) {
    %c0_i32 = arith.constant 0 : i32
    %c0_i32_0 = arith.constant 0 : i32
    %c0_i32_1 = arith.constant 0 : i32
    return %c0_i32, %c0_i32_0 : i32, i32
  }
  func.func @transform_5(%arg0: i32) -> (i32, i32) {
    %c0_i32 = arith.constant 0 : i32
    %c0_i32_0 = arith.constant 0 : i32
    %c0_i32_1 = arith.constant 0 : i32
    return %c0_i32, %c0_i32_0 : i32, i32
  }
  func.func @transform_6(%arg0: i32) -> (i32, i32) {
    %c0_i32 = arith.constant 0 : i32
    %c0_i32_0 = arith.constant 0 : i32
    %c0_i32_1 = arith.constant 0 : i32
    return %c0_i32, %c0_i32_0 : i32, i32
  }
  func.func @transform_7(%arg0: i32) -> (i32, i32) {
    %c0_i32 = arith.constant 0 : i32
    %c0_i32_0 = arith.constant 0 : i32
    %c0_i32_1 = arith.constant 0 : i32
    return %c0_i32, %c0_i32_0 : i32, i32
  }
  func.func @transform_8(%arg0: i32) -> (i32, i32) {
    %c0_i32 = arith.constant 0 : i32
    %c0_i32_0 = arith.constant 0 : i32
    %c0_i32_1 = arith.constant 0 : i32
    return %c0_i32, %c0_i32_0 : i32, i32
  }
  func.func @transform_9(%arg0: i32) -> (i32, i32) {
    %c0_i32 = arith.constant 0 : i32
    %c0_i32_0 = arith.constant 0 : i32
    %c0_i32_1 = arith.constant 0 : i32
    return %c0_i32, %c0_i32_0 : i32, i32
  }
  func.func @transform_10(%arg0: i32) -> (i32, i32, i32) {
    %c0_i32 = arith.constant 0 : i32
    %c0_i32_0 = arith.constant 0 : i32
    %c0_i32_1 = arith.constant 0 : i32
    return %arg0, %c0_i32, %c0_i32_0 : i32, i32, i32
  }
}

</mosaic_0001>

<llo_original>
// kernel: tpu_custom_call.1
$region0: #{tpu_custom_call.1}
  #allocation0 [shape = 'u32[]', space=smem, size = 0x4, offset = 0x4, fixed_abs, tag = 'smem constant byte address 0x4 - core index']
  #allocation1 [shape = 'u32[144,128]{1,0:T(1,128)}', space=vmem, size = 0x12000, scoped, tag = 'internal scratch']
  %s0 = inlined_call_operand.vmem [shape: f32[64,640], index: 0, kind: input, shape index: {}]
  %s1 = inlined_call_operand.vmem [shape: f32[1,32,20], index: 1, kind: input, shape index: {}]
  %s2 = inlined_call_operand.vmem [shape: f32[1,1,640], index: 2, kind: input, shape index: {}]
  %s3 = inlined_call_operand.vmem [shape: f32[20,640], index: 3, kind: input, shape index: {}]
  %s4 = inlined_call_operand.vmem [shape: f32[640,20], index: 4, kind: input, shape index: {}]
  %s5 = inlined_call_operand.vmem [shape: f32[1,32], index: 5, kind: input, shape index: {}]
  %s6 = inlined_call_operand.vmem [shape: f32[32,64], index: 6, kind: input, shape index: {}]
  %s7 = inlined_call_operand.vmem [shape: f32[1,32], index: 7, kind: input, shape index: {}]
  %s8 = inlined_call_operand.vmem [shape: f32[32,32], index: 8, kind: input, shape index: {}]
  %s9 = inlined_call_operand.vmem [shape: f32[32,32], index: 9, kind: input, shape index: {}]
  %s10 = inlined_call_operand.hbm [shape: f32[1,1,640], index: 10, kind: output, shape index: {}]
  %s11 = sld [smem:[#allocation0]]
  $region50: #{tpu_custom_call.1} parent=0
    _
  %s13 = ssub.s32 1, %s11
  %s14 = scalar_select 0, %s13, %s11
  $region1: #{tpu_custom_call.1} parent=0
    #allocation2 [shape = 'u8[2560]{0}', space=vmem, size = 0xc00, scoped, tag = 'output window, operand 0, single buffered']
    #allocation3 [shape = 's32[1]{0}', space=sflag, size = 0x4, scoped, tag = 'scoped memory for tpu_custom_call.1']
    %15 = vsyncpa [#allocation3], 0
    // Predicated region
    $region2: #{tpu_custom_call.1} parent=1 // pred_check
      _
    $region3: #{tpu_custom_call.1} parent=1 // pred_check_branch
      %17 = sbr.rel (0) target = $region5
    $region4: #{tpu_custom_call.1} parent=1 // pred_region
      _
    $region5: #{tpu_custom_call.1} parent=1 // pred_fallthru
      _
    // Predicated region
    $region6: #{tpu_custom_call.1} parent=1 // pred_check
      _
    $region7: #{tpu_custom_call.1} parent=1 // pred_check_branch
      %19 = sbr.rel (0) target = $region9
    $region8: #{tpu_custom_call.1} parent=1 // pred_region
      _
    $region9: #{tpu_custom_call.1} parent=1 // pred_fallthru
      _
    // Predicated region
    $region10: #{tpu_custom_call.1} parent=1 // pred_check
      _
    $region11: #{tpu_custom_call.1} parent=1 // pred_check_branch
      %21 = sbr.rel (0) target = $region13
    $region12: #{tpu_custom_call.1} parent=1 // pred_region
      _
    $region13: #{tpu_custom_call.1} parent=1 // pred_fallthru
      _
    // Predicated region
    $region14: #{tpu_custom_call.1} parent=1 // pred_check
      _
    $region15: #{tpu_custom_call.1} parent=1 // pred_check_branch
      %23 = sbr.rel (0) target = $region17
    $region16: #{tpu_custom_call.1} parent=1 // pred_region
      _
    $region17: #{tpu_custom_call.1} parent=1 // pred_fallthru
      _
    // Predicated region
    $region18: #{tpu_custom_call.1} parent=1 // pred_check
      _
    $region19: #{tpu_custom_call.1} parent=1 // pred_check_branch
      %25 = sbr.rel (0) target = $region21
    $region20: #{tpu_custom_call.1} parent=1 // pred_region
      _
    $region21: #{tpu_custom_call.1} parent=1 // pred_fallthru
      _
    // Predicated region
    $region22: #{tpu_custom_call.1} parent=1 // pred_check
      _
    $region23: #{tpu_custom_call.1} parent=1 // pred_check_branch
      %27 = sbr.rel (0) target = $region25
    $region24: #{tpu_custom_call.1} parent=1 // pred_region
      _
    $region25: #{tpu_custom_call.1} parent=1 // pred_fallthru
      _
    // Predicated region
    $region26: #{tpu_custom_call.1} parent=1 // pred_check
      _
    $region27: #{tpu_custom_call.1} parent=1 // pred_check_branch
      %29 = sbr.rel (0) target = $region29
    $region28: #{tpu_custom_call.1} parent=1 // pred_region
      _
    $region29: #{tpu_custom_call.1} parent=1 // pred_fallthru
      _
    // Predicated region
    $region30: #{tpu_custom_call.1} parent=1 // pred_check
      _
    $region31: #{tpu_custom_call.1} parent=1 // pred_check_branch
      %31 = sbr.rel (0) target = $region33
    $region32: #{tpu_custom_call.1} parent=1 // pred_region
      _
    $region33: #{tpu_custom_call.1} parent=1 // pred_fallthru
      _
    // Predicated region
    $region34: #{tpu_custom_call.1} parent=1 // pred_check
      _
    $region35: #{tpu_custom_call.1} parent=1 // pred_check_branch
      %33 = sbr.rel (0) target = $region37
    $region36: #{tpu_custom_call.1} parent=1 // pred_region
      _
    $region37: #{tpu_custom_call.1} parent=1 // pred_fallthru
      _
    // Predicated region
    $region38: #{tpu_custom_call.1} parent=1 // pred_check
      _
    $region39: #{tpu_custom_call.1} parent=1 // pred_check_branch
      %35 = sbr.rel (0) target = $region41
    $region40: #{tpu_custom_call.1} parent=1 // pred_region
      _
    $region41: #{tpu_custom_call.1} parent=1 // pred_fallthru
      _
    %v36 = vld [vmem:[%s0] sm:$0xff]
    %v37 = vld [vmem:[%s0 + $0x8] sm:$0xff]
    %v38 = vld [vmem:[%s0 + $0x10] sm:$0xff]
    %v39 = vld [vmem:[%s0 + $0x18] sm:$0xff]
    %v40 = vld [vmem:[%s0 + $0x20] sm:$0xff]
    %v41 = vld [vmem:[%s0 + $0x28] sm:$0xff]
    %v42 = vld [vmem:[%s0 + $0x30] sm:$0xff]
    %v43 = vld [vmem:[%s0 + $0x38] sm:$0xff]
    %v44 = vld [vmem:[%s0 + $0x40] sm:$0xff]
    %v45 = vld [vmem:[%s0 + $0x48] sm:$0xff]
    %v46 = vld [vmem:[%s0 + $0x50] sm:$0xff]
    %v47 = vld [vmem:[%s0 + $0x58] sm:$0xff]
    %v48 = vld [vmem:[%s0 + $0x60] sm:$0xff]
    %v49 = vld [vmem:[%s0 + $0x68] sm:$0xff]
    %v50 = vld [vmem:[%s0 + $0x70] sm:$0xff]
    %v51 = vld [vmem:[%s0 + $0x78] sm:$0xff]
    %v52 = vld [vmem:[%s0 + $0x80] sm:$0xff]
    %v53 = vld [vmem:[%s0 + $0x88] sm:$0xff]
    %v54 = vld [vmem:[%s0 + $0x90] sm:$0xff]
    %v55 = vld [vmem:[%s0 + $0x98] sm:$0xff]
    %v56 = vld [vmem:[%s0 + $0xa0] sm:$0xff]
    %v57 = vld [vmem:[%s0 + $0xa8] sm:$0xff]
    %v58 = vld [vmem:[%s0 + $0xb0] sm:$0xff]
    %v59 = vld [vmem:[%s0 + $0xb8] sm:$0xff]
    %v60 = vld [vmem:[%s0 + $0xc0] sm:$0xff]
    %v61 = vld [vmem:[%s0 + $0xc8] sm:$0xff]
    %v62 = vld [vmem:[%s0 + $0xd0] sm:$0xff]
    %v63 = vld [vmem:[%s0 + $0xd8] sm:$0xff]
    %v64 = vld [vmem:[%s0 + $0xe0] sm:$0xff]
    %v65 = vld [vmem:[%s0 + $0xe8] sm:$0xff]
    %v66 = vld [vmem:[%s0 + $0xf0] sm:$0xff]
    %v67 = vld [vmem:[%s0 + $0xf8] sm:$0xff]
    %v68 = vld [vmem:[%s0 + $0x100] sm:$0xff]
    %v69 = vld [vmem:[%s0 + $0x108] sm:$0xff]
    %v70 = vld [vmem:[%s0 + $0x110] sm:$0xff]
    %v71 = vld [vmem:[%s0 + $0x118] sm:$0xff]
    %v72 = vld [vmem:[%s0 + $0x120] sm:$0xff]
    %v73 = vld [vmem:[%s0 + $0x128] sm:$0xff]
    %v74 = vld [vmem:[%s0 + $0x130] sm:$0xff]
    %v75 = vld [vmem:[%s0 + $0x138] sm:$0xff]
    %v76 = vld [vmem:[%s1] sm:$0xff]
    %v77 = vld [vmem:[%s1 + $0x8] sm:$0xff]
    %v78 = vld [vmem:[%s1 + $0x10] sm:$0xff]
    %v79 = vld [vmem:[%s1 + $0x18] sm:$0xff]
    %v80 = vld [vmem:[%s2] sm:$0x1f]
    %v81 = vld [vmem:[%s3] sm:$0xff]
    %v82 = vld [vmem:[%s3 + $0x8] sm:$0xff]
    %v83 = vld [vmem:[%s3 + $0x10] sm:$0xff]
    %v84 = vld [vmem:[%s3 + $0x18] sm:$0xff]
    %v85 = vld [vmem:[%s3 + $0x20] sm:$0xff]
    %v86 = vld [vmem:[%s3 + $0x28] sm:$0xff]
    %v87 = vld [vmem:[%s3 + $0x30] sm:$0xff]
    %v88 = vld [vmem:[%s3 + $0x38] sm:$0xff]
    %v89 = vld [vmem:[%s3 + $0x40] sm:$0xff]
    %v90 = vld [vmem:[%s3 + $0x48] sm:$0xff]
    %v91 = vld [vmem:[%s3 + $0x50] sm:$0xf]
    %v92 = vld [vmem:[%s3 + $0x58] sm:$0xf]
    %v93 = vld [vmem:[%s3 + $0x60] sm:$0xf]
    %v94 = vld [vmem:[%s3 + $0x68] sm:$0xf]
    %v95 = vld [vmem:[%s3 + $0x70] sm:$0xf]
    %v96 = vld [vmem:[%s4] sm:$0xff]
    %v97 = vld [vmem:[%s4 + $0x8] sm:$0xff]
    %v98 = vld [vmem:[%s4 + $0x10] sm:$0xff]
    %v99 = vld [vmem:[%s4 + $0x18] sm:$0xff]
    %v100 = vld [vmem:[%s4 + $0x20] sm:$0xff]
    %v101 = vld [vmem:[%s4 + $0x28] sm:$0xff]
    %v102 = vld [vmem:[%s4 + $0x30] sm:$0xff]
    %v103 = vld [vmem:[%s4 + $0x38] sm:$0xff]
    %v104 = vld [vmem:[%s4 + $0x40] sm:$0xff]
    %v105 = vld [vmem:[%s4 + $0x48] sm:$0xff]
    %v106 = vld [vmem:[%s4 + $0x50] sm:$0xff]
    %v107 = vld [vmem:[%s4 + $0x58] sm:$0xff]
    %v108 = vld [vmem:[%s4 + $0x60] sm:$0xff]
    %v109 = vld [vmem:[%s4 + $0x68] sm:$0xff]
    %v110 = vld [vmem:[%s4 + $0x70] sm:$0xff]
    %v111 = vld [vmem:[%s4 + $0x78] sm:$0xff]
    %v112 = vld [vmem:[%s4 + $0x80] sm:$0xff]
    %v113 = vld [vmem:[%s4 + $0x88] sm:$0xff]
    %v114 = vld [vmem:[%s4 + $0x90] sm:$0xff]
    %v115 = vld [vmem:[%s4 + $0x98] sm:$0xff]
    %v116 = vld [vmem:[%s4 + $0xa0] sm:$0xff]
    %v117 = vld [vmem:[%s4 + $0xa8] sm:$0xff]
    %v118 = vld [vmem:[%s4 + $0xb0] sm:$0xff]
    %v119 = vld [vmem:[%s4 + $0xb8] sm:$0xff]
    %v120 = vld [vmem:[%s4 + $0xc0] sm:$0xff]
    %v121 = vld [vmem:[%s4 + $0xc8] sm:$0xff]
    %v122 = vld [vmem:[%s4 + $0xd0] sm:$0xff]
    %v123 = vld [vmem:[%s4 + $0xd8] sm:$0xff]
    %v124 = vld [vmem:[%s4 + $0xe0] sm:$0xff]
    %v125 = vld [vmem:[%s4 + $0xe8] sm:$0xff]
    %v126 = vld [vmem:[%s4 + $0xf0] sm:$0xff]
    %v127 = vld [vmem:[%s4 + $0xf8] sm:$0xff]
    %v128 = vld [vmem:[%s4 + $0x100] sm:$0xff]
    %v129 = vld [vmem:[%s4 + $0x108] sm:$0xff]
    %v130 = vld [vmem:[%s4 + $0x110] sm:$0xff]
    %v131 = vld [vmem:[%s4 + $0x118] sm:$0xff]
    %v132 = vld [vmem:[%s4 + $0x120] sm:$0xff]
    %v133 = vld [vmem:[%s4 + $0x128] sm:$0xff]
    %v134 = vld [vmem:[%s4 + $0x130] sm:$0xff]
    %v135 = vld [vmem:[%s4 + $0x138] sm:$0xff]
    %v136 = vld [vmem:[%s4 + $0x140] sm:$0xff]
    %v137 = vld [vmem:[%s4 + $0x148] sm:$0xff]
    %v138 = vld [vmem:[%s4 + $0x150] sm:$0xff]
    %v139 = vld [vmem:[%s4 + $0x158] sm:$0xff]
    %v140 = vld [vmem:[%s4 + $0x160] sm:$0xff]
    %v141 = vld [vmem:[%s4 + $0x168] sm:$0xff]
    %v142 = vld [vmem:[%s4 + $0x170] sm:$0xff]
    %v143 = vld [vmem:[%s4 + $0x178] sm:$0xff]
    %v144 = vld [vmem:[%s4 + $0x180] sm:$0xff]
    %v145 = vld [vmem:[%s4 + $0x188] sm:$0xff]
    %v146 = vld [vmem:[%s4 + $0x190] sm:$0xff]
    %v147 = vld [vmem:[%s4 + $0x198] sm:$0xff]
    %v148 = vld [vmem:[%s4 + $0x1a0] sm:$0xff]
    %v149 = vld [vmem:[%s4 + $0x1a8] sm:$0xff]
    %v150 = vld [vmem:[%s4 + $0x1b0] sm:$0xff]
    %v151 = vld [vmem:[%s4 + $0x1b8] sm:$0xff]
    %v152 = vld [vmem:[%s4 + $0x1c0] sm:$0xff]
    %v153 = vld [vmem:[%s4 + $0x1c8] sm:$0xff]
    %v154 = vld [vmem:[%s4 + $0x1d0] sm:$0xff]
    %v155 = vld [vmem:[%s4 + $0x1d8] sm:$0xff]
    %v156 = vld [vmem:[%s4 + $0x1e0] sm:$0xff]
    %v157 = vld [vmem:[%s4 + $0x1e8] sm:$0xff]
    %v158 = vld [vmem:[%s4 + $0x1f0] sm:$0xff]
    %v159 = vld [vmem:[%s4 + $0x1f8] sm:$0xff]
    %v160 = vld [vmem:[%s4 + $0x200] sm:$0xff]
    %v161 = vld [vmem:[%s4 + $0x208] sm:$0xff]
    %v162 = vld [vmem:[%s4 + $0x210] sm:$0xff]
    %v163 = vld [vmem:[%s4 + $0x218] sm:$0xff]
    %v164 = vld [vmem:[%s4 + $0x220] sm:$0xff]
    %v165 = vld [vmem:[%s4 + $0x228] sm:$0xff]
    %v166 = vld [vmem:[%s4 + $0x230] sm:$0xff]
    %v167 = vld [vmem:[%s4 + $0x238] sm:$0xff]
    %v168 = vld [vmem:[%s4 + $0x240] sm:$0xff]
    %v169 = vld [vmem:[%s4 + $0x248] sm:$0xff]
    %v170 = vld [vmem:[%s4 + $0x250] sm:$0xff]
    %v171 = vld [vmem:[%s4 + $0x258] sm:$0xff]
    %v172 = vld [vmem:[%s4 + $0x260] sm:$0xff]
    %v173 = vld [vmem:[%s4 + $0x268] sm:$0xff]
    %v174 = vld [vmem:[%s4 + $0x270] sm:$0xff]
    %v175 = vld [vmem:[%s4 + $0x278] sm:$0xff]
    %v176 = vld [vmem:[%s6] sm:$0xff]
    %v177 = vld [vmem:[%s6 + $0x8] sm:$0xff]
    %v178 = vld [vmem:[%s6 + $0x10] sm:$0xff]
    %v179 = vld [vmem:[%s6 + $0x18] sm:$0xff]
    %vm180 = vcmask 162816
    %v182 = vsel %vm180, %v76, 0
    %v185 = vsel %vm180, %v77, 0
    %v188 = vsel %vm180, %v78, 0
    %v191 = vsel %vm180, %v79, 0
    %vm193 = vcmask 1043456
    %v195 = vsel %vm193, %v91, 0
    %v198 = vsel %vm193, %v92, 0
    %v201 = vsel %vm193, %v93, 0
    %v204 = vsel %vm193, %v94, 0
    %v207 = vsel %vm193, %v95, 0
    %209 = vmatprep.subr.mxu0 %v82
    %210 = vmatpush1.msra.mxu0 %v81
    %211 = vmatprep.subr.mxu0 %v87
    %212 = vmatpush1.msra.mxu0 %v86
    %213 = vmatprep.subr.mxu0 %v198
    %214 = vmatpush1.msra.mxu0 %v195
    %215 = vmatprep.subr.mxu0 0.0
    %216 = vmatpush1.msra.mxu0 0.0
    %217 = vmatprep.subr.mxu0 0.0
    %218 = vmatpush1.msra.mxu0 0.0
    %219 = vmatprep.subr.mxu0 0.0
    %220 = vmatpush1.msra.mxu0 0.0
    %221 = vmatprep.subr.mxu0 0.0
    %222 = vmatpush1.msra.mxu0 0.0
    %223 = vmatprep.subr.mxu0 0.0
    %224 = vmatpush1.msra.mxu0 0.0
    %225 = vmatprep.subr.mxu0 0.0
    %226 = vmatpush1.msra.mxu0 0.0
    %227 = vmatprep.subr.mxu0 0.0
    %228 = vmatpush1.msra.mxu0 0.0
    %229 = vmatprep.subr.mxu0 0.0
    %230 = vmatpush1.msra.mxu0 0.0
    %231 = vmatprep.subr.mxu0 0.0
    %232 = vmatpush1.msra.mxu0 0.0
    %233 = vmatprep.subr.mxu0 0.0
    %234 = vmatpush1.msra.mxu0 0.0
    %235 = vmatprep.subr.mxu0 0.0
    %236 = vmatpush1.msra.mxu0 0.0
    %237 = vmatprep.subr.mxu0 0.0
    %238 = vmatpush1.msra.mxu0 0.0
    %239 = vmatprep.subr.mxu0 0.0
    %240 = vmatpush1.msra.mxu0 0.0
    %241 = vmatprep.subr.mxu0 0.0
    %242 = vmatpush1.msra.mxu0 0.0
    %243 = vmatprep.subr.mxu0 0.0
    %244 = vmatpush1.msra.mxu0 0.0
    %245 = vmatprep.subr.mxu0 0.0
    %246 = vmatpush1.msra.mxu0 0.0
    %247 = vmatprep.subr.mxu0 0.0
    %248 = vmatpush1.msra.mxu0 0.0
    %249 = vmatprep.subr.mxu0 0.0
    %250 = vmatpush1.msra.mxu0 0.0
    %251 = vmatprep.subr.mxu0 0.0
    %252 = vmatpush1.msra.mxu0 0.0
    %253 = vmatprep.subr.mxu0 0.0
    %254 = vmatpush1.msra.mxu0 0.0
    %255 = vmatprep.subr.mxu0 0.0
    %256 = vmatpush1.msra.mxu0 0.0
    %257 = vmatprep.subr.mxu0 0.0
    %258 = vmatpush1.msra.mxu0 0.0
    %259 = vmatprep.subr.mxu0 0.0
    %260 = vmatpush1.msra.mxu0 0.0
    %261 = vmatprep.subr.mxu0 0.0
    %262 = vmatpush1.msra.mxu0 0.0
    %263 = vmatprep.subr.mxu0 0.0
    %264 = vmatpush1.msra.mxu0 0.0
    %265 = vmatprep.subr.mxu0 0.0
    %266 = vmatpush1.msra.mxu0 0.0
    %267 = vmatprep.subr.mxu0 0.0
    %268 = vmatpush1.msra.mxu0 0.0
    %269 = vmatprep.subr.mxu0 0.0
    %270 = vmatpush1.msra.mxu0 0.0
    %271 = vmatprep.subr.mxu0 0.0
    %272 = vmatpush1.msra.mxu0 0.0
    %273 = vmatprep.mubr.f32.mxu0 0.0
    %274 = vmatmul.mubr.f32.gmra.mrb[0].mxu0 %v182
    %v275 = vpop.f32.mrb[0].mxu0
    %v276 = vadd.f32 0.0, %v275
    %v277 = vpop.f32.mrb[0].mxu0
    %v278 = vadd.f32 0.0, %v277
    %279 = vmatprep.mubr.f32.mxu0 0.0
    %280 = vmatmul.mubr.f32.gmra.mrb[0].mxu0 %v185
    %v281 = vpop.f32.mrb[0].mxu0
    %v282 = vadd.f32 0.0, %v281
    %v283 = vpop.f32.mrb[0].mxu0
    %v284 = vadd.f32 0.0, %v283
    %285 = vmatprep.mubr.f32.mxu0 0.0
    %286 = vmatmul.mubr.f32.gmra.mrb[0].mxu0 %v188
    %v287 = vpop.f32.mrb[0].mxu0
    %v288 = vadd.f32 0.0, %v287
    %v289 = vpop.f32.mrb[0].mxu0
    %v290 = vadd.f32 0.0, %v289
    %291 = vmatprep.mubr.f32.mxu0 0.0
    %292 = vmatmul.mubr.f32.gmra.mrb[0].mxu0 %v191
    %v293 = vpop.f32.mrb[0].mxu0
    %v294 = vadd.f32 0.0, %v293
    %v295 = vpop.f32.mrb[0].mxu0
    %v296 = vadd.f32 0.0, %v295
    %297 = vdwg.mxu0
    %298 = vmatprep.subr.mxu0 %v84
    %299 = vmatpush1.msra.mxu0 %v83
    %300 = vmatprep.subr.mxu0 %v89
    %301 = vmatpush1.msra.mxu0 %v88
    %302 = vmatprep.subr.mxu0 %v204
    %303 = vmatpush1.msra.mxu0 %v201
    %304 = vmatprep.subr.mxu0 0.0
    %305 = vmatpush1.msra.mxu0 0.0
    %306 = vmatprep.subr.mxu0 0.0
    %307 = vmatpush1.msra.mxu0 0.0
    %308 = vmatprep.subr.mxu0 0.0
    %309 = vmatpush1.msra.mxu0 0.0
    %310 = vmatprep.subr.mxu0 0.0
    %311 = vmatpush1.msra.mxu0 0.0
    %312 = vmatprep.subr.mxu0 0.0
    %313 = vmatpush1.msra.mxu0 0.0
    %314 = vmatprep.subr.mxu0 0.0
    %315 = vmatpush1.msra.mxu0 0.0
    %316 = vmatprep.subr.mxu0 0.0
    %317 = vmatpush1.msra.mxu0 0.0
    %318 = vmatprep.subr.mxu0 0.0
    %319 = vmatpush1.msra.mxu0 0.0
    %320 = vmatprep.subr.mxu0 0.0
    %321 = vmatpush1.msra.mxu0 0.0
    %322 = vmatprep.subr.mxu0 0.0
    %323 = vmatpush1.msra.mxu0 0.0
    %324 = vmatprep.subr.mxu0 0.0
    %325 = vmatpush1.msra.mxu0 0.0
    %326 = vmatprep.subr.mxu0 0.0
    %327 = vmatpush1.msra.mxu0 0.0
    %328 = vmatprep.subr.mxu0 0.0
    %329 = vmatpush1.msra.mxu0 0.0
    %330 = vmatprep.subr.mxu0 0.0
    %331 = vmatpush1.msra.mxu0 0.0
    %332 = vmatprep.subr.mxu0 0.0
    %333 = vmatpush1.msra.mxu0 0.0
    %334 = vmatprep.subr.mxu0 0.0
    %335 = vmatpush1.msra.mxu0 0.0
    %336 = vmatprep.subr.mxu0 0.0
    %337 = vmatpush1.msra.mxu0 0.0
    %338 = vmatprep.subr.mxu0 0.0
    %339 = vmatpush1.msra.mxu0 0.0
    %340 = vmatprep.subr.mxu0 0.0
    %341 = vmatpush1.msra.mxu0 0.0
    %342 = vmatprep.subr.mxu0 0.0
    %343 = vmatpush1.msra.mxu0 0.0
    %344 = vmatprep.subr.mxu0 0.0
    %345 = vmatpush1.msra.mxu0 0.0
    %346 = vmatprep.subr.mxu0 0.0
    %347 = vmatpush1.msra.mxu0 0.0
    %348 = vmatprep.subr.mxu0 0.0
    %349 = vmatpush1.msra.mxu0 0.0
    %350 = vmatprep.subr.mxu0 0.0
    %351 = vmatpush1.msra.mxu0 0.0
    %352 = vmatprep.subr.mxu0 0.0
    %353 = vmatpush1.msra.mxu0 0.0
    %354 = vmatprep.subr.mxu0 0.0
    %355 = vmatpush1.msra.mxu0 0.0
    %356 = vmatprep.subr.mxu0 0.0
    %357 = vmatpush1.msra.mxu0 0.0
    %358 = vmatprep.subr.mxu0 0.0
    %359 = vmatpush1.msra.mxu0 0.0
    %360 = vmatprep.subr.mxu0 0.0
    %361 = vmatpush1.msra.mxu0 0.0
    %362 = vmatprep.mubr.f32.mxu0 0.0
    %363 = vmatmul.mubr.f32.gmra.mrb[0].mxu0 %v182
    %v364 = vpop.f32.mrb[0].mxu0
    %v365 = vadd.f32 0.0, %v364
    %v366 = vpop.f32.mrb[0].mxu0
    %v367 = vadd.f32 0.0, %v366
    %368 = vmatprep.mubr.f32.mxu0 0.0
    %369 = vmatmul.mubr.f32.gmra.mrb[0].mxu0 %v185
    %v370 = vpop.f32.mrb[0].mxu0
    %v371 = vadd.f32 0.0, %v370
    %v372 = vpop.f32.mrb[0].mxu0
    %v373 = vadd.f32 0.0, %v372
    %374 = vmatprep.mubr.f32.mxu0 0.0
    %375 = vmatmul.mubr.f32.gmra.mrb[0].mxu0 %v188
    %v376 = vpop.f32.mrb[0].mxu0
    %v377 = vadd.f32 0.0, %v376
    %v378 = vpop.f32.mrb[0].mxu0
    %v379 = vadd.f32 0.0, %v378
    %380 = vmatprep.mubr.f32.mxu0 0.0
    %381 = vmatmul.mubr.f32.gmra.mrb[0].mxu0 %v191
    %v382 = vpop.f32.mrb[0].mxu0
    %v383 = vadd.f32 0.0, %v382
    %v384 = vpop.f32.mrb[0].mxu0
    %v385 = vadd.f32 0.0, %v384
    %386 = vdwg.mxu0
    %387 = vmatprep.subr.mxu0 0.0
    %388 = vmatpush1.msra.mxu0 %v85
    %389 = vmatprep.subr.mxu0 0.0
    %390 = vmatpush1.msra.mxu0 %v90
    %391 = vmatprep.subr.mxu0 0.0
    %392 = vmatpush1.msra.mxu0 %v207
    %393 = vmatprep.subr.mxu0 0.0
    %394 = vmatpush1.msra.mxu0 0.0
    %395 = vmatprep.subr.mxu0 0.0
    %396 = vmatpush1.msra.mxu0 0.0
    %397 = vmatprep.subr.mxu0 0.0
    %398 = vmatpush1.msra.mxu0 0.0
    %399 = vmatprep.subr.mxu0 0.0
    %400 = vmatpush1.msra.mxu0 0.0
    %401 = vmatprep.subr.mxu0 0.0
    %402 = vmatpush1.msra.mxu0 0.0
    %403 = vmatprep.subr.mxu0 0.0
    %404 = vmatpush1.msra.mxu0 0.0
    %405 = vmatprep.subr.mxu0 0.0
    %406 = vmatpush1.msra.mxu0 0.0
    %407 = vmatprep.subr.mxu0 0.0
    %408 = vmatpush1.msra.mxu0 0.0
    %409 = vmatprep.subr.mxu0 0.0
    %410 = vmatpush1.msra.mxu0 0.0
    %411 = vmatprep.subr.mxu0 0.0
    %412 = vmatpush1.msra.mxu0 0.0
    %413 = vmatprep.subr.mxu0 0.0
    %414 = vmatpush1.msra.mxu0 0.0
    %415 = vmatprep.subr.mxu0 0.0
    %416 = vmatpush1.msra.mxu0 0.0
    %417 = vmatprep.subr.mxu0 0.0
    %418 = vmatpush1.msra.mxu0 0.0
    %419 = vmatprep.subr.mxu0 0.0
    %420 = vmatpush1.msra.mxu0 0.0
    %421 = vmatprep.subr.mxu0 0.0
    %422 = vmatpush1.msra.mxu0 0.0
    %423 = vmatprep.subr.mxu0 0.0
    %424 = vmatpush1.msra.mxu0 0.0
    %425 = vmatprep.subr.mxu0 0.0
    %426 = vmatpush1.msra.mxu0 0.0
    %427 = vmatprep.subr.mxu0 0.0
    %428 = vmatpush1.msra.mxu0 0.0
    %429 = vmatprep.subr.mxu0 0.0
    %430 = vmatpush1.msra.mxu0 0.0
    %431 = vmatprep.subr.mxu0 0.0
    %432 = vmatpush1.msra.mxu0 0.0
    %433 = vmatprep.subr.mxu0 0.0
    %434 = vmatpush1.msra.mxu0 0.0
    %435 = vmatprep.subr.mxu0 0.0
    %436 = vmatpush1.msra.mxu0 0.0
    %437 = vmatprep.subr.mxu0 0.0
    %438 = vmatpush1.msra.mxu0 0.0
    %439 = vmatprep.subr.mxu0 0.0
    %440 = vmatpush1.msra.mxu0 0.0
    %441 = vmatprep.subr.mxu0 0.0
    %442 = vmatpush1.msra.mxu0 0.0
    %443 = vmatprep.subr.mxu0 0.0
    %444 = vmatpush1.msra.mxu0 0.0
    %445 = vmatprep.subr.mxu0 0.0
    %446 = vmatpush1.msra.mxu0 0.0
    %447 = vmatprep.subr.mxu0 0.0
    %448 = vmatpush1.msra.mxu0 0.0
    %449 = vmatprep.subr.mxu0 0.0
    %450 = vmatpush1.msra.mxu0 0.0
    %451 = vmatprep.mubr.f32.mxu0 0.0
    %452 = vmatmul.mubr.f32.gmra.mrb[0].mxu0 %v182
    %v453 = vpop.f32.mrb[0].mxu0
    %v454 = vadd.f32 0.0, %v453
    %v455 = vpop.f32.mrb[0].mxu0
    %456 = vmatprep.mubr.f32.mxu0 0.0
    %457 = vmatmul.mubr.f32.gmra.mrb[0].mxu0 %v185
    %v458 = vpop.f32.mrb[0].mxu0
    %v459 = vadd.f32 0.0, %v458
    %v460 = vpop.f32.mrb[0].mxu0
    %461 = vmatprep.mubr.f32.mxu0 0.0
    %462 = vmatmul.mubr.f32.gmra.mrb[0].mxu0 %v188
    %v463 = vpop.f32.mrb[0].mxu0
    %v464 = vadd.f32 0.0, %v463
    %v465 = vpop.f32.mrb[0].mxu0
    %466 = vmatprep.mubr.f32.mxu0 0.0
    %467 = vmatmul.mubr.f32.gmra.mrb[0].mxu0 %v191
    %v468 = vpop.f32.mrb[0].mxu0
    %v469 = vadd.f32 0.0, %v468
    %v470 = vpop.f32.mrb[0].mxu0
    %471 = vdwg.mxu0
    %vm472 = vcmask 523264
    %v474 = vsel %vm472, %v176, 0
    %v477 = vsel %vm472, %v177, 0
    %v480 = vsel %vm472, %v178, 0
    %v483 = vsel %vm472, %v179, 0
    %485 = vmatprep.subr.mxu0 %v37
    %486 = vmatpush1.msra.mxu0 %v36
    %487 = vmatprep.subr.mxu0 %v42
    %488 = vmatpush1.msra.mxu0 %v41
    %489 = vmatprep.subr.mxu0 %v47
    %490 = vmatpush1.msra.mxu0 %v46
    %491 = vmatprep.subr.mxu0 %v52
    %492 = vmatpush1.msra.mxu0 %v51
    %493 = vmatprep.subr.mxu0 %v57
    %494 = vmatpush1.msra.mxu0 %v56
    %495 = vmatprep.subr.mxu0 %v62
    %496 = vmatpush1.msra.mxu0 %v61
    %497 = vmatprep.subr.mxu0 %v67
    %498 = vmatpush1.msra.mxu0 %v66
    %499 = vmatprep.subr.mxu0 %v72
    %500 = vmatpush1.msra.mxu0 %v71
    %501 = vmatprep.subr.mxu0 0.0
    %502 = vmatpush1.msra.mxu0 0.0
    %503 = vmatprep.subr.mxu0 0.0
    %504 = vmatpush1.msra.mxu0 0.0
    %505 = vmatprep.subr.mxu0 0.0
    %506 = vmatpush1.msra.mxu0 0.0
    %507 = vmatprep.subr.mxu0 0.0
    %508 = vmatpush1.msra.mxu0 0.0
    %509 = vmatprep.subr.mxu0 0.0
    %510 = vmatpush1.msra.mxu0 0.0
    %511 = vmatprep.subr.mxu0 0.0
    %512 = vmatpush1.msra.mxu0 0.0
    %513 = vmatprep.subr.mxu0 0.0
    %514 = vmatpush1.msra.mxu0 0.0
    %515 = vmatprep.subr.mxu0 0.0
    %516 = vmatpush1.msra.mxu0 0.0
    %517 = vmatprep.subr.mxu0 0.0
    %518 = vmatpush1.msra.mxu0 0.0
    %519 = vmatprep.subr.mxu0 0.0
    %520 = vmatpush1.msra.mxu0 0.0
    %521 = vmatprep.subr.mxu0 0.0
    %522 = vmatpush1.msra.mxu0 0.0
    %523 = vmatprep.subr.mxu0 0.0
    %524 = vmatpush1.msra.mxu0 0.0
    %525 = vmatprep.subr.mxu0 0.0
    %526 = vmatpush1.msra.mxu0 0.0
    %527 = vmatprep.subr.mxu0 0.0
    %528 = vmatpush1.msra.mxu0 0.0
    %529 = vmatprep.subr.mxu0 0.0
    %530 = vmatpush1.msra.mxu0 0.0
    %531 = vmatprep.subr.mxu0 0.0
    %532 = vmatpush1.msra.mxu0 0.0
    %533 = vmatprep.subr.mxu0 0.0
    %534 = vmatpush1.msra.mxu0 0.0
    %535 = vmatprep.subr.mxu0 0.0
    %536 = vmatpush1.msra.mxu0 0.0
    %537 = vmatprep.subr.mxu0 0.0
    %538 = vmatpush1.msra.mxu0 0.0
    %539 = vmatprep.subr.mxu0 0.0
    %540 = vmatpush1.msra.mxu0 0.0
    %541 = vmatprep.subr.mxu0 0.0
    %542 = vmatpush1.msra.mxu0 0.0
    %543 = vmatprep.subr.mxu0 0.0
    %544 = vmatpush1.msra.mxu0 0.0
    %545 = vmatprep.subr.mxu0 0.0
    %546 = vmatpush1.msra.mxu0 0.0
    %547 = vmatprep.subr.mxu0 0.0
    %548 = vmatpush1.msra.mxu0 0.0
    %549 = vmatprep.mubr.f32.mxu0 0.0
    %550 = vmatmul.mubr.f32.gmra.mrb[0].mxu0 %v474
    %v551 = vpop.f32.mrb[0].mxu0
    %v552 = vadd.f32 %v276, %v551
    %v553 = vpop.f32.mrb[0].mxu0
    %v554 = vadd.f32 %v278, %v553
    %555 = vmatprep.mubr.f32.mxu0 0.0
    %556 = vmatmul.mubr.f32.gmra.mrb[0].mxu0 %v477
    %v557 = vpop.f32.mrb[0].mxu0
    %v558 = vadd.f32 %v282, %v557
    %v559 = vpop.f32.mrb[0].mxu0
    %v560 = vadd.f32 %v284, %v559
    %561 = vmatprep.mubr.f32.mxu0 0.0
    %562 = vmatmul.mubr.f32.gmra.mrb[0].mxu0 %v480
    %v563 = vpop.f32.mrb[0].mxu0
    %v564 = vadd.f32 %v288, %v563
    %v565 = vpop.f32.mrb[0].mxu0
    %v566 = vadd.f32 %v290, %v565
    %567 = vmatprep.mubr.f32.mxu0 0.0
    %568 = vmatmul.mubr.f32.gmra.mrb[0].mxu0 %v483
    %v569 = vpop.f32.mrb[0].mxu0
    %v570 = vadd.f32 %v294, %v569
    %v571 = vpop.f32.mrb[0].mxu0
    %v572 = vadd.f32 %v296, %v571
    %573 = vdwg.mxu0
    %574 = vmatprep.subr.mxu0 %v39
    %575 = vmatpush1.msra.mxu0 %v38
    %576 = vmatprep.subr.mxu0 %v44
    %577 = vmatpush1.msra.mxu0 %v43
    %578 = vmatprep.subr.mxu0 %v49
    %579 = vmatpush1.msra.mxu0 %v48
    %580 = vmatprep.subr.mxu0 %v54
    %581 = vmatpush1.msra.mxu0 %v53
    %582 = vmatprep.subr.mxu0 %v59
    %583 = vmatpush1.msra.mxu0 %v58
    %584 = vmatprep.subr.mxu0 %v64
    %585 = vmatpush1.msra.mxu0 %v63
    %586 = vmatprep.subr.mxu0 %v69
    %587 = vmatpush1.msra.mxu0 %v68
    %588 = vmatprep.subr.mxu0 %v74
    %589 = vmatpush1.msra.mxu0 %v73
    %590 = vmatprep.subr.mxu0 0.0
    %591 = vmatpush1.msra.mxu0 0.0
    %592 = vmatprep.subr.mxu0 0.0
    %593 = vmatpush1.msra.mxu0 0.0
    %594 = vmatprep.subr.mxu0 0.0
    %595 = vmatpush1.msra.mxu0 0.0
    %596 = vmatprep.subr.mxu0 0.0
    %597 = vmatpush1.msra.mxu0 0.0
    %598 = vmatprep.subr.mxu0 0.0
    %599 = vmatpush1.msra.mxu0 0.0
    %600 = vmatprep.subr.mxu0 0.0
    %601 = vmatpush1.msra.mxu0 0.0
    %602 = vmatprep.subr.mxu0 0.0
    %603 = vmatpush1.msra.mxu0 0.0
    %604 = vmatprep.subr.mxu0 0.0
    %605 = vmatpush1.msra.mxu0 0.0
    %606 = vmatprep.subr.mxu0 0.0
    %607 = vmatpush1.msra.mxu0 0.0
    %608 = vmatprep.subr.mxu0 0.0
    %609 = vmatpush1.msra.mxu0 0.0
    %610 = vmatprep.subr.mxu0 0.0
    %611 = vmatpush1.msra.mxu0 0.0
    %612 = vmatprep.subr.mxu0 0.0
    %613 = vmatpush1.msra.mxu0 0.0
    %614 = vmatprep.subr.mxu0 0.0
    %615 = vmatpush1.msra.mxu0 0.0
    %616 = vmatprep.subr.mxu0 0.0
    %617 = vmatpush1.msra.mxu0 0.0
    %618 = vmatprep.subr.mxu0 0.0
    %619 = vmatpush1.msra.mxu0 0.0
    %620 = vmatprep.subr.mxu0 0.0
    %621 = vmatpush1.msra.mxu0 0.0
    %622 = vmatprep.subr.mxu0 0.0
    %623 = vmatpush1.msra.mxu0 0.0
    %624 = vmatprep.subr.mxu0 0.0
    %625 = vmatpush1.msra.mxu0 0.0
    %626 = vmatprep.subr.mxu0 0.0
    %627 = vmatpush1.msra.mxu0 0.0
    %628 = vmatprep.subr.mxu0 0.0
    %629 = vmatpush1.msra.mxu0 0.0
    %630 = vmatprep.subr.mxu0 0.0
    %631 = vmatpush1.msra.mxu0 0.0
    %632 = vmatprep.subr.mxu0 0.0
    %633 = vmatpush1.msra.mxu0 0.0
    %634 = vmatprep.subr.mxu0 0.0
    %635 = vmatpush1.msra.mxu0 0.0
    %636 = vmatprep.subr.mxu0 0.0
    %637 = vmatpush1.msra.mxu0 0.0
    %638 = vmatprep.mubr.f32.mxu0 0.0
    %639 = vmatmul.mubr.f32.gmra.mrb[0].mxu0 %v474
    %v640 = vpop.f32.mrb[0].mxu0
    %v641 = vadd.f32 %v365, %v640
    %v642 = vpop.f32.mrb[0].mxu0
    %v643 = vadd.f32 %v367, %v642
    %644 = vmatprep.mubr.f32.mxu0 0.0
    %645 = vmatmul.mubr.f32.gmra.mrb[0].mxu0 %v477
    %v646 = vpop.f32.mrb[0].mxu0
    %v647 = vadd.f32 %v371, %v646
    %v648 = vpop.f32.mrb[0].mxu0
    %v649 = vadd.f32 %v373, %v648
    %650 = vmatprep.mubr.f32.mxu0 0.0
    %651 = vmatmul.mubr.f32.gmra.mrb[0].mxu0 %v480
    %v652 = vpop.f32.mrb[0].mxu0
    %v653 = vadd.f32 %v377, %v652
    %v654 = vpop.f32.mrb[0].mxu0
    %v655 = vadd.f32 %v379, %v654
    %656 = vmatprep.mubr.f32.mxu0 0.0
    %657 = vmatmul.mubr.f32.gmra.mrb[0].mxu0 %v483
    %v658 = vpop.f32.mrb[0].mxu0
    %v659 = vadd.f32 %v383, %v658
    %v660 = vpop.f32.mrb[0].mxu0
    %v661 = vadd.f32 %v385, %v660
    %662 = vdwg.mxu0
    %663 = vmatprep.subr.mxu0 0.0
    %664 = vmatpush1.msra.mxu0 %v40
    %665 = vmatprep.subr.mxu0 0.0
    %666 = vmatpush1.msra.mxu0 %v45
    %667 = vmatprep.subr.mxu0 0.0
    %668 = vmatpush1.msra.mxu0 %v50
    %669 = vmatprep.subr.mxu0 0.0
    %670 = vmatpush1.msra.mxu0 %v55
    %671 = vmatprep.subr.mxu0 0.0
    %672 = vmatpush1.msra.mxu0 %v60
    %673 = vmatprep.subr.mxu0 0.0
    %674 = vmatpush1.msra.mxu0 %v65
    %675 = vmatprep.subr.mxu0 0.0
    %676 = vmatpush1.msra.mxu0 %v70
    %677 = vmatprep.subr.mxu0 0.0
    %678 = vmatpush1.msra.mxu0 %v75
    %679 = vmatprep.subr.mxu0 0.0
    %680 = vmatpush1.msra.mxu0 0.0
    %681 = vmatprep.subr.mxu0 0.0
    %682 = vmatpush1.msra.mxu0 0.0
    %683 = vmatprep.subr.mxu0 0.0
    %684 = vmatpush1.msra.mxu0 0.0
    %685 = vmatprep.subr.mxu0 0.0
    %686 = vmatpush1.msra.mxu0 0.0
    %687 = vmatprep.subr.mxu0 0.0
    %688 = vmatpush1.msra.mxu0 0.0
    %689 = vmatprep.subr.mxu0 0.0
    %690 = vmatpush1.msra.mxu0 0.0
    %691 = vmatprep.subr.mxu0 0.0
    %692 = vmatpush1.msra.mxu0 0.0
    %693 = vmatprep.subr.mxu0 0.0
    %694 = vmatpush1.msra.mxu0 0.0
    %695 = vmatprep.subr.mxu0 0.0
    %696 = vmatpush1.msra.mxu0 0.0
    %697 = vmatprep.subr.mxu0 0.0
    %698 = vmatpush1.msra.mxu0 0.0
    %699 = vmatprep.subr.mxu0 0.0
    %700 = vmatpush1.msra.mxu0 0.0
    %701 = vmatprep.subr.mxu0 0.0
    %702 = vmatpush1.msra.mxu0 0.0
    %703 = vmatprep.subr.mxu0 0.0
    %704 = vmatpush1.msra.mxu0 0.0
    %705 = vmatprep.subr.mxu0 0.0
    %706 = vmatpush1.msra.mxu0 0.0
    %707 = vmatprep.subr.mxu0 0.0
    %708 = vmatpush1.msra.mxu0 0.0
    %709 = vmatprep.subr.mxu0 0.0
    %710 = vmatpush1.msra.mxu0 0.0
    %711 = vmatprep.subr.mxu0 0.0
    %712 = vmatpush1.msra.mxu0 0.0
    %713 = vmatprep.subr.mxu0 0.0
    %714 = vmatpush1.msra.mxu0 0.0
    %715 = vmatprep.subr.mxu0 0.0
    %716 = vmatpush1.msra.mxu0 0.0
    %717 = vmatprep.subr.mxu0 0.0
    %718 = vmatpush1.msra.mxu0 0.0
    %719 = vmatprep.subr.mxu0 0.0
    %720 = vmatpush1.msra.mxu0 0.0
    %721 = vmatprep.subr.mxu0 0.0
    %722 = vmatpush1.msra.mxu0 0.0
    %723 = vmatprep.subr.mxu0 0.0
    %724 = vmatpush1.msra.mxu0 0.0
    %725 = vmatprep.subr.mxu0 0.0
    %726 = vmatpush1.msra.mxu0 0.0
    %727 = vmatprep.mubr.f32.mxu0 0.0
    %728 = vmatmul.mubr.f32.gmra.mrb[0].mxu0 %v474
    %v729 = vpop.f32.mrb[0].mxu0
    %v730 = vadd.f32 %v454, %v729
    %v731 = vpop.f32.mrb[0].mxu0
    %732 = vmatprep.mubr.f32.mxu0 0.0
    %733 = vmatmul.mubr.f32.gmra.mrb[0].mxu0 %v477
    %v734 = vpop.f32.mrb[0].mxu0
    %v735 = vadd.f32 %v459, %v734
    %v736 = vpop.f32.mrb[0].mxu0
    %737 = vmatprep.mubr.f32.mxu0 0.0
    %738 = vmatmul.mubr.f32.gmra.mrb[0].mxu0 %v480
    %v739 = vpop.f32.mrb[0].mxu0
    %v740 = vadd.f32 %v464, %v739
    %v741 = vpop.f32.mrb[0].mxu0
    %742 = vmatprep.mubr.f32.mxu0 0.0
    %743 = vmatmul.mubr.f32.gmra.mrb[0].mxu0 %v483
    %v744 = vpop.f32.mrb[0].mxu0
    %v745 = vadd.f32 %v469, %v744
    %v746 = vpop.f32.mrb[0].mxu0
    %747 = vdwg.mxu0
    %v748 = vtanh.pop %v552
    %v749 = vtanh.pop %v554
    %v750 = vtanh.pop %v641
    %v751 = vtanh.pop %v643
    %v752 = vtanh.pop %v730
    %v753 = vtanh.pop %v558
    %v754 = vtanh.pop %v560
    %v755 = vtanh.pop %v647
    %v756 = vtanh.pop %v649
    %v757 = vtanh.pop %v735
    %v758 = vtanh.pop %v564
    %v759 = vtanh.pop %v566
    %v760 = vtanh.pop %v653
    %v761 = vtanh.pop %v655
    %v762 = vtanh.pop %v740
    %v763 = vtanh.pop %v570
    %v764 = vtanh.pop %v572
    %v765 = vtanh.pop %v659
    %v766 = vtanh.pop %v661
    %v767 = vtanh.pop %v745
    %v768 = vld [vmem:[%s5] sm:$0x1]
    %vm769 = vcmask 261120
    %v771 = vsel %vm769, %v768, 0
    %773 = vmatprep.subr.mxu0 %v749
    %774 = vmatpush1.msra.mxu0 %v748
    %775 = vmatprep.subr.mxu0 %v754
    %776 = vmatpush1.msra.mxu0 %v753
    %777 = vmatprep.subr.mxu0 %v759
    %778 = vmatpush1.msra.mxu0 %v758
    %779 = vmatprep.subr.mxu0 %v764
    %780 = vmatpush1.msra.mxu0 %v763
    %781 = vmatprep.subr.mxu0 0.0
    %782 = vmatpush1.msra.mxu0 0.0
    %783 = vmatprep.subr.mxu0 0.0
    %784 = vmatpush1.msra.mxu0 0.0
    %785 = vmatprep.subr.mxu0 0.0
    %786 = vmatpush1.msra.mxu0 0.0
    %787 = vmatprep.subr.mxu0 0.0
    %788 = vmatpush1.msra.mxu0 0.0
    %789 = vmatprep.subr.mxu0 0.0
    %790 = vmatpush1.msra.mxu0 0.0
    %791 = vmatprep.subr.mxu0 0.0
    %792 = vmatpush1.msra.mxu0 0.0
    %793 = vmatprep.subr.mxu0 0.0
    %794 = vmatpush1.msra.mxu0 0.0
    %795 = vmatprep.subr.mxu0 0.0
    %796 = vmatpush1.msra.mxu0 0.0
    %797 = vmatprep.subr.mxu0 0.0
    %798 = vmatpush1.msra.mxu0 0.0
    %799 = vmatprep.subr.mxu0 0.0
    %800 = vmatpush1.msra.mxu0 0.0
    %801 = vmatprep.subr.mxu0 0.0
    %802 = vmatpush1.msra.mxu0 0.0
    %803 = vmatprep.subr.mxu0 0.0
    %804 = vmatpush1.msra.mxu0 0.0
    %805 = vmatprep.subr.mxu0 0.0
    %806 = vmatpush1.msra.mxu0 0.0
    %807 = vmatprep.subr.mxu0 0.0
    %808 = vmatpush1.msra.mxu0 0.0
    %809 = vmatprep.subr.mxu0 0.0
    %810 = vmatpush1.msra.mxu0 0.0
    %811 = vmatprep.subr.mxu0 0.0
    %812 = vmatpush1.msra.mxu0 0.0
    %813 = vmatprep.subr.mxu0 0.0
    %814 = vmatpush1.msra.mxu0 0.0
    %815 = vmatprep.subr.mxu0 0.0
    %816 = vmatpush1.msra.mxu0 0.0
    %817 = vmatprep.subr.mxu0 0.0
    %818 = vmatpush1.msra.mxu0 0.0
    %819 = vmatprep.subr.mxu0 0.0
    %820 = vmatpush1.msra.mxu0 0.0
    %821 = vmatprep.subr.mxu0 0.0
    %822 = vmatpush1.msra.mxu0 0.0
    %823 = vmatprep.subr.mxu0 0.0
    %824 = vmatpush1.msra.mxu0 0.0
    %825 = vmatprep.subr.mxu0 0.0
    %826 = vmatpush1.msra.mxu0 0.0
    %827 = vmatprep.subr.mxu0 0.0
    %828 = vmatpush1.msra.mxu0 0.0
    %829 = vmatprep.subr.mxu0 0.0
    %830 = vmatpush1.msra.mxu0 0.0
    %831 = vmatprep.subr.mxu0 0.0
    %832 = vmatpush1.msra.mxu0 0.0
    %833 = vmatprep.subr.mxu0 0.0
    %834 = vmatpush1.msra.mxu0 0.0
    %835 = vmatprep.subr.mxu0 0.0
    %836 = vmatpush1.msra.mxu0 0.0
    %837 = vmatprep.mubr.f32.mxu0 0.0
    %838 = vmatmul.mubr.f32.gmra.mrb[0].mxu0 %v771
    %v839 = vpop.f32.mrb[0].mxu0
    %v840 = vadd.f32 0.0, %v839
    %v841 = vpop.f32.mrb[0].mxu0
    %v842 = vadd.f32 0.0, %v841
    %843 = vdwg.mxu0
    %844 = vmatprep.subr.mxu0 %v751
    %845 = vmatpush1.msra.mxu0 %v750
    %846 = vmatprep.subr.mxu0 %v756
    %847 = vmatpush1.msra.mxu0 %v755
    %848 = vmatprep.subr.mxu0 %v761
    %849 = vmatpush1.msra.mxu0 %v760
    %850 = vmatprep.subr.mxu0 %v766
    %851 = vmatpush1.msra.mxu0 %v765
    %852 = vmatprep.subr.mxu0 0.0
    %853 = vmatpush1.msra.mxu0 0.0
    %854 = vmatprep.subr.mxu0 0.0
    %855 = vmatpush1.msra.mxu0 0.0
    %856 = vmatprep.subr.mxu0 0.0
    %857 = vmatpush1.msra.mxu0 0.0
    %858 = vmatprep.subr.mxu0 0.0
    %859 = vmatpush1.msra.mxu0 0.0
    %860 = vmatprep.subr.mxu0 0.0
    %861 = vmatpush1.msra.mxu0 0.0
    %862 = vmatprep.subr.mxu0 0.0
    %863 = vmatpush1.msra.mxu0 0.0
    %864 = vmatprep.subr.mxu0 0.0
    %865 = vmatpush1.msra.mxu0 0.0
    %866 = vmatprep.subr.mxu0 0.0
    %867 = vmatpush1.msra.mxu0 0.0
    %868 = vmatprep.subr.mxu0 0.0
    %869 = vmatpush1.msra.mxu0 0.0
    %870 = vmatprep.subr.mxu0 0.0
    %871 = vmatpush1.msra.mxu0 0.0
    %872 = vmatprep.subr.mxu0 0.0
    %873 = vmatpush1.msra.mxu0 0.0
    %874 = vmatprep.subr.mxu0 0.0
    %875 = vmatpush1.msra.mxu0 0.0
    %876 = vmatprep.subr.mxu0 0.0
    %877 = vmatpush1.msra.mxu0 0.0
    %878 = vmatprep.subr.mxu0 0.0
    %879 = vmatpush1.msra.mxu0 0.0
    %880 = vmatprep.subr.mxu0 0.0
    %881 = vmatpush1.msra.mxu0 0.0
    %882 = vmatprep.subr.mxu0 0.0
    %883 = vmatpush1.msra.mxu0 0.0
    %884 = vmatprep.subr.mxu0 0.0
    %885 = vmatpush1.msra.mxu0 0.0
    %886 = vmatprep.subr.mxu0 0.0
    %887 = vmatpush1.msra.mxu0 0.0
    %888 = vmatprep.subr.mxu0 0.0
    %889 = vmatpush1.msra.mxu0 0.0
    %890 = vmatprep.subr.mxu0 0.0
    %891 = vmatpush1.msra.mxu0 0.0
    %892 = vmatprep.subr.mxu0 0.0
    %893 = vmatpush1.msra.mxu0 0.0
    %894 = vmatprep.subr.mxu0 0.0
    %895 = vmatpush1.msra.mxu0 0.0
    %896 = vmatprep.subr.mxu0 0.0
    %897 = vmatpush1.msra.mxu0 0.0
    %898 = vmatprep.subr.mxu0 0.0
    %899 = vmatpush1.msra.mxu0 0.0
    %900 = vmatprep.subr.mxu0 0.0
    %901 = vmatpush1.msra.mxu0 0.0
    %902 = vmatprep.subr.mxu0 0.0
    %903 = vmatpush1.msra.mxu0 0.0
    %904 = vmatprep.subr.mxu0 0.0
    %905 = vmatpush1.msra.mxu0 0.0
    %906 = vmatprep.subr.mxu0 0.0
    %907 = vmatpush1.msra.mxu0 0.0
    %908 = vmatprep.mubr.f32.mxu0 0.0
    %909 = vmatmul.mubr.f32.gmra.mrb[0].mxu0 %v771
    %v910 = vpop.f32.mrb[0].mxu0
    %v911 = vadd.f32 0.0, %v910
    %v912 = vpop.f32.mrb[0].mxu0
    %v913 = vadd.f32 0.0, %v912
    %914 = vdwg.mxu0
    %915 = vmatprep.subr.mxu0 0.0
    %916 = vmatpush1.msra.mxu0 %v752
    %917 = vmatprep.subr.mxu0 0.0
    %918 = vmatpush1.msra.mxu0 %v757
    %919 = vmatprep.subr.mxu0 0.0
    %920 = vmatpush1.msra.mxu0 %v762
    %921 = vmatprep.subr.mxu0 0.0
    %922 = vmatpush1.msra.mxu0 %v767
    %923 = vmatprep.subr.mxu0 0.0
    %924 = vmatpush1.msra.mxu0 0.0
    %925 = vmatprep.subr.mxu0 0.0
    %926 = vmatpush1.msra.mxu0 0.0
    %927 = vmatprep.subr.mxu0 0.0
    %928 = vmatpush1.msra.mxu0 0.0
    %929 = vmatprep.subr.mxu0 0.0
    %930 = vmatpush1.msra.mxu0 0.0
    %931 = vmatprep.subr.mxu0 0.0
    %932 = vmatpush1.msra.mxu0 0.0
    %933 = vmatprep.subr.mxu0 0.0
    %934 = vmatpush1.msra.mxu0 0.0
    %935 = vmatprep.subr.mxu0 0.0
    %936 = vmatpush1.msra.mxu0 0.0
    %937 = vmatprep.subr.mxu0 0.0
    %938 = vmatpush1.msra.mxu0 0.0
    %939 = vmatprep.subr.mxu0 0.0
    %940 = vmatpush1.msra.mxu0 0.0
    %941 = vmatprep.subr.mxu0 0.0
    %942 = vmatpush1.msra.mxu0 0.0
    %943 = vmatprep.subr.mxu0 0.0
    %944 = vmatpush1.msra.mxu0 0.0
    %945 = vmatprep.subr.mxu0 0.0
    %946 = vmatpush1.msra.mxu0 0.0
    %947 = vmatprep.subr.mxu0 0.0
    %948 = vmatpush1.msra.mxu0 0.0
    %949 = vmatprep.subr.mxu0 0.0
    %950 = vmatpush1.msra.mxu0 0.0
    %951 = vmatprep.subr.mxu0 0.0
    %952 = vmatpush1.msra.mxu0 0.0
    %953 = vmatprep.subr.mxu0 0.0
    %954 = vmatpush1.msra.mxu0 0.0
    %955 = vmatprep.subr.mxu0 0.0
    %956 = vmatpush1.msra.mxu0 0.0
    %957 = vmatprep.subr.mxu0 0.0
    %958 = vmatpush1.msra.mxu0 0.0
    %959 = vmatprep.subr.mxu0 0.0
    %960 = vmatpush1.msra.mxu0 0.0
    %961 = vmatprep.subr.mxu0 0.0
    %962 = vmatpush1.msra.mxu0 0.0
    %963 = vmatprep.subr.mxu0 0.0
    %964 = vmatpush1.msra.mxu0 0.0
    %965 = vmatprep.subr.mxu0 0.0
    %966 = vmatpush1.msra.mxu0 0.0
    %967 = vmatprep.subr.mxu0 0.0
    %968 = vmatpush1.msra.mxu0 0.0
    %969 = vmatprep.subr.mxu0 0.0
    %970 = vmatpush1.msra.mxu0 0.0
    %971 = vmatprep.subr.mxu0 0.0
    %972 = vmatpush1.msra.mxu0 0.0
    %973 = vmatprep.subr.mxu0 0.0
    %974 = vmatpush1.msra.mxu0 0.0
    %975 = vmatprep.subr.mxu0 0.0
    %976 = vmatpush1.msra.mxu0 0.0
    %977 = vmatprep.subr.mxu0 0.0
    %978 = vmatpush1.msra.mxu0 0.0
    %979 = vmatprep.mubr.f32.mxu0 0.0
    %980 = vmatmul.mubr.f32.gmra.mrb[0].mxu0 %v771
    %v981 = vpop.f32.mrb[0].mxu0
    %v982 = vadd.f32 0.0, %v981
    %v983 = vpop.f32.mrb[0].mxu0
    %984 = vdwg.mxu0
    %vm985 = vcmask 1040384
    %v986 = vsel %vm985, %v840, -inf
    %v987 = vsel %vm985, %v842, -inf
    %v988 = vsel %vm985, %v911, -inf
    %v989 = vsel %vm985, %v913, -inf
    %v990 = vsel %vm985, %v982, -inf
    %v991 = vmax.f32 %v986, %v990
    %v992 = vmax.f32 %v991, %v987
    %v993 = vmax.f32 %v988, %v989
    %v994 = vmax.f32 %v992, %v993
    %995 = vmax.xlane.f32.xlu0 %v994
    %v996 = vpop.xlane.xlu0 %995
    %v997 = vsub.f32 %v840, %v996
    %v998 = vsub.f32 %v842, %v996
    %v999 = vsub.f32 %v911, %v996
    %v1000 = vsub.f32 %v913, %v996
    %v1001 = vsub.f32 %v982, %v996
    %v1002 = vmul.f32 %v997, 1.442695
    %v1003 = vpow.pop %v1002
    %v1004 = vmul.f32 %v998, 1.442695
    %v1005 = vpow.pop %v1004
    %v1006 = vmul.f32 %v999, 1.442695
    %v1007 = vpow.pop %v1006
    %v1008 = vmul.f32 %v1000, 1.442695
    %v1009 = vpow.pop %v1008
    %v1010 = vmul.f32 %v1001, 1.442695
    %v1011 = vpow.pop %v1010
    %1012 = vmatprep.subr.mxu0 0.0
    %1013 = vmatpush1.msra.mxu0 %v96
    %1014 = vmatprep.subr.mxu0 0.0
    %1015 = vmatpush1.msra.mxu0 %v97
    %1016 = vmatprep.subr.mxu0 0.0
    %1017 = vmatpush1.msra.mxu0 %v98
    %1018 = vmatprep.subr.mxu0 0.0
    %1019 = vmatpush1.msra.mxu0 %v99
    %1020 = vmatprep.subr.mxu0 0.0
    %1021 = vmatpush1.msra.mxu0 %v100
    %1022 = vmatprep.subr.mxu0 0.0
    %1023 = vmatpush1.msra.mxu0 %v101
    %1024 = vmatprep.subr.mxu0 0.0
    %1025 = vmatpush1.msra.mxu0 %v102
    %1026 = vmatprep.subr.mxu0 0.0
    %1027 = vmatpush1.msra.mxu0 %v103
    %1028 = vmatprep.subr.mxu0 0.0
    %1029 = vmatpush1.msra.mxu0 %v104
    %1030 = vmatprep.subr.mxu0 0.0
    %1031 = vmatpush1.msra.mxu0 %v105
    %1032 = vmatprep.subr.mxu0 0.0
    %1033 = vmatpush1.msra.mxu0 %v106
    %1034 = vmatprep.subr.mxu0 0.0
    %1035 = vmatpush1.msra.mxu0 %v107
    %1036 = vmatprep.subr.mxu0 0.0
    %1037 = vmatpush1.msra.mxu0 %v108
    %1038 = vmatprep.subr.mxu0 0.0
    %1039 = vmatpush1.msra.mxu0 %v109
    %1040 = vmatprep.subr.mxu0 0.0
    %1041 = vmatpush1.msra.mxu0 %v110
    %1042 = vmatprep.subr.mxu0 0.0
    %1043 = vmatpush1.msra.mxu0 %v111
    %1044 = vmatprep.subr.mxu0 0.0
    %1045 = vmatpush1.msra.mxu0 %v112
    %1046 = vmatprep.subr.mxu0 0.0
    %1047 = vmatpush1.msra.mxu0 %v113
    %1048 = vmatprep.subr.mxu0 0.0
    %1049 = vmatpush1.msra.mxu0 %v114
    %1050 = vmatprep.subr.mxu0 0.0
    %1051 = vmatpush1.msra.mxu0 %v115
    %1052 = vmatprep.subr.mxu0 0.0
    %1053 = vmatpush1.msra.mxu0 %v116
    %1054 = vmatprep.subr.mxu0 0.0
    %1055 = vmatpush1.msra.mxu0 %v117
    %1056 = vmatprep.subr.mxu0 0.0
    %1057 = vmatpush1.msra.mxu0 %v118
    %1058 = vmatprep.subr.mxu0 0.0
    %1059 = vmatpush1.msra.mxu0 %v119
    %1060 = vmatprep.subr.mxu0 0.0
    %1061 = vmatpush1.msra.mxu0 %v120
    %1062 = vmatprep.subr.mxu0 0.0
    %1063 = vmatpush1.msra.mxu0 %v121
    %1064 = vmatprep.subr.mxu0 0.0
    %1065 = vmatpush1.msra.mxu0 %v122
    %1066 = vmatprep.subr.mxu0 0.0
    %1067 = vmatpush1.msra.mxu0 %v123
    %1068 = vmatprep.subr.mxu0 0.0
    %1069 = vmatpush1.msra.mxu0 %v124
    %1070 = vmatprep.subr.mxu0 0.0
    %1071 = vmatpush1.msra.mxu0 %v125
    %1072 = vmatprep.subr.mxu0 0.0
    %1073 = vmatpush1.msra.mxu0 %v126
    %1074 = vmatprep.subr.mxu0 0.0
    %1075 = vmatpush1.msra.mxu0 %v127
    %1076 = vmatprep.mubr.f32.mxu0 %v1005
    %1077 = vmatmul.mubr.f32.gmra.mrb[0].mxu0 %v1003
    %v1078 = vpop.f32.mrb[0].mxu0
    %v1079 = vadd.f32 0.0, %v1078
    %v1080 = vpop.f32.mrb[0].mxu0
    %1081 = vdwg.mxu0
    %1082 = vmatprep.subr.mxu0 0.0
    %1083 = vmatpush1.msra.mxu0 %v128
    %1084 = vmatprep.subr.mxu0 0.0
    %1085 = vmatpush1.msra.mxu0 %v129
    %1086 = vmatprep.subr.mxu0 0.0
    %1087 = vmatpush1.msra.mxu0 %v130
    %1088 = vmatprep.subr.mxu0 0.0
    %1089 = vmatpush1.msra.mxu0 %v131
    %1090 = vmatprep.subr.mxu0 0.0
    %1091 = vmatpush1.msra.mxu0 %v132
    %1092 = vmatprep.subr.mxu0 0.0
    %1093 = vmatpush1.msra.mxu0 %v133
    %1094 = vmatprep.subr.mxu0 0.0
    %1095 = vmatpush1.msra.mxu0 %v134
    %1096 = vmatprep.subr.mxu0 0.0
    %1097 = vmatpush1.msra.mxu0 %v135
    %1098 = vmatprep.subr.mxu0 0.0
    %1099 = vmatpush1.msra.mxu0 %v136
    %1100 = vmatprep.subr.mxu0 0.0
    %1101 = vmatpush1.msra.mxu0 %v137
    %1102 = vmatprep.subr.mxu0 0.0
    %1103 = vmatpush1.msra.mxu0 %v138
    %1104 = vmatprep.subr.mxu0 0.0
    %1105 = vmatpush1.msra.mxu0 %v139
    %1106 = vmatprep.subr.mxu0 0.0
    %1107 = vmatpush1.msra.mxu0 %v140
    %1108 = vmatprep.subr.mxu0 0.0
    %1109 = vmatpush1.msra.mxu0 %v141
    %1110 = vmatprep.subr.mxu0 0.0
    %1111 = vmatpush1.msra.mxu0 %v142
    %1112 = vmatprep.subr.mxu0 0.0
    %1113 = vmatpush1.msra.mxu0 %v143
    %1114 = vmatprep.subr.mxu0 0.0
    %1115 = vmatpush1.msra.mxu0 %v144
    %1116 = vmatprep.subr.mxu0 0.0
    %1117 = vmatpush1.msra.mxu0 %v145
    %1118 = vmatprep.subr.mxu0 0.0
    %1119 = vmatpush1.msra.mxu0 %v146
    %1120 = vmatprep.subr.mxu0 0.0
    %1121 = vmatpush1.msra.mxu0 %v147
    %1122 = vmatprep.subr.mxu0 0.0
    %1123 = vmatpush1.msra.mxu0 %v148
    %1124 = vmatprep.subr.mxu0 0.0
    %1125 = vmatpush1.msra.mxu0 %v149
    %1126 = vmatprep.subr.mxu0 0.0
    %1127 = vmatpush1.msra.mxu0 %v150
    %1128 = vmatprep.subr.mxu0 0.0
    %1129 = vmatpush1.msra.mxu0 %v151
    %1130 = vmatprep.subr.mxu0 0.0
    %1131 = vmatpush1.msra.mxu0 %v152
    %1132 = vmatprep.subr.mxu0 0.0
    %1133 = vmatpush1.msra.mxu0 %v153
    %1134 = vmatprep.subr.mxu0 0.0
    %1135 = vmatpush1.msra.mxu0 %v154
    %1136 = vmatprep.subr.mxu0 0.0
    %1137 = vmatpush1.msra.mxu0 %v155
    %1138 = vmatprep.subr.mxu0 0.0
    %1139 = vmatpush1.msra.mxu0 %v156
    %1140 = vmatprep.subr.mxu0 0.0
    %1141 = vmatpush1.msra.mxu0 %v157
    %1142 = vmatprep.subr.mxu0 0.0
    %1143 = vmatpush1.msra.mxu0 %v158
    %1144 = vmatprep.subr.mxu0 0.0
    %1145 = vmatpush1.msra.mxu0 %v159
    %1146 = vmatprep.mubr.f32.mxu0 %v1009
    %1147 = vmatmul.mubr.f32.gmra.mrb[0].mxu0 %v1007
    %v1148 = vpop.f32.mrb[0].mxu0
    %v1149 = vadd.f32 %v1079, %v1148
    %v1150 = vpop.f32.mrb[0].mxu0
    %1151 = vdwg.mxu0
    %1152 = vmatprep.subr.mxu0 0.0
    %1153 = vmatpush1.msra.mxu0 %v160
    %1154 = vmatprep.subr.mxu0 0.0
    %1155 = vmatpush1.msra.mxu0 %v161
    %1156 = vmatprep.subr.mxu0 0.0
    %1157 = vmatpush1.msra.mxu0 %v162
    %1158 = vmatprep.subr.mxu0 0.0
    %1159 = vmatpush1.msra.mxu0 %v163
    %1160 = vmatprep.subr.mxu0 0.0
    %1161 = vmatpush1.msra.mxu0 %v164
    %1162 = vmatprep.subr.mxu0 0.0
    %1163 = vmatpush1.msra.mxu0 %v165
    %1164 = vmatprep.subr.mxu0 0.0
    %1165 = vmatpush1.msra.mxu0 %v166
    %1166 = vmatprep.subr.mxu0 0.0
    %1167 = vmatpush1.msra.mxu0 %v167
    %1168 = vmatprep.subr.mxu0 0.0
    %1169 = vmatpush1.msra.mxu0 %v168
    %1170 = vmatprep.subr.mxu0 0.0
    %1171 = vmatpush1.msra.mxu0 %v169
    %1172 = vmatprep.subr.mxu0 0.0
    %1173 = vmatpush1.msra.mxu0 %v170
    %1174 = vmatprep.subr.mxu0 0.0
    %1175 = vmatpush1.msra.mxu0 %v171
    %1176 = vmatprep.subr.mxu0 0.0
    %1177 = vmatpush1.msra.mxu0 %v172
    %1178 = vmatprep.subr.mxu0 0.0
    %1179 = vmatpush1.msra.mxu0 %v173
    %1180 = vmatprep.subr.mxu0 0.0
    %1181 = vmatpush1.msra.mxu0 %v174
    %1182 = vmatprep.subr.mxu0 0.0
    %1183 = vmatpush1.msra.mxu0 %v175
    %1184 = vmatprep.subr.mxu0 0.0
    %1185 = vmatpush1.msra.mxu0 0.0
    %1186 = vmatprep.subr.mxu0 0.0
    %1187 = vmatpush1.msra.mxu0 0.0
    %1188 = vmatprep.subr.mxu0 0.0
    %1189 = vmatpush1.msra.mxu0 0.0
    %1190 = vmatprep.subr.mxu0 0.0
    %1191 = vmatpush1.msra.mxu0 0.0
    %1192 = vmatprep.subr.mxu0 0.0
    %1193 = vmatpush1.msra.mxu0 0.0
    %1194 = vmatprep.subr.mxu0 0.0
    %1195 = vmatpush1.msra.mxu0 0.0
    %1196 = vmatprep.subr.mxu0 0.0
    %1197 = vmatpush1.msra.mxu0 0.0
    %1198 = vmatprep.subr.mxu0 0.0
    %1199 = vmatpush1.msra.mxu0 0.0
    %1200 = vmatprep.subr.mxu0 0.0
    %1201 = vmatpush1.msra.mxu0 0.0
    %1202 = vmatprep.subr.mxu0 0.0
    %1203 = vmatpush1.msra.mxu0 0.0
    %1204 = vmatprep.subr.mxu0 0.0
    %1205 = vmatpush1.msra.mxu0 0.0
    %1206 = vmatprep.subr.mxu0 0.0
    %1207 = vmatpush1.msra.mxu0 0.0
    %1208 = vmatprep.subr.mxu0 0.0
    %1209 = vmatpush1.msra.mxu0 0.0
    %1210 = vmatprep.subr.mxu0 0.0
    %1211 = vmatpush1.msra.mxu0 0.0
    %1212 = vmatprep.subr.mxu0 0.0
    %1213 = vmatpush1.msra.mxu0 0.0
    %1214 = vmatprep.subr.mxu0 0.0
    %1215 = vmatpush1.msra.mxu0 0.0
    %1216 = vmatprep.mubr.f32.mxu0 0.0
    %1217 = vmatmul.mubr.f32.gmra.mrb[0].mxu0 %v1011
    %v1218 = vpop.f32.mrb[0].mxu0
    %v1219 = vadd.f32 %v1149, %v1218
    %v1220 = vpop.f32.mrb[0].mxu0
    %1221 = vdwg.mxu0
    %v1222 = vmax.f32 %v1219, 1e-30
    %v1223 = vrcp.pop %v1222
    %v1225 = vsel %vm180, %v1223, 0
    %1227 = vmatprep.subr.mxu0 %v82
    %1228 = vmatpush1.msra.mxu0 %v81
    %1229 = vmatprep.subr.mxu0 %v87
    %1230 = vmatpush1.msra.mxu0 %v86
    %1231 = vmatprep.subr.mxu0 %v198
    %1232 = vmatpush1.msra.mxu0 %v195
    %1233 = vmatprep.subr.mxu0 0.0
    %1234 = vmatpush1.msra.mxu0 0.0
    %1235 = vmatprep.subr.mxu0 0.0
    %1236 = vmatpush1.msra.mxu0 0.0
    %1237 = vmatprep.subr.mxu0 0.0
    %1238 = vmatpush1.msra.mxu0 0.0
    %1239 = vmatprep.subr.mxu0 0.0
    %1240 = vmatpush1.msra.mxu0 0.0
    %1241 = vmatprep.subr.mxu0 0.0
    %1242 = vmatpush1.msra.mxu0 0.0
    %1243 = vmatprep.subr.mxu0 0.0
    %1244 = vmatpush1.msra.mxu0 0.0
    %1245 = vmatprep.subr.mxu0 0.0
    %1246 = vmatpush1.msra.mxu0 0.0
    %1247 = vmatprep.subr.mxu0 0.0
    %1248 = vmatpush1.msra.mxu0 0.0
    %1249 = vmatprep.subr.mxu0 0.0
    %1250 = vmatpush1.msra.mxu0 0.0
    %1251 = vmatprep.subr.mxu0 0.0
    %1252 = vmatpush1.msra.mxu0 0.0
    %1253 = vmatprep.subr.mxu0 0.0
    %1254 = vmatpush1.msra.mxu0 0.0
    %1255 = vmatprep.subr.mxu0 0.0
    %1256 = vmatpush1.msra.mxu0 0.0
    %1257 = vmatprep.subr.mxu0 0.0
    %1258 = vmatpush1.msra.mxu0 0.0
    %1259 = vmatprep.subr.mxu0 0.0
    %1260 = vmatpush1.msra.mxu0 0.0
    %1261 = vmatprep.subr.mxu0 0.0
    %1262 = vmatpush1.msra.mxu0 0.0
    %1263 = vmatprep.subr.mxu0 0.0
    %1264 = vmatpush1.msra.mxu0 0.0
    %1265 = vmatprep.subr.mxu0 0.0
    %1266 = vmatpush1.msra.mxu0 0.0
    %1267 = vmatprep.subr.mxu0 0.0
    %1268 = vmatpush1.msra.mxu0 0.0
    %1269 = vmatprep.subr.mxu0 0.0
    %1270 = vmatpush1.msra.mxu0 0.0
    %1271 = vmatprep.subr.mxu0 0.0
    %1272 = vmatpush1.msra.mxu0 0.0
    %1273 = vmatprep.subr.mxu0 0.0
    %1274 = vmatpush1.msra.mxu0 0.0
    %1275 = vmatprep.subr.mxu0 0.0
    %1276 = vmatpush1.msra.mxu0 0.0
    %1277 = vmatprep.subr.mxu0 0.0
    %1278 = vmatpush1.msra.mxu0 0.0
    %1279 = vmatprep.subr.mxu0 0.0
    %1280 = vmatpush1.msra.mxu0 0.0
    %1281 = vmatprep.subr.mxu0 0.0
    %1282 = vmatpush1.msra.mxu0 0.0
    %1283 = vmatprep.subr.mxu0 0.0
    %1284 = vmatpush1.msra.mxu0 0.0
    %1285 = vmatprep.subr.mxu0 0.0
    %1286 = vmatpush1.msra.mxu0 0.0
    %1287 = vmatprep.subr.mxu0 0.0
    %1288 = vmatpush1.msra.mxu0 0.0
    %1289 = vmatprep.subr.mxu0 0.0
    %1290 = vmatpush1.msra.mxu0 0.0
    %1291 = vmatprep.mubr.f32.mxu0 0.0
    %1292 = vmatmul.mubr.f32.gmra.mrb[0].mxu0 %v1225
    %v1293 = vpop.f32.mrb[0].mxu0
    %v1294 = vadd.f32 0.0, %v1293
    %v1295 = vpop.f32.mrb[0].mxu0
    %v1296 = vadd.f32 0.0, %v1295
    %1297 = vdwg.mxu0
    %1298 = vmatprep.subr.mxu0 %v84
    %1299 = vmatpush1.msra.mxu0 %v83
    %1300 = vmatprep.subr.mxu0 %v89
    %1301 = vmatpush1.msra.mxu0 %v88
    %1302 = vmatprep.subr.mxu0 %v204
    %1303 = vmatpush1.msra.mxu0 %v201
    %1304 = vmatprep.subr.mxu0 0.0
    %1305 = vmatpush1.msra.mxu0 0.0
    %1306 = vmatprep.subr.mxu0 0.0
    %1307 = vmatpush1.msra.mxu0 0.0
    %1308 = vmatprep.subr.mxu0 0.0
    %1309 = vmatpush1.msra.mxu0 0.0
    %1310 = vmatprep.subr.mxu0 0.0
    %1311 = vmatpush1.msra.mxu0 0.0
    %1312 = vmatprep.subr.mxu0 0.0
    %1313 = vmatpush1.msra.mxu0 0.0
    %1314 = vmatprep.subr.mxu0 0.0
    %1315 = vmatpush1.msra.mxu0 0.0
    %1316 = vmatprep.subr.mxu0 0.0
    %1317 = vmatpush1.msra.mxu0 0.0
    %1318 = vmatprep.subr.mxu0 0.0
    %1319 = vmatpush1.msra.mxu0 0.0
    %1320 = vmatprep.subr.mxu0 0.0
    %1321 = vmatpush1.msra.mxu0 0.0
    %1322 = vmatprep.subr.mxu0 0.0
    %1323 = vmatpush1.msra.mxu0 0.0
    %1324 = vmatprep.subr.mxu0 0.0
    %1325 = vmatpush1.msra.mxu0 0.0
    %1326 = vmatprep.subr.mxu0 0.0
    %1327 = vmatpush1.msra.mxu0 0.0
    %1328 = vmatprep.subr.mxu0 0.0
    %1329 = vmatpush1.msra.mxu0 0.0
    %1330 = vmatprep.subr.mxu0 0.0
    %1331 = vmatpush1.msra.mxu0 0.0
    %1332 = vmatprep.subr.mxu0 0.0
    %1333 = vmatpush1.msra.mxu0 0.0
    %1334 = vmatprep.subr.mxu0 0.0
    %1335 = vmatpush1.msra.mxu0 0.0
    %1336 = vmatprep.subr.mxu0 0.0
    %1337 = vmatpush1.msra.mxu0 0.0
    %1338 = vmatprep.subr.mxu0 0.0
    %1339 = vmatpush1.msra.mxu0 0.0
    %1340 = vmatprep.subr.mxu0 0.0
    %1341 = vmatpush1.msra.mxu0 0.0
    %1342 = vmatprep.subr.mxu0 0.0
    %1343 = vmatpush1.msra.mxu0 0.0
    %1344 = vmatprep.subr.mxu0 0.0
    %1345 = vmatpush1.msra.mxu0 0.0
    %1346 = vmatprep.subr.mxu0 0.0
    %1347 = vmatpush1.msra.mxu0 0.0
    %1348 = vmatprep.subr.mxu0 0.0
    %1349 = vmatpush1.msra.mxu0 0.0
    %1350 = vmatprep.subr.mxu0 0.0
    %1351 = vmatpush1.msra.mxu0 0.0
    %1352 = vmatprep.subr.mxu0 0.0
    %1353 = vmatpush1.msra.mxu0 0.0
    %1354 = vmatprep.subr.mxu0 0.0
    %1355 = vmatpush1.msra.mxu0 0.0
    %1356 = vmatprep.subr.mxu0 0.0
    %1357 = vmatpush1.msra.mxu0 0.0
    %1358 = vmatprep.subr.mxu0 0.0
    %1359 = vmatpush1.msra.mxu0 0.0
    %1360 = vmatprep.subr.mxu0 0.0
    %1361 = vmatpush1.msra.mxu0 0.0
    %1362 = vmatprep.mubr.f32.mxu0 0.0
    %1363 = vmatmul.mubr.f32.gmra.mrb[0].mxu0 %v1225
    %v1364 = vpop.f32.mrb[0].mxu0
    %v1365 = vadd.f32 0.0, %v1364
    %v1366 = vpop.f32.mrb[0].mxu0
    %v1367 = vadd.f32 0.0, %v1366
    %1368 = vdwg.mxu0
    %1369 = vmatprep.subr.mxu0 0.0
    %1370 = vmatpush1.msra.mxu0 %v85
    %1371 = vmatprep.subr.mxu0 0.0
    %1372 = vmatpush1.msra.mxu0 %v90
    %1373 = vmatprep.subr.mxu0 0.0
    %1374 = vmatpush1.msra.mxu0 %v207
    %1375 = vmatprep.subr.mxu0 0.0
    %1376 = vmatpush1.msra.mxu0 0.0
    %1377 = vmatprep.subr.mxu0 0.0
    %1378 = vmatpush1.msra.mxu0 0.0
    %1379 = vmatprep.subr.mxu0 0.0
    %1380 = vmatpush1.msra.mxu0 0.0
    %1381 = vmatprep.subr.mxu0 0.0
    %1382 = vmatpush1.msra.mxu0 0.0
    %1383 = vmatprep.subr.mxu0 0.0
    %1384 = vmatpush1.msra.mxu0 0.0
    %1385 = vmatprep.subr.mxu0 0.0
    %1386 = vmatpush1.msra.mxu0 0.0
    %1387 = vmatprep.subr.mxu0 0.0
    %1388 = vmatpush1.msra.mxu0 0.0
    %1389 = vmatprep.subr.mxu0 0.0
    %1390 = vmatpush1.msra.mxu0 0.0
    %1391 = vmatprep.subr.mxu0 0.0
    %1392 = vmatpush1.msra.mxu0 0.0
    %1393 = vmatprep.subr.mxu0 0.0
    %1394 = vmatpush1.msra.mxu0 0.0
    %1395 = vmatprep.subr.mxu0 0.0
    %1396 = vmatpush1.msra.mxu0 0.0
    %1397 = vmatprep.subr.mxu0 0.0
    %1398 = vmatpush1.msra.mxu0 0.0
    %1399 = vmatprep.subr.mxu0 0.0
    %1400 = vmatpush1.msra.mxu0 0.0
    %1401 = vmatprep.subr.mxu0 0.0
    %1402 = vmatpush1.msra.mxu0 0.0
    %1403 = vmatprep.subr.mxu0 0.0
    %1404 = vmatpush1.msra.mxu0 0.0
    %1405 = vmatprep.subr.mxu0 0.0
    %1406 = vmatpush1.msra.mxu0 0.0
    %1407 = vmatprep.subr.mxu0 0.0
    %1408 = vmatpush1.msra.mxu0 0.0
    %1409 = vmatprep.subr.mxu0 0.0
    %1410 = vmatpush1.msra.mxu0 0.0
    %1411 = vmatprep.subr.mxu0 0.0
    %1412 = vmatpush1.msra.mxu0 0.0
    %1413 = vmatprep.subr.mxu0 0.0
    %1414 = vmatpush1.msra.mxu0 0.0
    %1415 = vmatprep.subr.mxu0 0.0
    %1416 = vmatpush1.msra.mxu0 0.0
    %1417 = vmatprep.subr.mxu0 0.0
    %1418 = vmatpush1.msra.mxu0 0.0
    %1419 = vmatprep.subr.mxu0 0.0
    %1420 = vmatpush1.msra.mxu0 0.0
    %1421 = vmatprep.subr.mxu0 0.0
    %1422 = vmatpush1.msra.mxu0 0.0
    %1423 = vmatprep.subr.mxu0 0.0
    %1424 = vmatpush1.msra.mxu0 0.0
    %1425 = vmatprep.subr.mxu0 0.0
    %1426 = vmatpush1.msra.mxu0 0.0
    %1427 = vmatprep.subr.mxu0 0.0
    %1428 = vmatpush1.msra.mxu0 0.0
    %1429 = vmatprep.subr.mxu0 0.0
    %1430 = vmatpush1.msra.mxu0 0.0
    %1431 = vmatprep.subr.mxu0 0.0
    %1432 = vmatpush1.msra.mxu0 0.0
    %1433 = vmatprep.mubr.f32.mxu0 0.0
    %1434 = vmatmul.mubr.f32.gmra.mrb[0].mxu0 %v1225
    %v1435 = vpop.f32.mrb[0].mxu0
    %v1436 = vadd.f32 0.0, %v1435
    %v1437 = vpop.f32.mrb[0].mxu0
    %1438 = vdwg.mxu0
    %v1439 = vmul.f32 %v1003, %v1294
    %v1440 = vmul.f32 %v1005, %v1296
    %v1441 = vmul.f32 %v1007, %v1365
    %v1442 = vmul.f32 %v1009, %v1367
    %v1443 = vmul.f32 %v1011, %v1436
    %v1444 = vlaneseq
    %v1445 = vshrl.u32 %v1444, 7
    %v1446 = vsub.s32 0, %v1445
    %v1447 = vrot.slane %v1439, %v1446
    %v1448 = vlaneseq
    %v1449 = vshrl.u32 %v1448, 7
    %v1450 = vsub.s32 0, %v1449
    %v1451 = vrot.slane %v1440, %v1450
    %v1452 = vlaneseq
    %v1453 = vshrl.u32 %v1452, 7
    %v1454 = vsub.s32 0, %v1453
    %v1455 = vrot.slane %v1441, %v1454
    %v1456 = vlaneseq
    %v1457 = vshrl.u32 %v1456, 7
    %v1458 = vsub.s32 0, %v1457
    %v1459 = vrot.slane %v1442, %v1458
    %v1460 = vlaneseq
    %v1461 = vshrl.u32 %v1460, 7
    %v1462 = vsub.s32 0, %v1461
    %v1463 = vrot.slane %v1443, %v1462
    %v1464 = vmul.f32 %v36, %v1447
    %v1465 = vmul.f32 %v37, %v1451
    %v1466 = vmul.f32 %v38, %v1455
    %v1467 = vmul.f32 %v39, %v1459
    %v1468 = vmul.f32 %v40, %v1463
    %v1469 = vmul.f32 %v41, %v1447
    %v1470 = vmul.f32 %v42, %v1451
    %v1471 = vmul.f32 %v43, %v1455
    %v1472 = vmul.f32 %v44, %v1459
    %v1473 = vmul.f32 %v45, %v1463
    %v1474 = vmul.f32 %v46, %v1447
    %v1475 = vmul.f32 %v47, %v1451
    %v1476 = vmul.f32 %v48, %v1455
    %v1477 = vmul.f32 %v49, %v1459
    %v1478 = vmul.f32 %v50, %v1463
    %v1479 = vmul.f32 %v51, %v1447
    %v1480 = vmul.f32 %v52, %v1451
    %v1481 = vmul.f32 %v53, %v1455
    %v1482 = vmul.f32 %v54, %v1459
    %v1483 = vmul.f32 %v55, %v1463
    %1484 = vmatprep.subr.mxu0 0.0
    %1485 = vmatpush1.msra.mxu0 %v96
    %1486 = vmatprep.subr.mxu0 0.0
    %1487 = vmatpush1.msra.mxu0 %v97
    %1488 = vmatprep.subr.mxu0 0.0
    %1489 = vmatpush1.msra.mxu0 %v98
    %1490 = vmatprep.subr.mxu0 0.0
    %1491 = vmatpush1.msra.mxu0 %v99
    %1492 = vmatprep.subr.mxu0 0.0
    %1493 = vmatpush1.msra.mxu0 %v100
    %1494 = vmatprep.subr.mxu0 0.0
    %1495 = vmatpush1.msra.mxu0 %v101
    %1496 = vmatprep.subr.mxu0 0.0
    %1497 = vmatpush1.msra.mxu0 %v102
    %1498 = vmatprep.subr.mxu0 0.0
    %1499 = vmatpush1.msra.mxu0 %v103
    %1500 = vmatprep.subr.mxu0 0.0
    %1501 = vmatpush1.msra.mxu0 %v104
    %1502 = vmatprep.subr.mxu0 0.0
    %1503 = vmatpush1.msra.mxu0 %v105
    %1504 = vmatprep.subr.mxu0 0.0
    %1505 = vmatpush1.msra.mxu0 %v106
    %1506 = vmatprep.subr.mxu0 0.0
    %1507 = vmatpush1.msra.mxu0 %v107
    %1508 = vmatprep.subr.mxu0 0.0
    %1509 = vmatpush1.msra.mxu0 %v108
    %1510 = vmatprep.subr.mxu0 0.0
    %1511 = vmatpush1.msra.mxu0 %v109
    %1512 = vmatprep.subr.mxu0 0.0
    %1513 = vmatpush1.msra.mxu0 %v110
    %1514 = vmatprep.subr.mxu0 0.0
    %1515 = vmatpush1.msra.mxu0 %v111
    %1516 = vmatprep.subr.mxu0 0.0
    %1517 = vmatpush1.msra.mxu0 %v112
    %1518 = vmatprep.subr.mxu0 0.0
    %1519 = vmatpush1.msra.mxu0 %v113
    %1520 = vmatprep.subr.mxu0 0.0
    %1521 = vmatpush1.msra.mxu0 %v114
    %1522 = vmatprep.subr.mxu0 0.0
    %1523 = vmatpush1.msra.mxu0 %v115
    %1524 = vmatprep.subr.mxu0 0.0
    %1525 = vmatpush1.msra.mxu0 %v116
    %1526 = vmatprep.subr.mxu0 0.0
    %1527 = vmatpush1.msra.mxu0 %v117
    %1528 = vmatprep.subr.mxu0 0.0
    %1529 = vmatpush1.msra.mxu0 %v118
    %1530 = vmatprep.subr.mxu0 0.0
    %1531 = vmatpush1.msra.mxu0 %v119
    %1532 = vmatprep.subr.mxu0 0.0
    %1533 = vmatpush1.msra.mxu0 %v120
    %1534 = vmatprep.subr.mxu0 0.0
    %1535 = vmatpush1.msra.mxu0 %v121
    %1536 = vmatprep.subr.mxu0 0.0
    %1537 = vmatpush1.msra.mxu0 %v122
    %1538 = vmatprep.subr.mxu0 0.0
    %1539 = vmatpush1.msra.mxu0 %v123
    %1540 = vmatprep.subr.mxu0 0.0
    %1541 = vmatpush1.msra.mxu0 %v124
    %1542 = vmatprep.subr.mxu0 0.0
    %1543 = vmatpush1.msra.mxu0 %v125
    %1544 = vmatprep.subr.mxu0 0.0
    %1545 = vmatpush1.msra.mxu0 %v126
    %1546 = vmatprep.subr.mxu0 0.0
    %1547 = vmatpush1.msra.mxu0 %v127
    %1548 = vmatprep.mubr.f32.mxu0 %v1465
    %1549 = vmatmul.mubr.f32.gmra.mrb[0].mxu0 %v1464
    %v1550 = vpop.f32.mrb[0].mxu0
    %v1551 = vadd.f32 0.0, %v1550
    %v1552 = vpop.f32.mrb[0].mxu0
    %1553 = vmatprep.mubr.f32.mxu0 %v1470
    %1554 = vmatmul.mubr.f32.gmra.mrb[0].mxu0 %v1469
    %v1555 = vpop.f32.mrb[0].mxu0
    %v1556 = vadd.f32 0.0, %v1555
    %v1557 = vpop.f32.mrb[0].mxu0
    %1558 = vmatprep.mubr.f32.mxu0 %v1475
    %1559 = vmatmul.mubr.f32.gmra.mrb[0].mxu0 %v1474
    %v1560 = vpop.f32.mrb[0].mxu0
    %v1561 = vadd.f32 0.0, %v1560
    %v1562 = vpop.f32.mrb[0].mxu0
    %1563 = vmatprep.mubr.f32.mxu0 %v1480
    %1564 = vmatmul.mubr.f32.gmra.mrb[0].mxu0 %v1479
    %v1565 = vpop.f32.mrb[0].mxu0
    %v1566 = vadd.f32 0.0, %v1565
    %v1567 = vpop.f32.mrb[0].mxu0
    %1568 = vdwg.mxu0
    %1569 = vmatprep.subr.mxu0 0.0
    %1570 = vmatpush1.msra.mxu0 %v128
    %1571 = vmatprep.subr.mxu0 0.0
    %1572 = vmatpush1.msra.mxu0 %v129
    %1573 = vmatprep.subr.mxu0 0.0
    %1574 = vmatpush1.msra.mxu0 %v130
    %1575 = vmatprep.subr.mxu0 0.0
    %1576 = vmatpush1.msra.mxu0 %v131
    %1577 = vmatprep.subr.mxu0 0.0
    %1578 = vmatpush1.msra.mxu0 %v132
    %1579 = vmatprep.subr.mxu0 0.0
    %1580 = vmatpush1.msra.mxu0 %v133
    %1581 = vmatprep.subr.mxu0 0.0
    %1582 = vmatpush1.msra.mxu0 %v134
    %1583 = vmatprep.subr.mxu0 0.0
    %1584 = vmatpush1.msra.mxu0 %v135
    %1585 = vmatprep.subr.mxu0 0.0
    %1586 = vmatpush1.msra.mxu0 %v136
    %1587 = vmatprep.subr.mxu0 0.0
    %1588 = vmatpush1.msra.mxu0 %v137
    %1589 = vmatprep.subr.mxu0 0.0
    %1590 = vmatpush1.msra.mxu0 %v138
    %1591 = vmatprep.subr.mxu0 0.0
    %1592 = vmatpush1.msra.mxu0 %v139
    %1593 = vmatprep.subr.mxu0 0.0
    %1594 = vmatpush1.msra.mxu0 %v140
    %1595 = vmatprep.subr.mxu0 0.0
    %1596 = vmatpush1.msra.mxu0 %v141
    %1597 = vmatprep.subr.mxu0 0.0
    %1598 = vmatpush1.msra.mxu0 %v142
    %1599 = vmatprep.subr.mxu0 0.0
    %1600 = vmatpush1.msra.mxu0 %v143
    %1601 = vmatprep.subr.mxu0 0.0
    %1602 = vmatpush1.msra.mxu0 %v144
    %1603 = vmatprep.subr.mxu0 0.0
    %1604 = vmatpush1.msra.mxu0 %v145
    %1605 = vmatprep.subr.mxu0 0.0
    %1606 = vmatpush1.msra.mxu0 %v146
    %1607 = vmatprep.subr.mxu0 0.0
    %1608 = vmatpush1.msra.mxu0 %v147
    %1609 = vmatprep.subr.mxu0 0.0
    %1610 = vmatpush1.msra.mxu0 %v148
    %1611 = vmatprep.subr.mxu0 0.0
    %1612 = vmatpush1.msra.mxu0 %v149
    %1613 = vmatprep.subr.mxu0 0.0
    %1614 = vmatpush1.msra.mxu0 %v150
    %1615 = vmatprep.subr.mxu0 0.0
    %1616 = vmatpush1.msra.mxu0 %v151
    %1617 = vmatprep.subr.mxu0 0.0
    %1618 = vmatpush1.msra.mxu0 %v152
    %1619 = vmatprep.subr.mxu0 0.0
    %1620 = vmatpush1.msra.mxu0 %v153
    %1621 = vmatprep.subr.mxu0 0.0
    %1622 = vmatpush1.msra.mxu0 %v154
    %1623 = vmatprep.subr.mxu0 0.0
    %1624 = vmatpush1.msra.mxu0 %v155
    %1625 = vmatprep.subr.mxu0 0.0
    %1626 = vmatpush1.msra.mxu0 %v156
    %1627 = vmatprep.subr.mxu0 0.0
    %1628 = vmatpush1.msra.mxu0 %v157
    %1629 = vmatprep.subr.mxu0 0.0
    %1630 = vmatpush1.msra.mxu0 %v158
    %1631 = vmatprep.subr.mxu0 0.0
    %1632 = vmatpush1.msra.mxu0 %v159
    %1633 = vmatprep.mubr.f32.mxu0 %v1467
    %1634 = vmatmul.mubr.f32.gmra.mrb[0].mxu0 %v1466
    %v1635 = vpop.f32.mrb[0].mxu0
    %v1636 = vadd.f32 %v1551, %v1635
    %v1637 = vpop.f32.mrb[0].mxu0
    %1638 = vmatprep.mubr.f32.mxu0 %v1472
    %1639 = vmatmul.mubr.f32.gmra.mrb[0].mxu0 %v1471
    %v1640 = vpop.f32.mrb[0].mxu0
    %v1641 = vadd.f32 %v1556, %v1640
    %v1642 = vpop.f32.mrb[0].mxu0
    %1643 = vmatprep.mubr.f32.mxu0 %v1477
    %1644 = vmatmul.mubr.f32.gmra.mrb[0].mxu0 %v1476
    %v1645 = vpop.f32.mrb[0].mxu0
    %v1646 = vadd.f32 %v1561, %v1645
    %v1647 = vpop.f32.mrb[0].mxu0
    %1648 = vmatprep.mubr.f32.mxu0 %v1482
    %1649 = vmatmul.mubr.f32.gmra.mrb[0].mxu0 %v1481
    %v1650 = vpop.f32.mrb[0].mxu0
    %v1651 = vadd.f32 %v1566, %v1650
    %v1652 = vpop.f32.mrb[0].mxu0
    %1653 = vdwg.mxu0
    %1654 = vmatprep.subr.mxu0 0.0
    %1655 = vmatpush1.msra.mxu0 %v160
    %1656 = vmatprep.subr.mxu0 0.0
    %1657 = vmatpush1.msra.mxu0 %v161
    %1658 = vmatprep.subr.mxu0 0.0
    %1659 = vmatpush1.msra.mxu0 %v162
    %1660 = vmatprep.subr.mxu0 0.0
    %1661 = vmatpush1.msra.mxu0 %v163
    %1662 = vmatprep.subr.mxu0 0.0
    %1663 = vmatpush1.msra.mxu0 %v164
    %1664 = vmatprep.subr.mxu0 0.0
    %1665 = vmatpush1.msra.mxu0 %v165
    %1666 = vmatprep.subr.mxu0 0.0
    %1667 = vmatpush1.msra.mxu0 %v166
    %1668 = vmatprep.subr.mxu0 0.0
    %1669 = vmatpush1.msra.mxu0 %v167
    %1670 = vmatprep.subr.mxu0 0.0
    %1671 = vmatpush1.msra.mxu0 %v168
    %1672 = vmatprep.subr.mxu0 0.0
    %1673 = vmatpush1.msra.mxu0 %v169
    %1674 = vmatprep.subr.mxu0 0.0
    %1675 = vmatpush1.msra.mxu0 %v170
    %1676 = vmatprep.subr.mxu0 0.0
    %1677 = vmatpush1.msra.mxu0 %v171
    %1678 = vmatprep.subr.mxu0 0.0
    %1679 = vmatpush1.msra.mxu0 %v172
    %1680 = vmatprep.subr.mxu0 0.0
    %1681 = vmatpush1.msra.mxu0 %v173
    %1682 = vmatprep.subr.mxu0 0.0
    %1683 = vmatpush1.msra.mxu0 %v174
    %1684 = vmatprep.subr.mxu0 0.0
    %1685 = vmatpush1.msra.mxu0 %v175
    %1686 = vmatprep.subr.mxu0 0.0
    %1687 = vmatpush1.msra.mxu0 0.0
    %1688 = vmatprep.subr.mxu0 0.0
    %1689 = vmatpush1.msra.mxu0 0.0
    %1690 = vmatprep.subr.mxu0 0.0
    %1691 = vmatpush1.msra.mxu0 0.0
    %1692 = vmatprep.subr.mxu0 0.0
    %1693 = vmatpush1.msra.mxu0 0.0
    %1694 = vmatprep.subr.mxu0 0.0
    %1695 = vmatpush1.msra.mxu0 0.0
    %1696 = vmatprep.subr.mxu0 0.0
    %1697 = vmatpush1.msra.mxu0 0.0
    %1698 = vmatprep.subr.mxu0 0.0
    %1699 = vmatpush1.msra.mxu0 0.0
    %1700 = vmatprep.subr.mxu0 0.0
    %1701 = vmatpush1.msra.mxu0 0.0
    %1702 = vmatprep.subr.mxu0 0.0
    %1703 = vmatpush1.msra.mxu0 0.0
    %1704 = vmatprep.subr.mxu0 0.0
    %1705 = vmatpush1.msra.mxu0 0.0
    %1706 = vmatprep.subr.mxu0 0.0
    %1707 = vmatpush1.msra.mxu0 0.0
    %1708 = vmatprep.subr.mxu0 0.0
    %1709 = vmatpush1.msra.mxu0 0.0
    %1710 = vmatprep.subr.mxu0 0.0
    %1711 = vmatpush1.msra.mxu0 0.0
    %1712 = vmatprep.subr.mxu0 0.0
    %1713 = vmatpush1.msra.mxu0 0.0
    %1714 = vmatprep.subr.mxu0 0.0
    %1715 = vmatpush1.msra.mxu0 0.0
    %1716 = vmatprep.subr.mxu0 0.0
    %1717 = vmatpush1.msra.mxu0 0.0
    %1718 = vmatprep.mubr.f32.mxu0 0.0
    %1719 = vmatmul.mubr.f32.gmra.mrb[0].mxu0 %v1468
    %v1720 = vpop.f32.mrb[0].mxu0
    %v1721 = vadd.f32 %v1636, %v1720
    %v1722 = vpop.f32.mrb[0].mxu0
    %1723 = vmatprep.mubr.f32.mxu0 0.0
    %1724 = vmatmul.mubr.f32.gmra.mrb[0].mxu0 %v1473
    %v1725 = vpop.f32.mrb[0].mxu0
    %v1726 = vadd.f32 %v1641, %v1725
    %v1727 = vpop.f32.mrb[0].mxu0
    %1728 = vmatprep.mubr.f32.mxu0 0.0
    %1729 = vmatmul.mubr.f32.gmra.mrb[0].mxu0 %v1478
    %v1730 = vpop.f32.mrb[0].mxu0
    %v1731 = vadd.f32 %v1646, %v1730
    %v1732 = vpop.f32.mrb[0].mxu0
    %1733 = vmatprep.mubr.f32.mxu0 0.0
    %1734 = vmatmul.mubr.f32.gmra.mrb[0].mxu0 %v1483
    %v1735 = vpop.f32.mrb[0].mxu0
    %v1736 = vadd.f32 %v1651, %v1735
    %v1737 = vpop.f32.mrb[0].mxu0
    %1738 = vdwg.mxu0
    %v1739 = vld [vmem:[%s9] sm:$0xff]
    %v1740 = vld [vmem:[%s9 + $0x8] sm:$0xff]
    %v1741 = vld [vmem:[%s9 + $0x10] sm:$0xff]
    %v1742 = vld [vmem:[%s9 + $0x18] sm:$0xff]
    %v1744 = vsel %vm769, %v1739, 0
    %v1747 = vsel %vm769, %v1740, 0
    %v1750 = vsel %vm769, %v1741, 0
    %v1753 = vsel %vm769, %v1742, 0
    %1755 = vmatprep.subr.mxu0 0.0
    %1756 = vmatpush1.msra.mxu0 %v1721
    %1757 = vmatprep.subr.mxu0 0.0
    %1758 = vmatpush1.msra.mxu0 %v1726
    %1759 = vmatprep.subr.mxu0 0.0
    %1760 = vmatpush1.msra.mxu0 %v1731
    %1761 = vmatprep.subr.mxu0 0.0
    %1762 = vmatpush1.msra.mxu0 %v1736
    %1763 = vmatprep.subr.mxu0 0.0
    %1764 = vmatpush1.msra.mxu0 0.0
    %1765 = vmatprep.subr.mxu0 0.0
    %1766 = vmatpush1.msra.mxu0 0.0
    %1767 = vmatprep.subr.mxu0 0.0
    %1768 = vmatpush1.msra.mxu0 0.0
    %1769 = vmatprep.subr.mxu0 0.0
    %1770 = vmatpush1.msra.mxu0 0.0
    %1771 = vmatprep.subr.mxu0 0.0
    %1772 = vmatpush1.msra.mxu0 0.0
    %1773 = vmatprep.subr.mxu0 0.0
    %1774 = vmatpush1.msra.mxu0 0.0
    %1775 = vmatprep.subr.mxu0 0.0
    %1776 = vmatpush1.msra.mxu0 0.0
    %1777 = vmatprep.subr.mxu0 0.0
    %1778 = vmatpush1.msra.mxu0 0.0
    %1779 = vmatprep.subr.mxu0 0.0
    %1780 = vmatpush1.msra.mxu0 0.0
    %1781 = vmatprep.subr.mxu0 0.0
    %1782 = vmatpush1.msra.mxu0 0.0
    %1783 = vmatprep.subr.mxu0 0.0
    %1784 = vmatpush1.msra.mxu0 0.0
    %1785 = vmatprep.subr.mxu0 0.0
    %1786 = vmatpush1.msra.mxu0 0.0
    %1787 = vmatprep.subr.mxu0 0.0
    %1788 = vmatpush1.msra.mxu0 0.0
    %1789 = vmatprep.subr.mxu0 0.0
    %1790 = vmatpush1.msra.mxu0 0.0
    %1791 = vmatprep.subr.mxu0 0.0
    %1792 = vmatpush1.msra.mxu0 0.0
    %1793 = vmatprep.subr.mxu0 0.0
    %1794 = vmatpush1.msra.mxu0 0.0
    %1795 = vmatprep.subr.mxu0 0.0
    %1796 = vmatpush1.msra.mxu0 0.0
    %1797 = vmatprep.subr.mxu0 0.0
    %1798 = vmatpush1.msra.mxu0 0.0
    %1799 = vmatprep.subr.mxu0 0.0
    %1800 = vmatpush1.msra.mxu0 0.0
    %1801 = vmatprep.subr.mxu0 0.0
    %1802 = vmatpush1.msra.mxu0 0.0
    %1803 = vmatprep.subr.mxu0 0.0
    %1804 = vmatpush1.msra.mxu0 0.0
    %1805 = vmatprep.subr.mxu0 0.0
    %1806 = vmatpush1.msra.mxu0 0.0
    %1807 = vmatprep.subr.mxu0 0.0
    %1808 = vmatpush1.msra.mxu0 0.0
    %1809 = vmatprep.subr.mxu0 0.0
    %1810 = vmatpush1.msra.mxu0 0.0
    %1811 = vmatprep.subr.mxu0 0.0
    %1812 = vmatpush1.msra.mxu0 0.0
    %1813 = vmatprep.subr.mxu0 0.0
    %1814 = vmatpush1.msra.mxu0 0.0
    %1815 = vmatprep.subr.mxu0 0.0
    %1816 = vmatpush1.msra.mxu0 0.0
    %1817 = vmatprep.subr.mxu0 0.0
    %1818 = vmatpush1.msra.mxu0 0.0
    %1819 = vmatprep.mubr.f32.mxu0 0.0
    %1820 = vmatmul.mubr.f32.gmra.mrb[0].mxu0 %v1744
    %v1821 = vpop.f32.mrb[0].mxu0
    %v1822 = vadd.f32 0.0, %v1821
    %v1823 = vpop.f32.mrb[0].mxu0
    %1824 = vmatprep.mubr.f32.mxu0 0.0
    %1825 = vmatmul.mubr.f32.gmra.mrb[0].mxu0 %v1747
    %v1826 = vpop.f32.mrb[0].mxu0
    %v1827 = vadd.f32 0.0, %v1826
    %v1828 = vpop.f32.mrb[0].mxu0
    %1829 = vmatprep.mubr.f32.mxu0 0.0
    %1830 = vmatmul.mubr.f32.gmra.mrb[0].mxu0 %v1750
    %v1831 = vpop.f32.mrb[0].mxu0
    %v1832 = vadd.f32 0.0, %v1831
    %v1833 = vpop.f32.mrb[0].mxu0
    %1834 = vmatprep.mubr.f32.mxu0 0.0
    %1835 = vmatmul.mubr.f32.gmra.mrb[0].mxu0 %v1753
    %v1836 = vpop.f32.mrb[0].mxu0
    %v1837 = vadd.f32 0.0, %v1836
    %v1838 = vpop.f32.mrb[0].mxu0
    %1839 = vdwg.mxu0
    %v1840 = vld [vmem:[%s8] sm:$0xff]
    %v1841 = vld [vmem:[%s8 + $0x8] sm:$0xff]
    %v1842 = vld [vmem:[%s8 + $0x10] sm:$0xff]
    %v1843 = vld [vmem:[%s8 + $0x18] sm:$0xff]
    %v1845 = vsel %vm180, %v1822, 0
    %v1848 = vsel %vm180, %v1827, 0
    %v1851 = vsel %vm180, %v1832, 0
    %v1854 = vsel %vm180, %v1837, 0
    %1856 = vmatprep.subr.mxu0 %v82
    %1857 = vmatpush1.msra.mxu0 %v81
    %1858 = vmatprep.subr.mxu0 %v87
    %1859 = vmatpush1.msra.mxu0 %v86
    %1860 = vmatprep.subr.mxu0 %v198
    %1861 = vmatpush1.msra.mxu0 %v195
    %1862 = vmatprep.subr.mxu0 0.0
    %1863 = vmatpush1.msra.mxu0 0.0
    %1864 = vmatprep.subr.mxu0 0.0
    %1865 = vmatpush1.msra.mxu0 0.0
    %1866 = vmatprep.subr.mxu0 0.0
    %1867 = vmatpush1.msra.mxu0 0.0
    %1868 = vmatprep.subr.mxu0 0.0
    %1869 = vmatpush1.msra.mxu0 0.0
    %1870 = vmatprep.subr.mxu0 0.0
    %1871 = vmatpush1.msra.mxu0 0.0
    %1872 = vmatprep.subr.mxu0 0.0
    %1873 = vmatpush1.msra.mxu0 0.0
    %1874 = vmatprep.subr.mxu0 0.0
    %1875 = vmatpush1.msra.mxu0 0.0
    %1876 = vmatprep.subr.mxu0 0.0
    %1877 = vmatpush1.msra.mxu0 0.0
    %1878 = vmatprep.subr.mxu0 0.0
    %1879 = vmatpush1.msra.mxu0 0.0
    %1880 = vmatprep.subr.mxu0 0.0
    %1881 = vmatpush1.msra.mxu0 0.0
    %1882 = vmatprep.subr.mxu0 0.0
    %1883 = vmatpush1.msra.mxu0 0.0
    %1884 = vmatprep.subr.mxu0 0.0
    %1885 = vmatpush1.msra.mxu0 0.0
    %1886 = vmatprep.subr.mxu0 0.0
    %1887 = vmatpush1.msra.mxu0 0.0
    %1888 = vmatprep.subr.mxu0 0.0
    %1889 = vmatpush1.msra.mxu0 0.0
    %1890 = vmatprep.subr.mxu0 0.0
    %1891 = vmatpush1.msra.mxu0 0.0
    %1892 = vmatprep.subr.mxu0 0.0
    %1893 = vmatpush1.msra.mxu0 0.0
    %1894 = vmatprep.subr.mxu0 0.0
    %1895 = vmatpush1.msra.mxu0 0.0
    %1896 = vmatprep.subr.mxu0 0.0
    %1897 = vmatpush1.msra.mxu0 0.0
    %1898 = vmatprep.subr.mxu0 0.0
    %1899 = vmatpush1.msra.mxu0 0.0
    %1900 = vmatprep.subr.mxu0 0.0
    %1901 = vmatpush1.msra.mxu0 0.0
    %1902 = vmatprep.subr.mxu0 0.0
    %1903 = vmatpush1.msra.mxu0 0.0
    %1904 = vmatprep.subr.mxu0 0.0
    %1905 = vmatpush1.msra.mxu0 0.0
    %1906 = vmatprep.subr.mxu0 0.0
    %1907 = vmatpush1.msra.mxu0 0.0
    %1908 = vmatprep.subr.mxu0 0.0
    %1909 = vmatpush1.msra.mxu0 0.0
    %1910 = vmatprep.subr.mxu0 0.0
    %1911 = vmatpush1.msra.mxu0 0.0
    %1912 = vmatprep.subr.mxu0 0.0
    %1913 = vmatpush1.msra.mxu0 0.0
    %1914 = vmatprep.subr.mxu0 0.0
    %1915 = vmatpush1.msra.mxu0 0.0
    %1916 = vmatprep.subr.mxu0 0.0
    %1917 = vmatpush1.msra.mxu0 0.0
    %1918 = vmatprep.subr.mxu0 0.0
    %1919 = vmatpush1.msra.mxu0 0.0
    %1920 = vmatprep.mubr.f32.mxu0 0.0
    %1921 = vmatmul.mubr.f32.gmra.mrb[0].mxu0 %v1845
    %v1922 = vpop.f32.mrb[0].mxu0
    %v1923 = vadd.f32 0.0, %v1922
    %v1924 = vpop.f32.mrb[0].mxu0
    %v1925 = vadd.f32 0.0, %v1924
    %1926 = vmatprep.mubr.f32.mxu0 0.0
    %1927 = vmatmul.mubr.f32.gmra.mrb[0].mxu0 %v1848
    %v1928 = vpop.f32.mrb[0].mxu0
    %v1929 = vadd.f32 0.0, %v1928
    %v1930 = vpop.f32.mrb[0].mxu0
    %v1931 = vadd.f32 0.0, %v1930
    %1932 = vmatprep.mubr.f32.mxu0 0.0
    %1933 = vmatmul.mubr.f32.gmra.mrb[0].mxu0 %v1851
    %v1934 = vpop.f32.mrb[0].mxu0
    %v1935 = vadd.f32 0.0, %v1934
    %v1936 = vpop.f32.mrb[0].mxu0
    %v1937 = vadd.f32 0.0, %v1936
    %1938 = vmatprep.mubr.f32.mxu0 0.0
    %1939 = vmatmul.mubr.f32.gmra.mrb[0].mxu0 %v1854
    %v1940 = vpop.f32.mrb[0].mxu0
    %v1941 = vadd.f32 0.0, %v1940
    %v1942 = vpop.f32.mrb[0].mxu0
    %v1943 = vadd.f32 0.0, %v1942
    %1944 = vdwg.mxu0
    %1945 = vmatprep.subr.mxu0 %v84
    %1946 = vmatpush1.msra.mxu0 %v83
    %1947 = vmatprep.subr.mxu0 %v89
    %1948 = vmatpush1.msra.mxu0 %v88
    %1949 = vmatprep.subr.mxu0 %v204
    %1950 = vmatpush1.msra.mxu0 %v201
    %1951 = vmatprep.subr.mxu0 0.0
    %1952 = vmatpush1.msra.mxu0 0.0
    %1953 = vmatprep.subr.mxu0 0.0
    %1954 = vmatpush1.msra.mxu0 0.0
    %1955 = vmatprep.subr.mxu0 0.0
    %1956 = vmatpush1.msra.mxu0 0.0
    %1957 = vmatprep.subr.mxu0 0.0
    %1958 = vmatpush1.msra.mxu0 0.0
    %1959 = vmatprep.subr.mxu0 0.0
    %1960 = vmatpush1.msra.mxu0 0.0
    %1961 = vmatprep.subr.mxu0 0.0
    %1962 = vmatpush1.msra.mxu0 0.0
    %1963 = vmatprep.subr.mxu0 0.0
    %1964 = vmatpush1.msra.mxu0 0.0
    %1965 = vmatprep.subr.mxu0 0.0
    %1966 = vmatpush1.msra.mxu0 0.0
    %1967 = vmatprep.subr.mxu0 0.0
    %1968 = vmatpush1.msra.mxu0 0.0
    %1969 = vmatprep.subr.mxu0 0.0
    %1970 = vmatpush1.msra.mxu0 0.0
    %1971 = vmatprep.subr.mxu0 0.0
    %1972 = vmatpush1.msra.mxu0 0.0
    %1973 = vmatprep.subr.mxu0 0.0
    %1974 = vmatpush1.msra.mxu0 0.0
    %1975 = vmatprep.subr.mxu0 0.0
    %1976 = vmatpush1.msra.mxu0 0.0
    %1977 = vmatprep.subr.mxu0 0.0
    %1978 = vmatpush1.msra.mxu0 0.0
    %1979 = vmatprep.subr.mxu0 0.0
    %1980 = vmatpush1.msra.mxu0 0.0
    %1981 = vmatprep.subr.mxu0 0.0
    %1982 = vmatpush1.msra.mxu0 0.0
    %1983 = vmatprep.subr.mxu0 0.0
    %1984 = vmatpush1.msra.mxu0 0.0
    %1985 = vmatprep.subr.mxu0 0.0
    %1986 = vmatpush1.msra.mxu0 0.0
    %1987 = vmatprep.subr.mxu0 0.0
    %1988 = vmatpush1.msra.mxu0 0.0
    %1989 = vmatprep.subr.mxu0 0.0
    %1990 = vmatpush1.msra.mxu0 0.0
    %1991 = vmatprep.subr.mxu0 0.0
    %1992 = vmatpush1.msra.mxu0 0.0
    %1993 = vmatprep.subr.mxu0 0.0
    %1994 = vmatpush1.msra.mxu0 0.0
    %1995 = vmatprep.subr.mxu0 0.0
    %1996 = vmatpush1.msra.mxu0 0.0
    %1997 = vmatprep.subr.mxu0 0.0
    %1998 = vmatpush1.msra.mxu0 0.0
    %1999 = vmatprep.subr.mxu0 0.0
    %2000 = vmatpush1.msra.mxu0 0.0
    %2001 = vmatprep.subr.mxu0 0.0
    %2002 = vmatpush1.msra.mxu0 0.0
    %2003 = vmatprep.subr.mxu0 0.0
    %2004 = vmatpush1.msra.mxu0 0.0
    %2005 = vmatprep.subr.mxu0 0.0
    %2006 = vmatpush1.msra.mxu0 0.0
    %2007 = vmatprep.subr.mxu0 0.0
    %2008 = vmatpush1.msra.mxu0 0.0
    %2009 = vmatprep.mubr.f32.mxu0 0.0
    %2010 = vmatmul.mubr.f32.gmra.mrb[0].mxu0 %v1845
    %v2011 = vpop.f32.mrb[0].mxu0
    %v2012 = vadd.f32 0.0, %v2011
    %v2013 = vpop.f32.mrb[0].mxu0
    %v2014 = vadd.f32 0.0, %v2013
    %2015 = vmatprep.mubr.f32.mxu0 0.0
    %2016 = vmatmul.mubr.f32.gmra.mrb[0].mxu0 %v1848
    %v2017 = vpop.f32.mrb[0].mxu0
    %v2018 = vadd.f32 0.0, %v2017
    %v2019 = vpop.f32.mrb[0].mxu0
    %v2020 = vadd.f32 0.0, %v2019
    %2021 = vmatprep.mubr.f32.mxu0 0.0
    %2022 = vmatmul.mubr.f32.gmra.mrb[0].mxu0 %v1851
    %v2023 = vpop.f32.mrb[0].mxu0
    %v2024 = vadd.f32 0.0, %v2023
    %v2025 = vpop.f32.mrb[0].mxu0
    %v2026 = vadd.f32 0.0, %v2025
    %2027 = vmatprep.mubr.f32.mxu0 0.0
    %2028 = vmatmul.mubr.f32.gmra.mrb[0].mxu0 %v1854
    %v2029 = vpop.f32.mrb[0].mxu0
    %v2030 = vadd.f32 0.0, %v2029
    %v2031 = vpop.f32.mrb[0].mxu0
    %v2032 = vadd.f32 0.0, %v2031
    %2033 = vdwg.mxu0
    %2034 = vmatprep.subr.mxu0 0.0
    %2035 = vmatpush1.msra.mxu0 %v85
    %2036 = vmatprep.subr.mxu0 0.0
    %2037 = vmatpush1.msra.mxu0 %v90
    %2038 = vmatprep.subr.mxu0 0.0
    %2039 = vmatpush1.msra.mxu0 %v207
    %2040 = vmatprep.subr.mxu0 0.0
    %2041 = vmatpush1.msra.mxu0 0.0
    %2042 = vmatprep.subr.mxu0 0.0
    %2043 = vmatpush1.msra.mxu0 0.0
    %2044 = vmatprep.subr.mxu0 0.0
    %2045 = vmatpush1.msra.mxu0 0.0
    %2046 = vmatprep.subr.mxu0 0.0
    %2047 = vmatpush1.msra.mxu0 0.0
    %2048 = vmatprep.subr.mxu0 0.0
    %2049 = vmatpush1.msra.mxu0 0.0
    %2050 = vmatprep.subr.mxu0 0.0
    %2051 = vmatpush1.msra.mxu0 0.0
    %2052 = vmatprep.subr.mxu0 0.0
    %2053 = vmatpush1.msra.mxu0 0.0
    %2054 = vmatprep.subr.mxu0 0.0
    %2055 = vmatpush1.msra.mxu0 0.0
    %2056 = vmatprep.subr.mxu0 0.0
    %2057 = vmatpush1.msra.mxu0 0.0
    %2058 = vmatprep.subr.mxu0 0.0
    %2059 = vmatpush1.msra.mxu0 0.0
    %2060 = vmatprep.subr.mxu0 0.0
    %2061 = vmatpush1.msra.mxu0 0.0
    %2062 = vmatprep.subr.mxu0 0.0
    %2063 = vmatpush1.msra.mxu0 0.0
    %2064 = vmatprep.subr.mxu0 0.0
    %2065 = vmatpush1.msra.mxu0 0.0
    %2066 = vmatprep.subr.mxu0 0.0
    %2067 = vmatpush1.msra.mxu0 0.0
    %2068 = vmatprep.subr.mxu0 0.0
    %2069 = vmatpush1.msra.mxu0 0.0
    %2070 = vmatprep.subr.mxu0 0.0
    %2071 = vmatpush1.msra.mxu0 0.0
    %2072 = vmatprep.subr.mxu0 0.0
    %2073 = vmatpush1.msra.mxu0 0.0
    %2074 = vmatprep.subr.mxu0 0.0
    %2075 = vmatpush1.msra.mxu0 0.0
    %2076 = vmatprep.subr.mxu0 0.0
    %2077 = vmatpush1.msra.mxu0 0.0
    %2078 = vmatprep.subr.mxu0 0.0
    %2079 = vmatpush1.msra.mxu0 0.0
    %2080 = vmatprep.subr.mxu0 0.0
    %2081 = vmatpush1.msra.mxu0 0.0
    %2082 = vmatprep.subr.mxu0 0.0
    %2083 = vmatpush1.msra.mxu0 0.0
    %2084 = vmatprep.subr.mxu0 0.0
    %2085 = vmatpush1.msra.mxu0 0.0
    %2086 = vmatprep.subr.mxu0 0.0
    %2087 = vmatpush1.msra.mxu0 0.0
    %2088 = vmatprep.subr.mxu0 0.0
    %2089 = vmatpush1.msra.mxu0 0.0
    %2090 = vmatprep.subr.mxu0 0.0
    %2091 = vmatpush1.msra.mxu0 0.0
    %2092 = vmatprep.subr.mxu0 0.0
    %2093 = vmatpush1.msra.mxu0 0.0
    %2094 = vmatprep.subr.mxu0 0.0
    %2095 = vmatpush1.msra.mxu0 0.0
    %2096 = vmatprep.subr.mxu0 0.0
    %2097 = vmatpush1.msra.mxu0 0.0
    %2098 = vmatprep.mubr.f32.mxu0 0.0
    %2099 = vmatmul.mubr.f32.gmra.mrb[0].mxu0 %v1845
    %v2100 = vpop.f32.mrb[0].mxu0
    %v2101 = vadd.f32 0.0, %v2100
    %v2102 = vpop.f32.mrb[0].mxu0
    %2103 = vmatprep.mubr.f32.mxu0 0.0
    %2104 = vmatmul.mubr.f32.gmra.mrb[0].mxu0 %v1848
    %v2105 = vpop.f32.mrb[0].mxu0
    %v2106 = vadd.f32 0.0, %v2105
    %v2107 = vpop.f32.mrb[0].mxu0
    %2108 = vmatprep.mubr.f32.mxu0 0.0
    %2109 = vmatmul.mubr.f32.gmra.mrb[0].mxu0 %v1851
    %v2110 = vpop.f32.mrb[0].mxu0
    %v2111 = vadd.f32 0.0, %v2110
    %v2112 = vpop.f32.mrb[0].mxu0
    %2113 = vmatprep.mubr.f32.mxu0 0.0
    %2114 = vmatmul.mubr.f32.gmra.mrb[0].mxu0 %v1854
    %v2115 = vpop.f32.mrb[0].mxu0
    %v2116 = vadd.f32 0.0, %v2115
    %v2117 = vpop.f32.mrb[0].mxu0
    %2118 = vdwg.mxu0
    %v2120 = vsel %vm769, %v1840, 0
    %v2123 = vsel %vm769, %v1841, 0
    %v2126 = vsel %vm769, %v1842, 0
    %v2129 = vsel %vm769, %v1843, 0
    %2131 = vmatprep.subr.mxu0 %v37
    %2132 = vmatpush1.msra.mxu0 %v36
    %2133 = vmatprep.subr.mxu0 %v42
    %2134 = vmatpush1.msra.mxu0 %v41
    %2135 = vmatprep.subr.mxu0 %v47
    %2136 = vmatpush1.msra.mxu0 %v46
    %2137 = vmatprep.subr.mxu0 %v52
    %2138 = vmatpush1.msra.mxu0 %v51
    %2139 = vmatprep.subr.mxu0 0.0
    %2140 = vmatpush1.msra.mxu0 0.0
    %2141 = vmatprep.subr.mxu0 0.0
    %2142 = vmatpush1.msra.mxu0 0.0
    %2143 = vmatprep.subr.mxu0 0.0
    %2144 = vmatpush1.msra.mxu0 0.0
    %2145 = vmatprep.subr.mxu0 0.0
    %2146 = vmatpush1.msra.mxu0 0.0
    %2147 = vmatprep.subr.mxu0 0.0
    %2148 = vmatpush1.msra.mxu0 0.0
    %2149 = vmatprep.subr.mxu0 0.0
    %2150 = vmatpush1.msra.mxu0 0.0
    %2151 = vmatprep.subr.mxu0 0.0
    %2152 = vmatpush1.msra.mxu0 0.0
    %2153 = vmatprep.subr.mxu0 0.0
    %2154 = vmatpush1.msra.mxu0 0.0
    %2155 = vmatprep.subr.mxu0 0.0
    %2156 = vmatpush1.msra.mxu0 0.0
    %2157 = vmatprep.subr.mxu0 0.0
    %2158 = vmatpush1.msra.mxu0 0.0
    %2159 = vmatprep.subr.mxu0 0.0
    %2160 = vmatpush1.msra.mxu0 0.0
    %2161 = vmatprep.subr.mxu0 0.0
    %2162 = vmatpush1.msra.mxu0 0.0
    %2163 = vmatprep.subr.mxu0 0.0
    %2164 = vmatpush1.msra.mxu0 0.0
    %2165 = vmatprep.subr.mxu0 0.0
    %2166 = vmatpush1.msra.mxu0 0.0
    %2167 = vmatprep.subr.mxu0 0.0
    %2168 = vmatpush1.msra.mxu0 0.0
    %2169 = vmatprep.subr.mxu0 0.0
    %2170 = vmatpush1.msra.mxu0 0.0
    %2171 = vmatprep.subr.mxu0 0.0
    %2172 = vmatpush1.msra.mxu0 0.0
    %2173 = vmatprep.subr.mxu0 0.0
    %2174 = vmatpush1.msra.mxu0 0.0
    %2175 = vmatprep.subr.mxu0 0.0
    %2176 = vmatpush1.msra.mxu0 0.0
    %2177 = vmatprep.subr.mxu0 0.0
    %2178 = vmatpush1.msra.mxu0 0.0
    %2179 = vmatprep.subr.mxu0 0.0
    %2180 = vmatpush1.msra.mxu0 0.0
    %2181 = vmatprep.subr.mxu0 0.0
    %2182 = vmatpush1.msra.mxu0 0.0
    %2183 = vmatprep.subr.mxu0 0.0
    %2184 = vmatpush1.msra.mxu0 0.0
    %2185 = vmatprep.subr.mxu0 0.0
    %2186 = vmatpush1.msra.mxu0 0.0
    %2187 = vmatprep.subr.mxu0 0.0
    %2188 = vmatpush1.msra.mxu0 0.0
    %2189 = vmatprep.subr.mxu0 0.0
    %2190 = vmatpush1.msra.mxu0 0.0
    %2191 = vmatprep.subr.mxu0 0.0
    %2192 = vmatpush1.msra.mxu0 0.0
    %2193 = vmatprep.subr.mxu0 0.0
    %2194 = vmatpush1.msra.mxu0 0.0
    %2195 = vmatprep.mubr.f32.mxu0 0.0
    %2196 = vmatmul.mubr.f32.gmra.mrb[0].mxu0 %v2120
    %v2197 = vpop.f32.mrb[0].mxu0
    %v2198 = vadd.f32 %v1923, %v2197
    %v2199 = vpop.f32.mrb[0].mxu0
    %v2200 = vadd.f32 %v1925, %v2199
    %2201 = vmatprep.mubr.f32.mxu0 0.0
    %2202 = vmatmul.mubr.f32.gmra.mrb[0].mxu0 %v2123
    %v2203 = vpop.f32.mrb[0].mxu0
    %v2204 = vadd.f32 %v1929, %v2203
    %v2205 = vpop.f32.mrb[0].mxu0
    %v2206 = vadd.f32 %v1931, %v2205
    %2207 = vmatprep.mubr.f32.mxu0 0.0
    %2208 = vmatmul.mubr.f32.gmra.mrb[0].mxu0 %v2126
    %v2209 = vpop.f32.mrb[0].mxu0
    %v2210 = vadd.f32 %v1935, %v2209
    %v2211 = vpop.f32.mrb[0].mxu0
    %v2212 = vadd.f32 %v1937, %v2211
    %2213 = vmatprep.mubr.f32.mxu0 0.0
    %2214 = vmatmul.mubr.f32.gmra.mrb[0].mxu0 %v2129
    %v2215 = vpop.f32.mrb[0].mxu0
    %v2216 = vadd.f32 %v1941, %v2215
    %v2217 = vpop.f32.mrb[0].mxu0
    %v2218 = vadd.f32 %v1943, %v2217
    %2219 = vdwg.mxu0
    %2220 = vmatprep.subr.mxu0 %v39
    %2221 = vmatpush1.msra.mxu0 %v38
    %2222 = vmatprep.subr.mxu0 %v44
    %2223 = vmatpush1.msra.mxu0 %v43
    %2224 = vmatprep.subr.mxu0 %v49
    %2225 = vmatpush1.msra.mxu0 %v48
    %2226 = vmatprep.subr.mxu0 %v54
    %2227 = vmatpush1.msra.mxu0 %v53
    %2228 = vmatprep.subr.mxu0 0.0
    %2229 = vmatpush1.msra.mxu0 0.0
    %2230 = vmatprep.subr.mxu0 0.0
    %2231 = vmatpush1.msra.mxu0 0.0
    %2232 = vmatprep.subr.mxu0 0.0
    %2233 = vmatpush1.msra.mxu0 0.0
    %2234 = vmatprep.subr.mxu0 0.0
    %2235 = vmatpush1.msra.mxu0 0.0
    %2236 = vmatprep.subr.mxu0 0.0
    %2237 = vmatpush1.msra.mxu0 0.0
    %2238 = vmatprep.subr.mxu0 0.0
    %2239 = vmatpush1.msra.mxu0 0.0
    %2240 = vmatprep.subr.mxu0 0.0
    %2241 = vmatpush1.msra.mxu0 0.0
    %2242 = vmatprep.subr.mxu0 0.0
    %2243 = vmatpush1.msra.mxu0 0.0
    %2244 = vmatprep.subr.mxu0 0.0
    %2245 = vmatpush1.msra.mxu0 0.0
    %2246 = vmatprep.subr.mxu0 0.0
    %2247 = vmatpush1.msra.mxu0 0.0
    %2248 = vmatprep.subr.mxu0 0.0
    %2249 = vmatpush1.msra.mxu0 0.0
    %2250 = vmatprep.subr.mxu0 0.0
    %2251 = vmatpush1.msra.mxu0 0.0
    %2252 = vmatprep.subr.mxu0 0.0
    %2253 = vmatpush1.msra.mxu0 0.0
    %2254 = vmatprep.subr.mxu0 0.0
    %2255 = vmatpush1.msra.mxu0 0.0
    %2256 = vmatprep.subr.mxu0 0.0
    %2257 = vmatpush1.msra.mxu0 0.0
    %2258 = vmatprep.subr.mxu0 0.0
    %2259 = vmatpush1.msra.mxu0 0.0
    %2260 = vmatprep.subr.mxu0 0.0
    %2261 = vmatpush1.msra.mxu0 0.0
    %2262 = vmatprep.subr.mxu0 0.0
    %2263 = vmatpush1.msra.mxu0 0.0
    %2264 = vmatprep.subr.mxu0 0.0
    %2265 = vmatpush1.msra.mxu0 0.0
    %2266 = vmatprep.subr.mxu0 0.0
    %2267 = vmatpush1.msra.mxu0 0.0
    %2268 = vmatprep.subr.mxu0 0.0
    %2269 = vmatpush1.msra.mxu0 0.0
    %2270 = vmatprep.subr.mxu0 0.0
    %2271 = vmatpush1.msra.mxu0 0.0
    %2272 = vmatprep.subr.mxu0 0.0
    %2273 = vmatpush1.msra.mxu0 0.0
    %2274 = vmatprep.subr.mxu0 0.0
    %2275 = vmatpush1.msra.mxu0 0.0
    %2276 = vmatprep.subr.mxu0 0.0
    %2277 = vmatpush1.msra.mxu0 0.0
    %2278 = vmatprep.subr.mxu0 0.0
    %2279 = vmatpush1.msra.mxu0 0.0
    %2280 = vmatprep.subr.mxu0 0.0
    %2281 = vmatpush1.msra.mxu0 0.0
    %2282 = vmatprep.subr.mxu0 0.0
    %2283 = vmatpush1.msra.mxu0 0.0
    %2284 = vmatprep.mubr.f32.mxu0 0.0
    %2285 = vmatmul.mubr.f32.gmra.mrb[0].mxu0 %v2120
    %v2286 = vpop.f32.mrb[0].mxu0
    %v2287 = vadd.f32 %v2012, %v2286
    %v2288 = vpop.f32.mrb[0].mxu0
    %v2289 = vadd.f32 %v2014, %v2288
    %2290 = vmatprep.mubr.f32.mxu0 0.0
    %2291 = vmatmul.mubr.f32.gmra.mrb[0].mxu0 %v2123
    %v2292 = vpop.f32.mrb[0].mxu0
    %v2293 = vadd.f32 %v2018, %v2292
    %v2294 = vpop.f32.mrb[0].mxu0
    %v2295 = vadd.f32 %v2020, %v2294
    %2296 = vmatprep.mubr.f32.mxu0 0.0
    %2297 = vmatmul.mubr.f32.gmra.mrb[0].mxu0 %v2126
    %v2298 = vpop.f32.mrb[0].mxu0
    %v2299 = vadd.f32 %v2024, %v2298
    %v2300 = vpop.f32.mrb[0].mxu0
    %v2301 = vadd.f32 %v2026, %v2300
    %2302 = vmatprep.mubr.f32.mxu0 0.0
    %2303 = vmatmul.mubr.f32.gmra.mrb[0].mxu0 %v2129
    %v2304 = vpop.f32.mrb[0].mxu0
    %v2305 = vadd.f32 %v2030, %v2304
    %v2306 = vpop.f32.mrb[0].mxu0
    %v2307 = vadd.f32 %v2032, %v2306
    %2308 = vdwg.mxu0
    %2309 = vmatprep.subr.mxu0 0.0
    %2310 = vmatpush1.msra.mxu0 %v40
    %2311 = vmatprep.subr.mxu0 0.0
    %2312 = vmatpush1.msra.mxu0 %v45
    %2313 = vmatprep.subr.mxu0 0.0
    %2314 = vmatpush1.msra.mxu0 %v50
    %2315 = vmatprep.subr.mxu0 0.0
    %2316 = vmatpush1.msra.mxu0 %v55
    %2317 = vmatprep.subr.mxu0 0.0
    %2318 = vmatpush1.msra.mxu0 0.0
    %2319 = vmatprep.subr.mxu0 0.0
    %2320 = vmatpush1.msra.mxu0 0.0
    %2321 = vmatprep.subr.mxu0 0.0
    %2322 = vmatpush1.msra.mxu0 0.0
    %2323 = vmatprep.subr.mxu0 0.0
    %2324 = vmatpush1.msra.mxu0 0.0
    %2325 = vmatprep.subr.mxu0 0.0
    %2326 = vmatpush1.msra.mxu0 0.0
    %2327 = vmatprep.subr.mxu0 0.0
    %2328 = vmatpush1.msra.mxu0 0.0
    %2329 = vmatprep.subr.mxu0 0.0
    %2330 = vmatpush1.msra.mxu0 0.0
    %2331 = vmatprep.subr.mxu0 0.0
    %2332 = vmatpush1.msra.mxu0 0.0
    %2333 = vmatprep.subr.mxu0 0.0
    %2334 = vmatpush1.msra.mxu0 0.0
    %2335 = vmatprep.subr.mxu0 0.0
    %2336 = vmatpush1.msra.mxu0 0.0
    %2337 = vmatprep.subr.mxu0 0.0
    %2338 = vmatpush1.msra.mxu0 0.0
    %2339 = vmatprep.subr.mxu0 0.0
    %2340 = vmatpush1.msra.mxu0 0.0
    %2341 = vmatprep.subr.mxu0 0.0
    %2342 = vmatpush1.msra.mxu0 0.0
    %2343 = vmatprep.subr.mxu0 0.0
    %2344 = vmatpush1.msra.mxu0 0.0
    %2345 = vmatprep.subr.mxu0 0.0
    %2346 = vmatpush1.msra.mxu0 0.0
    %2347 = vmatprep.subr.mxu0 0.0
    %2348 = vmatpush1.msra.mxu0 0.0
    %2349 = vmatprep.subr.mxu0 0.0
    %2350 = vmatpush1.msra.mxu0 0.0
    %2351 = vmatprep.subr.mxu0 0.0
    %2352 = vmatpush1.msra.mxu0 0.0
    %2353 = vmatprep.subr.mxu0 0.0
    %2354 = vmatpush1.msra.mxu0 0.0
    %2355 = vmatprep.subr.mxu0 0.0
    %2356 = vmatpush1.msra.mxu0 0.0
    %2357 = vmatprep.subr.mxu0 0.0
    %2358 = vmatpush1.msra.mxu0 0.0
    %2359 = vmatprep.subr.mxu0 0.0
    %2360 = vmatpush1.msra.mxu0 0.0
    %2361 = vmatprep.subr.mxu0 0.0
    %2362 = vmatpush1.msra.mxu0 0.0
    %2363 = vmatprep.subr.mxu0 0.0
    %2364 = vmatpush1.msra.mxu0 0.0
    %2365 = vmatprep.subr.mxu0 0.0
    %2366 = vmatpush1.msra.mxu0 0.0
    %2367 = vmatprep.subr.mxu0 0.0
    %2368 = vmatpush1.msra.mxu0 0.0
    %2369 = vmatprep.subr.mxu0 0.0
    %2370 = vmatpush1.msra.mxu0 0.0
    %2371 = vmatprep.subr.mxu0 0.0
    %2372 = vmatpush1.msra.mxu0 0.0
    %2373 = vmatprep.mubr.f32.mxu0 0.0
    %2374 = vmatmul.mubr.f32.gmra.mrb[0].mxu0 %v2120
    %v2375 = vpop.f32.mrb[0].mxu0
    %v2376 = vadd.f32 %v2101, %v2375
    %v2377 = vpop.f32.mrb[0].mxu0
    %2378 = vmatprep.mubr.f32.mxu0 0.0
    %2379 = vmatmul.mubr.f32.gmra.mrb[0].mxu0 %v2123
    %v2380 = vpop.f32.mrb[0].mxu0
    %v2381 = vadd.f32 %v2106, %v2380
    %v2382 = vpop.f32.mrb[0].mxu0
    %2383 = vmatprep.mubr.f32.mxu0 0.0
    %2384 = vmatmul.mubr.f32.gmra.mrb[0].mxu0 %v2126
    %v2385 = vpop.f32.mrb[0].mxu0
    %v2386 = vadd.f32 %v2111, %v2385
    %v2387 = vpop.f32.mrb[0].mxu0
    %2388 = vmatprep.mubr.f32.mxu0 0.0
    %2389 = vmatmul.mubr.f32.gmra.mrb[0].mxu0 %v2129
    %v2390 = vpop.f32.mrb[0].mxu0
    %v2391 = vadd.f32 %v2116, %v2390
    %v2392 = vpop.f32.mrb[0].mxu0
    %2393 = vdwg.mxu0
    %v2394 = vtanh.pop %v2198
    %v2395 = vtanh.pop %v2200
    %v2396 = vtanh.pop %v2287
    %v2397 = vtanh.pop %v2289
    %v2398 = vtanh.pop %v2376
    %v2399 = vtanh.pop %v2204
    %v2400 = vtanh.pop %v2206
    %v2401 = vtanh.pop %v2293
    %v2402 = vtanh.pop %v2295
    %v2403 = vtanh.pop %v2381
    %v2404 = vtanh.pop %v2210
    %v2405 = vtanh.pop %v2212
    %v2406 = vtanh.pop %v2299
    %v2407 = vtanh.pop %v2301
    %v2408 = vtanh.pop %v2386
    %v2409 = vtanh.pop %v2216
    %v2410 = vtanh.pop %v2218
    %v2411 = vtanh.pop %v2305
    %v2412 = vtanh.pop %v2307
    %v2413 = vtanh.pop %v2391
    %v2414 = vld [vmem:[%s7] sm:$0x1]
    %v2416 = vlaneseq
    %v2417 = vshrl.u32 %v2416, 7
    %v2418 = vsub.s32 0, %v2417
    %v2419 = vrot.slane %v80, %v2418
    %v2420 = vlaneseq
    %v2421 = vshrl.u32 %v2420, 7
    %v2422 = vsub.s32 1, %v2421
    %v2423 = vrot.slane %v80, %v2422
    %v2424 = vlaneseq
    %v2425 = vshrl.u32 %v2424, 7
    %v2426 = vsub.s32 2, %v2425
    %v2427 = vrot.slane %v80, %v2426
    %v2428 = vlaneseq
    %v2429 = vshrl.u32 %v2428, 7
    %v2430 = vsub.s32 3, %v2429
    %v2431 = vrot.slane %v80, %v2430
    %v2432 = vlaneseq
    %v2433 = vshrl.u32 %v2432, 7
    %v2434 = vsub.s32 4, %v2433
    %v2435 = vrot.slane %v80, %v2434
    %v2442 = vsel %vm769, %v2414, 0
    %2444 = vmatprep.subr.mxu0 %v2395
    %2445 = vmatpush1.msra.mxu0 %v2394
    %2446 = vmatprep.subr.mxu0 %v2400
    %2447 = vmatpush1.msra.mxu0 %v2399
    %2448 = vmatprep.subr.mxu0 %v2405
    %2449 = vmatpush1.msra.mxu0 %v2404
    %2450 = vmatprep.subr.mxu0 %v2410
    %2451 = vmatpush1.msra.mxu0 %v2409
    %2452 = vmatprep.subr.mxu0 0.0
    %2453 = vmatpush1.msra.mxu0 0.0
    %2454 = vmatprep.subr.mxu0 0.0
    %2455 = vmatpush1.msra.mxu0 0.0
    %2456 = vmatprep.subr.mxu0 0.0
    %2457 = vmatpush1.msra.mxu0 0.0
    %2458 = vmatprep.subr.mxu0 0.0
    %2459 = vmatpush1.msra.mxu0 0.0
    %2460 = vmatprep.subr.mxu0 0.0
    %2461 = vmatpush1.msra.mxu0 0.0
    %2462 = vmatprep.subr.mxu0 0.0
    %2463 = vmatpush1.msra.mxu0 0.0
    %2464 = vmatprep.subr.mxu0 0.0
    %2465 = vmatpush1.msra.mxu0 0.0
    %2466 = vmatprep.subr.mxu0 0.0
    %2467 = vmatpush1.msra.mxu0 0.0
    %2468 = vmatprep.subr.mxu0 0.0
    %2469 = vmatpush1.msra.mxu0 0.0
    %2470 = vmatprep.subr.mxu0 0.0
    %2471 = vmatpush1.msra.mxu0 0.0
    %2472 = vmatprep.subr.mxu0 0.0
    %2473 = vmatpush1.msra.mxu0 0.0
    %2474 = vmatprep.subr.mxu0 0.0
    %2475 = vmatpush1.msra.mxu0 0.0
    %2476 = vmatprep.subr.mxu0 0.0
    %2477 = vmatpush1.msra.mxu0 0.0
    %2478 = vmatprep.subr.mxu0 0.0
    %2479 = vmatpush1.msra.mxu0 0.0
    %2480 = vmatprep.subr.mxu0 0.0
    %2481 = vmatpush1.msra.mxu0 0.0
    %2482 = vmatprep.subr.mxu0 0.0
    %2483 = vmatpush1.msra.mxu0 0.0
    %2484 = vmatprep.subr.mxu0 0.0
    %2485 = vmatpush1.msra.mxu0 0.0
    %2486 = vmatprep.subr.mxu0 0.0
    %2487 = vmatpush1.msra.mxu0 0.0
    %2488 = vmatprep.subr.mxu0 0.0
    %2489 = vmatpush1.msra.mxu0 0.0
    %2490 = vmatprep.subr.mxu0 0.0
    %2491 = vmatpush1.msra.mxu0 0.0
    %2492 = vmatprep.subr.mxu0 0.0
    %2493 = vmatpush1.msra.mxu0 0.0
    %2494 = vmatprep.subr.mxu0 0.0
    %2495 = vmatpush1.msra.mxu0 0.0
    %2496 = vmatprep.subr.mxu0 0.0
    %2497 = vmatpush1.msra.mxu0 0.0
    %2498 = vmatprep.subr.mxu0 0.0
    %2499 = vmatpush1.msra.mxu0 0.0
    %2500 = vmatprep.subr.mxu0 0.0
    %2501 = vmatpush1.msra.mxu0 0.0
    %2502 = vmatprep.subr.mxu0 0.0
    %2503 = vmatpush1.msra.mxu0 0.0
    %2504 = vmatprep.subr.mxu0 0.0
    %2505 = vmatpush1.msra.mxu0 0.0
    %2506 = vmatprep.subr.mxu0 0.0
    %2507 = vmatpush1.msra.mxu0 0.0
    %2508 = vmatprep.mubr.f32.mxu0 0.0
    %2509 = vmatmul.mubr.f32.gmra.mrb[0].mxu0 %v2442
    %v2510 = vpop.f32.mrb[0].mxu0
    %v2511 = vadd.f32 %v2419, %v2510
    %v2512 = vpop.f32.mrb[0].mxu0
    %v2513 = vadd.f32 %v2423, %v2512
    %2514 = vdwg.mxu0
    %2515 = vmatprep.subr.mxu0 %v2397
    %2516 = vmatpush1.msra.mxu0 %v2396
    %2517 = vmatprep.subr.mxu0 %v2402
    %2518 = vmatpush1.msra.mxu0 %v2401
    %2519 = vmatprep.subr.mxu0 %v2407
    %2520 = vmatpush1.msra.mxu0 %v2406
    %2521 = vmatprep.subr.mxu0 %v2412
    %2522 = vmatpush1.msra.mxu0 %v2411
    %2523 = vmatprep.subr.mxu0 0.0
    %2524 = vmatpush1.msra.mxu0 0.0
    %2525 = vmatprep.subr.mxu0 0.0
    %2526 = vmatpush1.msra.mxu0 0.0
    %2527 = vmatprep.subr.mxu0 0.0
    %2528 = vmatpush1.msra.mxu0 0.0
    %2529 = vmatprep.subr.mxu0 0.0
    %2530 = vmatpush1.msra.mxu0 0.0
    %2531 = vmatprep.subr.mxu0 0.0
    %2532 = vmatpush1.msra.mxu0 0.0
    %2533 = vmatprep.subr.mxu0 0.0
    %2534 = vmatpush1.msra.mxu0 0.0
    %2535 = vmatprep.subr.mxu0 0.0
    %2536 = vmatpush1.msra.mxu0 0.0
    %2537 = vmatprep.subr.mxu0 0.0
    %2538 = vmatpush1.msra.mxu0 0.0
    %2539 = vmatprep.subr.mxu0 0.0
    %2540 = vmatpush1.msra.mxu0 0.0
    %2541 = vmatprep.subr.mxu0 0.0
    %2542 = vmatpush1.msra.mxu0 0.0
    %2543 = vmatprep.subr.mxu0 0.0
    %2544 = vmatpush1.msra.mxu0 0.0
    %2545 = vmatprep.subr.mxu0 0.0
    %2546 = vmatpush1.msra.mxu0 0.0
    %2547 = vmatprep.subr.mxu0 0.0
    %2548 = vmatpush1.msra.mxu0 0.0
    %2549 = vmatprep.subr.mxu0 0.0
    %2550 = vmatpush1.msra.mxu0 0.0
    %2551 = vmatprep.subr.mxu0 0.0
    %2552 = vmatpush1.msra.mxu0 0.0
    %2553 = vmatprep.subr.mxu0 0.0
    %2554 = vmatpush1.msra.mxu0 0.0
    %2555 = vmatprep.subr.mxu0 0.0
    %2556 = vmatpush1.msra.mxu0 0.0
    %2557 = vmatprep.subr.mxu0 0.0
    %2558 = vmatpush1.msra.mxu0 0.0
    %2559 = vmatprep.subr.mxu0 0.0
    %2560 = vmatpush1.msra.mxu0 0.0
    %2561 = vmatprep.subr.mxu0 0.0
    %2562 = vmatpush1.msra.mxu0 0.0
    %2563 = vmatprep.subr.mxu0 0.0
    %2564 = vmatpush1.msra.mxu0 0.0
    %2565 = vmatprep.subr.mxu0 0.0
    %2566 = vmatpush1.msra.mxu0 0.0
    %2567 = vmatprep.subr.mxu0 0.0
    %2568 = vmatpush1.msra.mxu0 0.0
    %2569 = vmatprep.subr.mxu0 0.0
    %2570 = vmatpush1.msra.mxu0 0.0
    %2571 = vmatprep.subr.mxu0 0.0
    %2572 = vmatpush1.msra.mxu0 0.0
    %2573 = vmatprep.subr.mxu0 0.0
    %2574 = vmatpush1.msra.mxu0 0.0
    %2575 = vmatprep.subr.mxu0 0.0
    %2576 = vmatpush1.msra.mxu0 0.0
    %2577 = vmatprep.subr.mxu0 0.0
    %2578 = vmatpush1.msra.mxu0 0.0
    %2579 = vmatprep.mubr.f32.mxu0 0.0
    %2580 = vmatmul.mubr.f32.gmra.mrb[0].mxu0 %v2442
    %v2581 = vpop.f32.mrb[0].mxu0
    %v2582 = vadd.f32 %v2427, %v2581
    %v2583 = vpop.f32.mrb[0].mxu0
    %v2584 = vadd.f32 %v2431, %v2583
    %2585 = vdwg.mxu0
    %2586 = vmatprep.subr.mxu0 0.0
    %2587 = vmatpush1.msra.mxu0 %v2398
    %2588 = vmatprep.subr.mxu0 0.0
    %2589 = vmatpush1.msra.mxu0 %v2403
    %2590 = vmatprep.subr.mxu0 0.0
    %2591 = vmatpush1.msra.mxu0 %v2408
    %2592 = vmatprep.subr.mxu0 0.0
    %2593 = vmatpush1.msra.mxu0 %v2413
    %2594 = vmatprep.subr.mxu0 0.0
    %2595 = vmatpush1.msra.mxu0 0.0
    %2596 = vmatprep.subr.mxu0 0.0
    %2597 = vmatpush1.msra.mxu0 0.0
    %2598 = vmatprep.subr.mxu0 0.0
    %2599 = vmatpush1.msra.mxu0 0.0
    %2600 = vmatprep.subr.mxu0 0.0
    %2601 = vmatpush1.msra.mxu0 0.0
    %2602 = vmatprep.subr.mxu0 0.0
    %2603 = vmatpush1.msra.mxu0 0.0
    %2604 = vmatprep.subr.mxu0 0.0
    %2605 = vmatpush1.msra.mxu0 0.0
    %2606 = vmatprep.subr.mxu0 0.0
    %2607 = vmatpush1.msra.mxu0 0.0
    %2608 = vmatprep.subr.mxu0 0.0
    %2609 = vmatpush1.msra.mxu0 0.0
    %2610 = vmatprep.subr.mxu0 0.0
    %2611 = vmatpush1.msra.mxu0 0.0
    %2612 = vmatprep.subr.mxu0 0.0
    %2613 = vmatpush1.msra.mxu0 0.0
    %2614 = vmatprep.subr.mxu0 0.0
    %2615 = vmatpush1.msra.mxu0 0.0
    %2616 = vmatprep.subr.mxu0 0.0
    %2617 = vmatpush1.msra.mxu0 0.0
    %2618 = vmatprep.subr.mxu0 0.0
    %2619 = vmatpush1.msra.mxu0 0.0
    %2620 = vmatprep.subr.mxu0 0.0
    %2621 = vmatpush1.msra.mxu0 0.0
    %2622 = vmatprep.subr.mxu0 0.0
    %2623 = vmatpush1.msra.mxu0 0.0
    %2624 = vmatprep.subr.mxu0 0.0
    %2625 = vmatpush1.msra.mxu0 0.0
    %2626 = vmatprep.subr.mxu0 0.0
    %2627 = vmatpush1.msra.mxu0 0.0
    %2628 = vmatprep.subr.mxu0 0.0
    %2629 = vmatpush1.msra.mxu0 0.0
    %2630 = vmatprep.subr.mxu0 0.0
    %2631 = vmatpush1.msra.mxu0 0.0
    %2632 = vmatprep.subr.mxu0 0.0
    %2633 = vmatpush1.msra.mxu0 0.0
    %2634 = vmatprep.subr.mxu0 0.0
    %2635 = vmatpush1.msra.mxu0 0.0
    %2636 = vmatprep.subr.mxu0 0.0
    %2637 = vmatpush1.msra.mxu0 0.0
    %2638 = vmatprep.subr.mxu0 0.0
    %2639 = vmatpush1.msra.mxu0 0.0
    %2640 = vmatprep.subr.mxu0 0.0
    %2641 = vmatpush1.msra.mxu0 0.0
    %2642 = vmatprep.subr.mxu0 0.0
    %2643 = vmatpush1.msra.mxu0 0.0
    %2644 = vmatprep.subr.mxu0 0.0
    %2645 = vmatpush1.msra.mxu0 0.0
    %2646 = vmatprep.subr.mxu0 0.0
    %2647 = vmatpush1.msra.mxu0 0.0
    %2648 = vmatprep.subr.mxu0 0.0
    %2649 = vmatpush1.msra.mxu0 0.0
    %2650 = vmatprep.mubr.f32.mxu0 0.0
    %2651 = vmatmul.mubr.f32.gmra.mrb[0].mxu0 %v2442
    %v2652 = vpop.f32.mrb[0].mxu0
    %v2653 = vadd.f32 %v2435, %v2652
    %v2654 = vpop.f32.mrb[0].mxu0
    %2655 = vdwg.mxu0
    %v2656 = vsel %vm985, %v2511, -inf
    %v2657 = vsel %vm985, %v2513, -inf
    %v2658 = vsel %vm985, %v2582, -inf
    %v2659 = vsel %vm985, %v2584, -inf
    %v2660 = vsel %vm985, %v2653, -inf
    %v2661 = vmax.f32 %v2656, %v2660
    %v2662 = vmax.f32 %v2661, %v2657
    %v2663 = vmax.f32 %v2658, %v2659
    %v2664 = vmax.f32 %v2662, %v2663
    %2665 = vmax.xlane.f32.xlu0 %v2664
    %v2666 = vpop.xlane.xlu0 %2665
    %v2667 = vsub.f32 %v2511, %v2666
    %v2668 = vsub.f32 %v2513, %v2666
    %v2669 = vsub.f32 %v2582, %v2666
    %v2670 = vsub.f32 %v2584, %v2666
    %v2671 = vsub.f32 %v2653, %v2666
    %v2672 = vmul.f32 %v2667, 1.442695
    %v2673 = vpow.pop %v2672
    %v2674 = vmul.f32 %v2668, 1.442695
    %v2675 = vpow.pop %v2674
    %v2676 = vmul.f32 %v2669, 1.442695
    %v2677 = vpow.pop %v2676
    %v2678 = vmul.f32 %v2670, 1.442695
    %v2679 = vpow.pop %v2678
    %v2680 = vmul.f32 %v2671, 1.442695
    %v2681 = vpow.pop %v2680
    %2682 = vmatprep.subr.mxu0 0.0
    %2683 = vmatpush1.msra.mxu0 %v96
    %2684 = vmatprep.subr.mxu0 0.0
    %2685 = vmatpush1.msra.mxu0 %v97
    %2686 = vmatprep.subr.mxu0 0.0
    %2687 = vmatpush1.msra.mxu0 %v98
    %2688 = vmatprep.subr.mxu0 0.0
    %2689 = vmatpush1.msra.mxu0 %v99
    %2690 = vmatprep.subr.mxu0 0.0
    %2691 = vmatpush1.msra.mxu0 %v100
    %2692 = vmatprep.subr.mxu0 0.0
    %2693 = vmatpush1.msra.mxu0 %v101
    %2694 = vmatprep.subr.mxu0 0.0
    %2695 = vmatpush1.msra.mxu0 %v102
    %2696 = vmatprep.subr.mxu0 0.0
    %2697 = vmatpush1.msra.mxu0 %v103
    %2698 = vmatprep.subr.mxu0 0.0
    %2699 = vmatpush1.msra.mxu0 %v104
    %2700 = vmatprep.subr.mxu0 0.0
    %2701 = vmatpush1.msra.mxu0 %v105
    %2702 = vmatprep.subr.mxu0 0.0
    %2703 = vmatpush1.msra.mxu0 %v106
    %2704 = vmatprep.subr.mxu0 0.0
    %2705 = vmatpush1.msra.mxu0 %v107
    %2706 = vmatprep.subr.mxu0 0.0
    %2707 = vmatpush1.msra.mxu0 %v108
    %2708 = vmatprep.subr.mxu0 0.0
    %2709 = vmatpush1.msra.mxu0 %v109
    %2710 = vmatprep.subr.mxu0 0.0
    %2711 = vmatpush1.msra.mxu0 %v110
    %2712 = vmatprep.subr.mxu0 0.0
    %2713 = vmatpush1.msra.mxu0 %v111
    %2714 = vmatprep.subr.mxu0 0.0
    %2715 = vmatpush1.msra.mxu0 %v112
    %2716 = vmatprep.subr.mxu0 0.0
    %2717 = vmatpush1.msra.mxu0 %v113
    %2718 = vmatprep.subr.mxu0 0.0
    %2719 = vmatpush1.msra.mxu0 %v114
    %2720 = vmatprep.subr.mxu0 0.0
    %2721 = vmatpush1.msra.mxu0 %v115
    %2722 = vmatprep.subr.mxu0 0.0
    %2723 = vmatpush1.msra.mxu0 %v116
    %2724 = vmatprep.subr.mxu0 0.0
    %2725 = vmatpush1.msra.mxu0 %v117
    %2726 = vmatprep.subr.mxu0 0.0
    %2727 = vmatpush1.msra.mxu0 %v118
    %2728 = vmatprep.subr.mxu0 0.0
    %2729 = vmatpush1.msra.mxu0 %v119
    %2730 = vmatprep.subr.mxu0 0.0
    %2731 = vmatpush1.msra.mxu0 %v120
    %2732 = vmatprep.subr.mxu0 0.0
    %2733 = vmatpush1.msra.mxu0 %v121
    %2734 = vmatprep.subr.mxu0 0.0
    %2735 = vmatpush1.msra.mxu0 %v122
    %2736 = vmatprep.subr.mxu0 0.0
    %2737 = vmatpush1.msra.mxu0 %v123
    %2738 = vmatprep.subr.mxu0 0.0
    %2739 = vmatpush1.msra.mxu0 %v124
    %2740 = vmatprep.subr.mxu0 0.0
    %2741 = vmatpush1.msra.mxu0 %v125
    %2742 = vmatprep.subr.mxu0 0.0
    %2743 = vmatpush1.msra.mxu0 %v126
    %2744 = vmatprep.subr.mxu0 0.0
    %2745 = vmatpush1.msra.mxu0 %v127
    %2746 = vmatprep.mubr.f32.mxu0 %v2675
    %2747 = vmatmul.mubr.f32.gmra.mrb[0].mxu0 %v2673
    %v2748 = vpop.f32.mrb[0].mxu0
    %v2749 = vadd.f32 0.0, %v2748
    %v2750 = vpop.f32.mrb[0].mxu0
    %2751 = vdwg.mxu0
    %2752 = vmatprep.subr.mxu0 0.0
    %2753 = vmatpush1.msra.mxu0 %v128
    %2754 = vmatprep.subr.mxu0 0.0
    %2755 = vmatpush1.msra.mxu0 %v129
    %2756 = vmatprep.subr.mxu0 0.0
    %2757 = vmatpush1.msra.mxu0 %v130
    %2758 = vmatprep.subr.mxu0 0.0
    %2759 = vmatpush1.msra.mxu0 %v131
    %2760 = vmatprep.subr.mxu0 0.0
    %2761 = vmatpush1.msra.mxu0 %v132
    %2762 = vmatprep.subr.mxu0 0.0
    %2763 = vmatpush1.msra.mxu0 %v133
    %2764 = vmatprep.subr.mxu0 0.0
    %2765 = vmatpush1.msra.mxu0 %v134
    %2766 = vmatprep.subr.mxu0 0.0
    %2767 = vmatpush1.msra.mxu0 %v135
    %2768 = vmatprep.subr.mxu0 0.0
    %2769 = vmatpush1.msra.mxu0 %v136
    %2770 = vmatprep.subr.mxu0 0.0
    %2771 = vmatpush1.msra.mxu0 %v137
    %2772 = vmatprep.subr.mxu0 0.0
    %2773 = vmatpush1.msra.mxu0 %v138
    %2774 = vmatprep.subr.mxu0 0.0
    %2775 = vmatpush1.msra.mxu0 %v139
    %2776 = vmatprep.subr.mxu0 0.0
    %2777 = vmatpush1.msra.mxu0 %v140
    %2778 = vmatprep.subr.mxu0 0.0
    %2779 = vmatpush1.msra.mxu0 %v141
    %2780 = vmatprep.subr.mxu0 0.0
    %2781 = vmatpush1.msra.mxu0 %v142
    %2782 = vmatprep.subr.mxu0 0.0
    %2783 = vmatpush1.msra.mxu0 %v143
    %2784 = vmatprep.subr.mxu0 0.0
    %2785 = vmatpush1.msra.mxu0 %v144
    %2786 = vmatprep.subr.mxu0 0.0
    %2787 = vmatpush1.msra.mxu0 %v145
    %2788 = vmatprep.subr.mxu0 0.0
    %2789 = vmatpush1.msra.mxu0 %v146
    %2790 = vmatprep.subr.mxu0 0.0
    %2791 = vmatpush1.msra.mxu0 %v147
    %2792 = vmatprep.subr.mxu0 0.0
    %2793 = vmatpush1.msra.mxu0 %v148
    %2794 = vmatprep.subr.mxu0 0.0
    %2795 = vmatpush1.msra.mxu0 %v149
    %2796 = vmatprep.subr.mxu0 0.0
    %2797 = vmatpush1.msra.mxu0 %v150
    %2798 = vmatprep.subr.mxu0 0.0
    %2799 = vmatpush1.msra.mxu0 %v151
    %2800 = vmatprep.subr.mxu0 0.0
    %2801 = vmatpush1.msra.mxu0 %v152
    %2802 = vmatprep.subr.mxu0 0.0
    %2803 = vmatpush1.msra.mxu0 %v153
    %2804 = vmatprep.subr.mxu0 0.0
    %2805 = vmatpush1.msra.mxu0 %v154
    %2806 = vmatprep.subr.mxu0 0.0
    %2807 = vmatpush1.msra.mxu0 %v155
    %2808 = vmatprep.subr.mxu0 0.0
    %2809 = vmatpush1.msra.mxu0 %v156
    %2810 = vmatprep.subr.mxu0 0.0
    %2811 = vmatpush1.msra.mxu0 %v157
    %2812 = vmatprep.subr.mxu0 0.0
    %2813 = vmatpush1.msra.mxu0 %v158
    %2814 = vmatprep.subr.mxu0 0.0
    %2815 = vmatpush1.msra.mxu0 %v159
    %2816 = vmatprep.mubr.f32.mxu0 %v2679
    %2817 = vmatmul.mubr.f32.gmra.mrb[0].mxu0 %v2677
    %v2818 = vpop.f32.mrb[0].mxu0
    %v2819 = vadd.f32 %v2749, %v2818
    %v2820 = vpop.f32.mrb[0].mxu0
    %2821 = vdwg.mxu0
    %2822 = vmatprep.subr.mxu0 0.0
    %2823 = vmatpush1.msra.mxu0 %v160
    %2824 = vmatprep.subr.mxu0 0.0
    %2825 = vmatpush1.msra.mxu0 %v161
    %2826 = vmatprep.subr.mxu0 0.0
    %2827 = vmatpush1.msra.mxu0 %v162
    %2828 = vmatprep.subr.mxu0 0.0
    %2829 = vmatpush1.msra.mxu0 %v163
    %2830 = vmatprep.subr.mxu0 0.0
    %2831 = vmatpush1.msra.mxu0 %v164
    %2832 = vmatprep.subr.mxu0 0.0
    %2833 = vmatpush1.msra.mxu0 %v165
    %2834 = vmatprep.subr.mxu0 0.0
    %2835 = vmatpush1.msra.mxu0 %v166
    %2836 = vmatprep.subr.mxu0 0.0
    %2837 = vmatpush1.msra.mxu0 %v167
    %2838 = vmatprep.subr.mxu0 0.0
    %2839 = vmatpush1.msra.mxu0 %v168
    %2840 = vmatprep.subr.mxu0 0.0
    %2841 = vmatpush1.msra.mxu0 %v169
    %2842 = vmatprep.subr.mxu0 0.0
    %2843 = vmatpush1.msra.mxu0 %v170
    %2844 = vmatprep.subr.mxu0 0.0
    %2845 = vmatpush1.msra.mxu0 %v171
    %2846 = vmatprep.subr.mxu0 0.0
    %2847 = vmatpush1.msra.mxu0 %v172
    %2848 = vmatprep.subr.mxu0 0.0
    %2849 = vmatpush1.msra.mxu0 %v173
    %2850 = vmatprep.subr.mxu0 0.0
    %2851 = vmatpush1.msra.mxu0 %v174
    %2852 = vmatprep.subr.mxu0 0.0
    %2853 = vmatpush1.msra.mxu0 %v175
    %2854 = vmatprep.subr.mxu0 0.0
    %2855 = vmatpush1.msra.mxu0 0.0
    %2856 = vmatprep.subr.mxu0 0.0
    %2857 = vmatpush1.msra.mxu0 0.0
    %2858 = vmatprep.subr.mxu0 0.0
    %2859 = vmatpush1.msra.mxu0 0.0
    %2860 = vmatprep.subr.mxu0 0.0
    %2861 = vmatpush1.msra.mxu0 0.0
    %2862 = vmatprep.subr.mxu0 0.0
    %2863 = vmatpush1.msra.mxu0 0.0
    %2864 = vmatprep.subr.mxu0 0.0
    %2865 = vmatpush1.msra.mxu0 0.0
    %2866 = vmatprep.subr.mxu0 0.0
    %2867 = vmatpush1.msra.mxu0 0.0
    %2868 = vmatprep.subr.mxu0 0.0
    %2869 = vmatpush1.msra.mxu0 0.0
    %2870 = vmatprep.subr.mxu0 0.0
    %2871 = vmatpush1.msra.mxu0 0.0
    %2872 = vmatprep.subr.mxu0 0.0
    %2873 = vmatpush1.msra.mxu0 0.0
    %2874 = vmatprep.subr.mxu0 0.0
    %2875 = vmatpush1.msra.mxu0 0.0
    %2876 = vmatprep.subr.mxu0 0.0
    %2877 = vmatpush1.msra.mxu0 0.0
    %2878 = vmatprep.subr.mxu0 0.0
    %2879 = vmatpush1.msra.mxu0 0.0
    %2880 = vmatprep.subr.mxu0 0.0
    %2881 = vmatpush1.msra.mxu0 0.0
    %2882 = vmatprep.subr.mxu0 0.0
    %2883 = vmatpush1.msra.mxu0 0.0
    %2884 = vmatprep.subr.mxu0 0.0
    %2885 = vmatpush1.msra.mxu0 0.0
    %2886 = vmatprep.mubr.f32.mxu0 0.0
    %2887 = vmatmul.mubr.f32.gmra.mrb[0].mxu0 %v2681
    %v2888 = vpop.f32.mrb[0].mxu0
    %v2889 = vadd.f32 %v2819, %v2888
    %v2890 = vpop.f32.mrb[0].mxu0
    %2891 = vdwg.mxu0
    %v2892 = vmax.f32 %v2889, 1e-30
    %v2893 = vrcp.pop %v2892
    %v2895 = vsel %vm180, %v2893, 0
    %2897 = vmatprep.subr.mxu0 %v82
    %2898 = vmatpush1.msra.mxu0 %v81
    %2899 = vmatprep.subr.mxu0 %v87
    %2900 = vmatpush1.msra.mxu0 %v86
    %2901 = vmatprep.subr.mxu0 %v198
    %2902 = vmatpush1.msra.mxu0 %v195
    %2903 = vmatprep.subr.mxu0 0.0
    %2904 = vmatpush1.msra.mxu0 0.0
    %2905 = vmatprep.subr.mxu0 0.0
    %2906 = vmatpush1.msra.mxu0 0.0
    %2907 = vmatprep.subr.mxu0 0.0
    %2908 = vmatpush1.msra.mxu0 0.0
    %2909 = vmatprep.subr.mxu0 0.0
    %2910 = vmatpush1.msra.mxu0 0.0
    %2911 = vmatprep.subr.mxu0 0.0
    %2912 = vmatpush1.msra.mxu0 0.0
    %2913 = vmatprep.subr.mxu0 0.0
    %2914 = vmatpush1.msra.mxu0 0.0
    %2915 = vmatprep.subr.mxu0 0.0
    %2916 = vmatpush1.msra.mxu0 0.0
    %2917 = vmatprep.subr.mxu0 0.0
    %2918 = vmatpush1.msra.mxu0 0.0
    %2919 = vmatprep.subr.mxu0 0.0
    %2920 = vmatpush1.msra.mxu0 0.0
    %2921 = vmatprep.subr.mxu0 0.0
    %2922 = vmatpush1.msra.mxu0 0.0
    %2923 = vmatprep.subr.mxu0 0.0
    %2924 = vmatpush1.msra.mxu0 0.0
    %2925 = vmatprep.subr.mxu0 0.0
    %2926 = vmatpush1.msra.mxu0 0.0
    %2927 = vmatprep.subr.mxu0 0.0
    %2928 = vmatpush1.msra.mxu0 0.0
    %2929 = vmatprep.subr.mxu0 0.0
    %2930 = vmatpush1.msra.mxu0 0.0
    %2931 = vmatprep.subr.mxu0 0.0
    %2932 = vmatpush1.msra.mxu0 0.0
    %2933 = vmatprep.subr.mxu0 0.0
    %2934 = vmatpush1.msra.mxu0 0.0
    %2935 = vmatprep.subr.mxu0 0.0
    %2936 = vmatpush1.msra.mxu0 0.0
    %2937 = vmatprep.subr.mxu0 0.0
    %2938 = vmatpush1.msra.mxu0 0.0
    %2939 = vmatprep.subr.mxu0 0.0
    %2940 = vmatpush1.msra.mxu0 0.0
    %2941 = vmatprep.subr.mxu0 0.0
    %2942 = vmatpush1.msra.mxu0 0.0
    %2943 = vmatprep.subr.mxu0 0.0
    %2944 = vmatpush1.msra.mxu0 0.0
    %2945 = vmatprep.subr.mxu0 0.0
    %2946 = vmatpush1.msra.mxu0 0.0
    %2947 = vmatprep.subr.mxu0 0.0
    %2948 = vmatpush1.msra.mxu0 0.0
    %2949 = vmatprep.subr.mxu0 0.0
    %2950 = vmatpush1.msra.mxu0 0.0
    %2951 = vmatprep.subr.mxu0 0.0
    %2952 = vmatpush1.msra.mxu0 0.0
    %2953 = vmatprep.subr.mxu0 0.0
    %2954 = vmatpush1.msra.mxu0 0.0
    %2955 = vmatprep.subr.mxu0 0.0
    %2956 = vmatpush1.msra.mxu0 0.0
    %2957 = vmatprep.subr.mxu0 0.0
    %2958 = vmatpush1.msra.mxu0 0.0
    %2959 = vmatprep.subr.mxu0 0.0
    %2960 = vmatpush1.msra.mxu0 0.0
    %2961 = vmatprep.mubr.f32.mxu0 0.0
    %2962 = vmatmul.mubr.f32.gmra.mrb[0].mxu0 %v2895
    %v2963 = vpop.f32.mrb[0].mxu0
    %v2964 = vadd.f32 0.0, %v2963
    %v2965 = vpop.f32.mrb[0].mxu0
    %v2966 = vadd.f32 0.0, %v2965
    %2967 = vdwg.mxu0
    %2968 = vmatprep.subr.mxu0 %v84
    %2969 = vmatpush1.msra.mxu0 %v83
    %2970 = vmatprep.subr.mxu0 %v89
    %2971 = vmatpush1.msra.mxu0 %v88
    %2972 = vmatprep.subr.mxu0 %v204
    %2973 = vmatpush1.msra.mxu0 %v201
    %2974 = vmatprep.subr.mxu0 0.0
    %2975 = vmatpush1.msra.mxu0 0.0
    %2976 = vmatprep.subr.mxu0 0.0
    %2977 = vmatpush1.msra.mxu0 0.0
    %2978 = vmatprep.subr.mxu0 0.0
    %2979 = vmatpush1.msra.mxu0 0.0
    %2980 = vmatprep.subr.mxu0 0.0
    %2981 = vmatpush1.msra.mxu0 0.0
    %2982 = vmatprep.subr.mxu0 0.0
    %2983 = vmatpush1.msra.mxu0 0.0
    %2984 = vmatprep.subr.mxu0 0.0
    %2985 = vmatpush1.msra.mxu0 0.0
    %2986 = vmatprep.subr.mxu0 0.0
    %2987 = vmatpush1.msra.mxu0 0.0
    %2988 = vmatprep.subr.mxu0 0.0
    %2989 = vmatpush1.msra.mxu0 0.0
    %2990 = vmatprep.subr.mxu0 0.0
    %2991 = vmatpush1.msra.mxu0 0.0
    %2992 = vmatprep.subr.mxu0 0.0
    %2993 = vmatpush1.msra.mxu0 0.0
    %2994 = vmatprep.subr.mxu0 0.0
    %2995 = vmatpush1.msra.mxu0 0.0
    %2996 = vmatprep.subr.mxu0 0.0
    %2997 = vmatpush1.msra.mxu0 0.0
    %2998 = vmatprep.subr.mxu0 0.0
    %2999 = vmatpush1.msra.mxu0 0.0
    %3000 = vmatprep.subr.mxu0 0.0
    %3001 = vmatpush1.msra.mxu0 0.0
    %3002 = vmatprep.subr.mxu0 0.0
    %3003 = vmatpush1.msra.mxu0 0.0
    %3004 = vmatprep.subr.mxu0 0.0
    %3005 = vmatpush1.msra.mxu0 0.0
    %3006 = vmatprep.subr.mxu0 0.0
    %3007 = vmatpush1.msra.mxu0 0.0
    %3008 = vmatprep.subr.mxu0 0.0
    %3009 = vmatpush1.msra.mxu0 0.0
    %3010 = vmatprep.subr.mxu0 0.0
    %3011 = vmatpush1.msra.mxu0 0.0
    %3012 = vmatprep.subr.mxu0 0.0
    %3013 = vmatpush1.msra.mxu0 0.0
    %3014 = vmatprep.subr.mxu0 0.0
    %3015 = vmatpush1.msra.mxu0 0.0
    %3016 = vmatprep.subr.mxu0 0.0
    %3017 = vmatpush1.msra.mxu0 0.0
    %3018 = vmatprep.subr.mxu0 0.0
    %3019 = vmatpush1.msra.mxu0 0.0
    %3020 = vmatprep.subr.mxu0 0.0
    %3021 = vmatpush1.msra.mxu0 0.0
    %3022 = vmatprep.subr.mxu0 0.0
    %3023 = vmatpush1.msra.mxu0 0.0
    %3024 = vmatprep.subr.mxu0 0.0
    %3025 = vmatpush1.msra.mxu0 0.0
    %3026 = vmatprep.subr.mxu0 0.0
    %3027 = vmatpush1.msra.mxu0 0.0
    %3028 = vmatprep.subr.mxu0 0.0
    %3029 = vmatpush1.msra.mxu0 0.0
    %3030 = vmatprep.subr.mxu0 0.0
    %3031 = vmatpush1.msra.mxu0 0.0
    %3032 = vmatprep.mubr.f32.mxu0 0.0
    %3033 = vmatmul.mubr.f32.gmra.mrb[0].mxu0 %v2895
    %v3034 = vpop.f32.mrb[0].mxu0
    %v3035 = vadd.f32 0.0, %v3034
    %v3036 = vpop.f32.mrb[0].mxu0
    %v3037 = vadd.f32 0.0, %v3036
    %3038 = vdwg.mxu0
    %3039 = vmatprep.subr.mxu0 0.0
    %3040 = vmatpush1.msra.mxu0 %v85
    %3041 = vmatprep.subr.mxu0 0.0
    %3042 = vmatpush1.msra.mxu0 %v90
    %3043 = vmatprep.subr.mxu0 0.0
    %3044 = vmatpush1.msra.mxu0 %v207
    %3045 = vmatprep.subr.mxu0 0.0
    %3046 = vmatpush1.msra.mxu0 0.0
    %3047 = vmatprep.subr.mxu0 0.0
    %3048 = vmatpush1.msra.mxu0 0.0
    %3049 = vmatprep.subr.mxu0 0.0
    %3050 = vmatpush1.msra.mxu0 0.0
    %3051 = vmatprep.subr.mxu0 0.0
    %3052 = vmatpush1.msra.mxu0 0.0
    %3053 = vmatprep.subr.mxu0 0.0
    %3054 = vmatpush1.msra.mxu0 0.0
    %3055 = vmatprep.subr.mxu0 0.0
    %3056 = vmatpush1.msra.mxu0 0.0
    %3057 = vmatprep.subr.mxu0 0.0
    %3058 = vmatpush1.msra.mxu0 0.0
    %3059 = vmatprep.subr.mxu0 0.0
    %3060 = vmatpush1.msra.mxu0 0.0
    %3061 = vmatprep.subr.mxu0 0.0
    %3062 = vmatpush1.msra.mxu0 0.0
    %3063 = vmatprep.subr.mxu0 0.0
    %3064 = vmatpush1.msra.mxu0 0.0
    %3065 = vmatprep.subr.mxu0 0.0
    %3066 = vmatpush1.msra.mxu0 0.0
    %3067 = vmatprep.subr.mxu0 0.0
    %3068 = vmatpush1.msra.mxu0 0.0
    %3069 = vmatprep.subr.mxu0 0.0
    %3070 = vmatpush1.msra.mxu0 0.0
    %3071 = vmatprep.subr.mxu0 0.0
    %3072 = vmatpush1.msra.mxu0 0.0
    %3073 = vmatprep.subr.mxu0 0.0
    %3074 = vmatpush1.msra.mxu0 0.0
    %3075 = vmatprep.subr.mxu0 0.0
    %3076 = vmatpush1.msra.mxu0 0.0
    %3077 = vmatprep.subr.mxu0 0.0
    %3078 = vmatpush1.msra.mxu0 0.0
    %3079 = vmatprep.subr.mxu0 0.0
    %3080 = vmatpush1.msra.mxu0 0.0
    %3081 = vmatprep.subr.mxu0 0.0
    %3082 = vmatpush1.msra.mxu0 0.0
    %3083 = vmatprep.subr.mxu0 0.0
    %3084 = vmatpush1.msra.mxu0 0.0
    %3085 = vmatprep.subr.mxu0 0.0
    %3086 = vmatpush1.msra.mxu0 0.0
    %3087 = vmatprep.subr.mxu0 0.0
    %3088 = vmatpush1.msra.mxu0 0.0
    %3089 = vmatprep.subr.mxu0 0.0
    %3090 = vmatpush1.msra.mxu0 0.0
    %3091 = vmatprep.subr.mxu0 0.0
    %3092 = vmatpush1.msra.mxu0 0.0
    %3093 = vmatprep.subr.mxu0 0.0
    %3094 = vmatpush1.msra.mxu0 0.0
    %3095 = vmatprep.subr.mxu0 0.0
    %3096 = vmatpush1.msra.mxu0 0.0
    %3097 = vmatprep.subr.mxu0 0.0
    %3098 = vmatpush1.msra.mxu0 0.0
    %3099 = vmatprep.subr.mxu0 0.0
    %3100 = vmatpush1.msra.mxu0 0.0
    %3101 = vmatprep.subr.mxu0 0.0
    %3102 = vmatpush1.msra.mxu0 0.0
    %3103 = vmatprep.mubr.f32.mxu0 0.0
    %3104 = vmatmul.mubr.f32.gmra.mrb[0].mxu0 %v2895
    %v3105 = vpop.f32.mrb[0].mxu0
    %v3106 = vadd.f32 0.0, %v3105
    %v3107 = vpop.f32.mrb[0].mxu0
    %3108 = vdwg.mxu0
    %v3109 = vmul.f32 %v2673, %v2964
    %v3110 = vmul.f32 %v2675, %v2966
    %v3111 = vmul.f32 %v2677, %v3035
    %v3112 = vmul.f32 %v2679, %v3037
    %v3113 = vmul.f32 %v2681, %v3106
    %v3119 = vcombine.low %v3109, %v3110
    %v3120 = vcombine.low %v3111, %v3112
    %v3122 = vunpack.c.l.s4 1966171168
    %v3123 = vunpack.c.0.s8 %v3122
    %v3124 = vlaneseq
    %v3125 = vshrl.u32 %v3124, 7
    %v3126 = vsub.s32 %v3123, %v3125
    %v3127 = vrot.slane %v3119, %v3126
    %v3129 = vunpack.c.l.s4 1966171168
    %v3130 = vunpack.c.0.s8 %v3129
    %v3131 = vlaneseq
    %v3132 = vshrl.u32 %v3131, 7
    %v3133 = vsub.s32 %v3130, %v3132
    %v3134 = vrot.slane %v3120, %v3133
    %v3136 = vunpack.c.l.s4 1966171168
    %v3137 = vunpack.c.0.s8 %v3136
    %v3138 = vlaneseq
    %v3139 = vshrl.u32 %v3138, 7
    %v3140 = vsub.s32 %v3137, %v3139
    %v3141 = vrot.slane %v3113, %v3140
    %v3142 = vcombine.low %v3127, %v3134
    %v3144 = vunpack.c.l.s4 1966171168
    %v3145 = vunpack.c.0.s8 %v3144
    %v3146 = vlaneseq
    %v3147 = vshrl.u32 %v3146, 7
    %v3148 = vsub.s32 %v3145, %v3147
    %v3149 = vrot.slane %v3142, %v3148
    %v3151 = vunpack.c.l.s4 1966171168
    %v3152 = vunpack.c.0.s8 %v3151
    %v3153 = vlaneseq
    %v3154 = vshrl.u32 %v3153, 7
    %v3155 = vsub.s32 %v3152, %v3154
    %v3156 = vrot.slane %v3141, %v3155
    %v3157 = vcombine.low %v3149, %v3156
    %v3159 = vlaneseq
    %vm3160 = vcmp.ge.s32.totalorder %v3159, 0
    %vm3161 = vcmp.lt.s32.totalorder %v3159, 640
    %vm3162 = vmand %vm3160, %vm3161
    %3163 = vst.msk [vmem:[#allocation2] sm:$0x1f] %vm3162, %v3157
    // Predicated region
    $region42: #{tpu_custom_call.1} parent=1 // pred_check
      _
    $region43: #{tpu_custom_call.1} parent=1 // pred_check_branch
      %3165 = sbr.rel (0) target = $region45
    $region44: #{tpu_custom_call.1} parent=1 // pred_region
      %s3167 = ssub.s32 80, 80
      %3168 = vsyncadd [#allocation3], %s3167
      %s3170 = sshll.u32 [#allocation2], 4
      %s3171 = int_to_ptr.vmem [resolvable:$true] %s3170
      %3173 = dma.vmem_to_hbm [thread:$0]  %s3171, 80, %s10, [#allocation3]
    $region45: #{tpu_custom_call.1} parent=1 // pred_fallthru
      _
    // Predicated region
    $region46: #{tpu_custom_call.1} parent=1 // pred_check
      _
    $region47: #{tpu_custom_call.1} parent=1 // pred_check_branch
      %3175 = sbr.rel (0) target = $region49
    $region48: #{tpu_custom_call.1} parent=1 // pred_region
      %3176 = dma.done [#allocation3], 80
    $region49: #{tpu_custom_call.1} parent=1 // pred_fallthru
      _
    %3177 = vsyncpa [#allocation3], 1

</llo_original>
